<compile_context>
chip_gen: v7x
topology: tpu7x:2x2x1
jax: 0.10.0
libtpu: 0.0.40
codegen_flags: <defaults>
</compile_context>

<pallas_src>
import math

import jax
import jax.numpy as jnp
from jax.experimental import pallas as pl
from jax.experimental.pallas import tpu as pltpu


def _full_spec(shape):
    nd = len(shape)
    return pl.BlockSpec(tuple(int(s) for s in shape), lambda n, _nd=nd: (0,) * _nd)


# ----------------------------------------------------------------------------
# Fused UNet forward (NCHW in / NCHW out, like the PyTorch module)
# ----------------------------------------------------------------------------
def unet_model_forward(x_nchw, p):
    x = jnp.transpose(x_nchw, (0, 2, 3, 1)).astype(jnp.float32)   # NCHW -> NHWC
    N, H_in, W_in, Cin = x.shape
    F = p["l0c0"][0].shape[-1]

    # ---- static spatial bookkeeping (valid convs, pool 2, upsample 2) ----
    Ha0, Wa0 = H_in - 2, W_in - 2          # after l0c0
    Hf0, Wf0 = H_in - 4, W_in - 4          # after l0c1 (skip feature)
    Hp,  Wp  = Hf0 // 2, Wf0 // 2          # after MaxPool2d(2)
    Ha2, Wa2 = Hp - 2, Wp - 2              # after l1c0
    Hf1, Wf1 = Hp - 4, Wp - 4              # after l1c1
    Hup, Wup = 2 * Hf1, 2 * Wf1            # after ConvTranspose (crop_to_factor = identity here)
    offH, offW = (Hf0 - Hup) // 2, (Wf0 - Wup) // 2   # center-crop offsets of the skip
    Ha4, Wa4 = Hup - 2, Wup - 2            # after r0c0
    Ho,  Wo  = Hup - 4, Wup - 4            # after r0c1 (head output size)

    # ---- weight packing (host/XLA glue, negligible) ----
    def pack(wb):
        w, b = wb
        kh, kw, ci, co = w.shape
        return w.reshape(kh * kw * ci, co), b          # (kh,kw,ci) flattened -> K dim

    w0m, b0 = pack(p["l0c0"])
    w1m, b1 = pack(p["l0c1"])
    w2m, b2 = pack(p["l1c0"])
    w3m, b3 = pack(p["l1c1"])
    w4, b4 = p["r0c0"]                                  # (3,3,3F,F); cat order = [skip, up]
    w4s = w4[:, :, :F, :].reshape(9 * F, F)
    w4u = w4[:, :, F:, :].reshape(9 * 2 * F, F)
    w5m, b5 = pack(p["r0c1"])
    # fused heads: one Cout = 6+1 matmul
    whead = jnp.concatenate([p["lsd"][0].reshape(F, 6), p["mask"][0].reshape(F, 1)], axis=1)
    bhead = jnp.concatenate([p["lsd"][1], p["mask"][1]], axis=1)
    # ConvTranspose2d weight (Cin, Cout, 2, 2) -> 4 matrices indexed by kh*2+kw
    wup = jnp.stack([p["up_w"][:, :, kh, kw] for kh in range(2) for kw in range(2)], axis=0)
    bup = p["up_b"].reshape(1, 2 * F)
    # 0/1 selection matrices: stride-2 column pick (pool) and column interleave (upsample)
    se = (jnp.arange(Wf0)[None, :] == (2 * jnp.arange(Wp))[:, None]).astype(jnp.float32)
    so = (jnp.arange(Wf0)[None, :] == (2 * jnp.arange(Wp) + 1)[:, None]).astype(jnp.float32)
    pe = (jnp.arange(Wup)[:, None] == (2 * jnp.arange(Wf1))[None, :]).astype(jnp.float32)
    po = (jnp.arange(Wup)[:, None] == (2 * jnp.arange(Wf1) + 1)[None, :]).astype(jnp.float32)

    weight_args = (w0m, b0, w1m, b1, w2m, b2, w3m, b3, wup, bup,
                   w4s, w4u, b4, w5m, b5, whead, bhead, se, so, pe, po)

    # ------------------------------------------------------------------
    # The single fused kernel: one batch element per grid step.
    # ------------------------------------------------------------------
    def kernel(x_ref, w0_ref, b0_ref, w1_ref, b1_ref, w2_ref, b2_ref, w3_ref, b3_ref,
               wup_ref, bup_ref, w4s_ref, w4u_ref, b4_ref, w5_ref, b5_ref,
               wh_ref, bh_ref, se_ref, so_ref, pe_ref, po_ref,
               lsd_ref, mask_ref,
               a0, f0, pool, a2, f1, up, a4):

        def conv3x3(src_row, dst_ref, out_w, cin, w_ref, b_ref):
            """Valid 3x3 conv + bias + ReLU.  One im2col matmul per output row."""
            wv = w_ref[...]
            bv = b_ref[...]

            def body(i, c):
                rows = [src_row(i + kh) for kh in range(3)]
                if cin == 1:
                    # outer-product broadcast path (keeps layer 0 on the VPU;
                    # avoids a 1-lane-wide concat)
                    acc = jnp.zeros((out_w, wv.shape[1]), jnp.float32)
                    for kh in range(3):
                        for kw in range(3):
                            k = 3 * kh + kw
                            acc = acc + rows[kh][kw:kw + out_w, :] * wv[k:k + 1, :]
                    y = acc + bv
                else:
                    patch = jnp.concatenate(
                        [rows[kh][kw:kw + out_w, :] for kh in range(3) for kw in range(3)],
                        axis=-1)                                   # (out_w, 9*cin)
                    y = jnp.dot(patch, wv, preferred_element_type=jnp.float32) + bv
                dst_ref[i] = jnp.maximum(y, 0.0)
                return c

            jax.lax.fori_loop(0, dst_ref.shape[0], body, 0)

        # ---- encoder level 0 ----
        conv3x3(lambda r: x_ref[0, r], a0, Wa0, Cin, w0_ref, b0_ref)
        conv3x3(lambda r: a0[r], f0, Wf0, F, w1_ref, b1_ref)

        # ---- MaxPool2d(2): rows via dynamic indices, columns via 0/1 matmuls ----
        sev = se_ref[...]
        sov = so_ref[...]

        def pool_body(i, c):
            rm = jnp.maximum(f0[2 * i], f0[2 * i + 1])             # (Wf0, F)
            pool[i] = jnp.maximum(
                jnp.dot(sev, rm, preferred_element_type=jnp.float32),
                jnp.dot(sov, rm, preferred_element_type=jnp.float32))
            return c

        jax.lax.fori_loop(0, Hp, pool_body, 0)

        # ---- encoder level 1 ----
        conv3x3(lambda r: pool[r], a2, Wa2, F, w2_ref, b2_ref)
        conv3x3(lambda r: a2[r], f1, Wf1, 2 * F, w3_ref, b3_ref)

        # ---- ConvTranspose2d(k=2, s=2): column interleave via 0/1 matmuls ----
        wupv = wup_ref[...]
        bupv = bup_ref[...]
        pev = pe_ref[...]
        pov = po_ref[...]

        def up_body(i, c):
            xr = f1[i]                                              # (Wf1, 2F)
            for kh in range(2):
                y_even = jnp.dot(xr, wupv[2 * kh + 0], preferred_element_type=jnp.float32)
                y_odd = jnp.dot(xr, wupv[2 * kh + 1], preferred_element_type=jnp.float32)
                up[2 * i + kh] = (jnp.dot(pev, y_even, preferred_element_type=jnp.float32)
                                  + jnp.dot(pov, y_odd, preferred_element_type=jnp.float32)
                                  + bupv)
            return c

        jax.lax.fori_loop(0, Hf1, up_body, 0)

        # ---- decoder conv 1: conv(cat([crop(f0), up])) = conv(crop(f0)) + conv(up) ----
        w4sv = w4s_ref[...]
        w4uv = w4u_ref[...]
        b4v = b4_ref[...]

        def dec0_body(i, c):
            ps = jnp.concatenate(
                [f0[i + kh + offH][kw + offW:kw + offW + Wa4, :]
                 for kh in range(3) for kw in range(3)], axis=-1)   # (Wa4, 9F)
            pu = jnp.concatenate(
                [up[i + kh][kw:kw + Wa4, :]
                 for kh in range(3) for kw in range(3)], axis=-1)   # (Wa4, 18F)
            a4[i] = jnp.maximum(
                jnp.dot(ps, w4sv, preferred_element_type=jnp.float32)
                + jnp.dot(pu, w4uv, preferred_element_type=jnp.float32) + b4v, 0.0)
            return c

        jax.lax.fori_loop(0, Ha4, dec0_body, 0)

        # ---- decoder conv 2 + fused sigmoid heads (lsd 6ch | mask 1ch) ----
        w5v = w5_ref[...]
        b5v = b5_ref[...]
        whv = wh_ref[...]
        bhv = bh_ref[...]

        def dec1_body(i, c):
            patch = jnp.concatenate(
                [a4[i + kh][kw:kw + Wo, :] for kh in range(3) for kw in range(3)], axis=-1)
            z = jnp.maximum(jnp.dot(patch, w5v, preferred_element_type=jnp.float32) + b5v, 0.0)
            h = jax.nn.sigmoid(jnp.dot(z, whv, preferred_element_type=jnp.float32) + bhv)
            lsd_ref[0, i] = h[:, :6]
            mask_ref[0, i] = h[:, 6:7]
            return c

        jax.lax.fori_loop(0, Ho, dec1_body, 0)

    lsd, mask = pl.pallas_call(
        kernel,
        out_shape=(jax.ShapeDtypeStruct((N, Ho, Wo, 6), jnp.float32),
                   jax.ShapeDtypeStruct((N, Ho, Wo, 1), jnp.float32)),
        grid=(N,),
        in_specs=[pl.BlockSpec((1, H_in, W_in, Cin), lambda n: (n, 0, 0, 0))]
                 + [_full_spec(a.shape) for a in weight_args],
        out_specs=[pl.BlockSpec((1, Ho, Wo, 6), lambda n: (n, 0, 0, 0)),
                   pl.BlockSpec((1, Ho, Wo, 1), lambda n: (n, 0, 0, 0))],
        scratch_shapes=[pltpu.VMEM((Ha0, Wa0, F), jnp.float32),
                        pltpu.VMEM((Hf0, Wf0, F), jnp.float32),
                        pltpu.VMEM((Hp, Wp, F), jnp.float32),
                        pltpu.VMEM((Ha2, Wa2, 2 * F), jnp.float32),
                        pltpu.VMEM((Hf1, Wf1, 2 * F), jnp.float32),
                        pltpu.VMEM((Hup, Wup, 2 * F), jnp.float32),
                        pltpu.VMEM((Ha4, Wa4, F), jnp.float32)],
        compiler_params=pltpu.CompilerParams(dimension_semantics=("parallel",)),
    )(x, *weight_args)

    return (jnp.transpose(lsd, (0, 3, 1, 2)),       # NHWC -> NCHW
            jnp.transpose(mask, (0, 3, 1, 2)))


# ----------------------------------------------------------------------------
# Pure-JAX reference (for numerical verification only)
# ----------------------------------------------------------------------------
def reference_forward(x_nchw, p):
    x = jnp.transpose(x_nchw, (0, 2, 3, 1))
    dn = ("NHWC", "HWIO", "NHWC")

    def conv(v, wb, act):
        w, b = wb
        y = jax.lax.conv_general_dilated(v, w, (1, 1), "VALID", dimension_numbers=dn)
        y = y + b.reshape(1, 1, 1, -1)
        if act == "relu":
            return jnp.maximum(y, 0.0)
        if act == "sigmoid":
            return jax.nn.sigmoid(y)
        return y

    f0 = conv(conv(x, p["l0c0"], "relu"), p["l0c1"], "relu")
    g = jax.lax.reduce_window(f0, -jnp.inf, jax.lax.max,
                              (1, 2, 2, 1), (1, 2, 2, 1), "VALID")
    f1 = conv(conv(g, p["l1c0"], "relu"), p["l1c1"], "relu")
    n, hh, ww, _ = f1.shape
    co = p["up_w"].shape[1]
    up = jnp.einsum("nijc,cdkl->nikjld", f1, p["up_w"]).reshape(n, 2 * hh, 2 * ww, co)
    up = up + p["up_b"].reshape(1, 1, 1, -1)
    oh, ow = up.shape[1], up.shape[2]
    fh, fw = f0.shape[1], f0.shape[2]
    f0c = f0[:, (fh - oh) // 2:(fh - oh) // 2 + oh, (fw - ow) // 2:(fw - ow) // 2 + ow, :]
    cat = jnp.concatenate([f0c, up], axis=-1)
    z = conv(conv(cat, p["r0c0"], "relu"), p["r0c1"], "relu")
    lsd = conv(z, p["lsd"], "sigmoid")
    mask = conv(z, p["mask"], "sigmoid")
    return jnp.transpose(lsd, (0, 3, 1, 2)), jnp.transpose(mask, (0, 3, 1, 2))


# ----------------------------------------------------------------------------
# Deterministic synthetic parameters
# ----------------------------------------------------------------------------
def init_params(key, in_channels=1, num_fmaps=8):
    F = num_fmaps

    def conv_init(k, kh, kw, cin, cout):
        kw_, kb_ = jax.random.split(k)
        bound = 1.0 / math.sqrt(kh * kw * cin)
        w = jax.random.uniform(kw_, (kh, kw, cin, cout), jnp.float32, -bound, bound)
        b = jax.random.uniform(kb_, (1, cout), jnp.float32, -bound, bound)
        return w, b

    ks = jax.random.split(key, 9)
    p = {
        "l0c0": conv_init(ks[0], 3, 3, in_channels, F),
        "l0c1": conv_init(ks[1], 3, 3, F, F),
        "l1c0": conv_init(ks[2], 3, 3, F, 2 * F),
        "l1c1": conv_init(ks[3], 3, 3, 2 * F, 2 * F),
        "r0c0": conv_init(ks[5], 3, 3, 3 * F, F),
        "r0c1": conv_init(ks[6], 3, 3, F, F),
        "lsd": conv_init(ks[7], 1, 1, F, 6),
        "mask": conv_init(ks[8], 1, 1, F, 1),
    }
    # ConvTranspose2d weight layout: (Cin, Cout, KH, KW)
    ku_w, ku_b = jax.random.split(ks[4])
    bound = 1.0 / math.sqrt(2 * F * 2 * 2)
    p["up_w"] = jax.random.uniform(ku_w, (2 * F, 2 * F, 2, 2), jnp.float32, -bound, bound)
    p["up_b"] = jax.random.uniform(ku_b, (2 * F,), jnp.float32, -bound, bound)
    return p


if __name__ == "__main__":
    key = jax.random.PRNGKey(0)
    k_in, k_par = jax.random.split(key)

    N, IN_CH, S = 2, 1, 36                     # small NCHW input (2, 1, 36, 36)
    x_nchw = jax.random.normal(k_in, (N, IN_CH, S, S), jnp.float32)
    params = init_params(k_par, in_channels=IN_CH, num_fmaps=8)

    lsd, mask = jax.jit(unet_model_forward)(x_nchw, params)
    jax.block_until_ready((lsd, mask))

    # valid-conv UNet: 36 -> 32 -> pool 16 -> 12 -> up 24 -> 20
    assert lsd.shape == (N, 6, 20, 20), lsd.shape
    assert mask.shape == (N, 1, 20, 20), mask.shape
    assert bool(jnp.all(jnp.isfinite(lsd))) and bool(jnp.all(jnp.isfinite(mask)))

    lsd_r, mask_r = jax.jit(reference_forward)(x_nchw, params)
    jax.block_until_ready((lsd_r, mask_r))
    err_lsd = float(jnp.max(jnp.abs(lsd - lsd_r)))
    err_mask = float(jnp.max(jnp.abs(mask - mask_r)))
    assert err_lsd < 5e-3 and err_mask < 5e-3, (err_lsd, err_mask)

    print("KERNEL_OK")
</pallas_src>

<mosaic_0001>
module attributes {stable_mosaic.version = 11 : i64} {
  func.func @kernel(%arg0: i32, %arg1: memref<1x36x36x1xf32, #tpu.memory_space<vmem>>, %arg2: memref<9x8xf32, #tpu.memory_space<vmem>>, %arg3: memref<1x8xf32, #tpu.memory_space<vmem>>, %arg4: memref<72x8xf32, #tpu.memory_space<vmem>>, %arg5: memref<1x8xf32, #tpu.memory_space<vmem>>, %arg6: memref<72x16xf32, #tpu.memory_space<vmem>>, %arg7: memref<1x16xf32, #tpu.memory_space<vmem>>, %arg8: memref<144x16xf32, #tpu.memory_space<vmem>>, %arg9: memref<1x16xf32, #tpu.memory_space<vmem>>, %arg10: memref<4x16x16xf32, #tpu.memory_space<vmem>>, %arg11: memref<1x16xf32, #tpu.memory_space<vmem>>, %arg12: memref<72x8xf32, #tpu.memory_space<vmem>>, %arg13: memref<144x8xf32, #tpu.memory_space<vmem>>, %arg14: memref<1x8xf32, #tpu.memory_space<vmem>>, %arg15: memref<72x8xf32, #tpu.memory_space<vmem>>, %arg16: memref<1x8xf32, #tpu.memory_space<vmem>>, %arg17: memref<8x7xf32, #tpu.memory_space<vmem>>, %arg18: memref<1x7xf32, #tpu.memory_space<vmem>>, %arg19: memref<16x32xf32, #tpu.memory_space<vmem>>, %arg20: memref<16x32xf32, #tpu.memory_space<vmem>>, %arg21: memref<24x12xf32, #tpu.memory_space<vmem>>, %arg22: memref<24x12xf32, #tpu.memory_space<vmem>>, %arg23: memref<1x20x20x6xf32, #tpu.memory_space<vmem>>, %arg24: memref<1x20x20x1xf32, #tpu.memory_space<vmem>>, %arg25: memref<34x34x8xf32, #tpu.memory_space<vmem>>, %arg26: memref<32x32x8xf32, #tpu.memory_space<vmem>>, %arg27: memref<16x16x8xf32, #tpu.memory_space<vmem>>, %arg28: memref<14x14x16xf32, #tpu.memory_space<vmem>>, %arg29: memref<12x12x16xf32, #tpu.memory_space<vmem>>, %arg30: memref<24x24x16xf32, #tpu.memory_space<vmem>>, %arg31: memref<22x22x8xf32, #tpu.memory_space<vmem>>) attributes {dimension_semantics = [#tpu.dimension_semantics<parallel>], iteration_bounds = array<i64: 2>, scalar_prefetch = 0 : i64, scratch_operands = 7 : i64, tpu.core_type = #tpu.core_type<tc>, window_params = [{transform_indices = @transform_0, window_bounds = array<i64: 1, 36, 36, 1>}, {pipeline_mode = #tpu.pipeline_mode<synchronous>, transform_indices = @transform_1, window_bounds = array<i64: 9, 8>}, {pipeline_mode = #tpu.pipeline_mode<synchronous>, transform_indices = @transform_2, window_bounds = array<i64: 1, 8>}, {pipeline_mode = #tpu.pipeline_mode<synchronous>, transform_indices = @transform_3, window_bounds = array<i64: 72, 8>}, {pipeline_mode = #tpu.pipeline_mode<synchronous>, transform_indices = @transform_4, window_bounds = array<i64: 1, 8>}, {pipeline_mode = #tpu.pipeline_mode<synchronous>, transform_indices = @transform_5, window_bounds = array<i64: 72, 16>}, {pipeline_mode = #tpu.pipeline_mode<synchronous>, transform_indices = @transform_6, window_bounds = array<i64: 1, 16>}, {pipeline_mode = #tpu.pipeline_mode<synchronous>, transform_indices = @transform_7, window_bounds = array<i64: 144, 16>}, {pipeline_mode = #tpu.pipeline_mode<synchronous>, transform_indices = @transform_8, window_bounds = array<i64: 1, 16>}, {pipeline_mode = #tpu.pipeline_mode<synchronous>, transform_indices = @transform_9, window_bounds = array<i64: 4, 16, 16>}, {pipeline_mode = #tpu.pipeline_mode<synchronous>, transform_indices = @transform_10, window_bounds = array<i64: 1, 16>}, {pipeline_mode = #tpu.pipeline_mode<synchronous>, transform_indices = @transform_11, window_bounds = array<i64: 72, 8>}, {pipeline_mode = #tpu.pipeline_mode<synchronous>, transform_indices = @transform_12, window_bounds = array<i64: 144, 8>}, {pipeline_mode = #tpu.pipeline_mode<synchronous>, transform_indices = @transform_13, window_bounds = array<i64: 1, 8>}, {pipeline_mode = #tpu.pipeline_mode<synchronous>, transform_indices = @transform_14, window_bounds = array<i64: 72, 8>}, {pipeline_mode = #tpu.pipeline_mode<synchronous>, transform_indices = @transform_15, window_bounds = array<i64: 1, 8>}, {pipeline_mode = #tpu.pipeline_mode<synchronous>, transform_indices = @transform_16, window_bounds = array<i64: 8, 7>}, {pipeline_mode = #tpu.pipeline_mode<synchronous>, transform_indices = @transform_17, window_bounds = array<i64: 1, 7>}, {pipeline_mode = #tpu.pipeline_mode<synchronous>, transform_indices = @transform_18, window_bounds = array<i64: 16, 32>}, {pipeline_mode = #tpu.pipeline_mode<synchronous>, transform_indices = @transform_19, window_bounds = array<i64: 16, 32>}, {pipeline_mode = #tpu.pipeline_mode<synchronous>, transform_indices = @transform_20, window_bounds = array<i64: 24, 12>}, {pipeline_mode = #tpu.pipeline_mode<synchronous>, transform_indices = @transform_21, window_bounds = array<i64: 24, 12>}, {transform_indices = @transform_22, window_bounds = array<i64: 1, 20, 20, 6>}, {transform_indices = @transform_23, window_bounds = array<i64: 1, 20, 20, 1>}]} {
    %c0 = arith.constant 0 : index
    %c0_0 = arith.constant 0 : index
    %0 = vector.load %arg2[%c0, %c0_0] : memref<9x8xf32, #tpu.memory_space<vmem>>, vector<9x8xf32>
    %c0_1 = arith.constant 0 : index
    %c0_2 = arith.constant 0 : index
    %1 = vector.load %arg3[%c0_1, %c0_2] : memref<1x8xf32, #tpu.memory_space<vmem>>, vector<1x8xf32>
    %c0_i32 = arith.constant 0 : i32
    %c34_i32 = arith.constant 34 : i32
    %2 = arith.addi %c0_i32, %c34_i32 : i32
    %c1_i32 = arith.constant 1 : i32
    scf.for %arg32 = %c0_i32 to %2 step %c1_i32  : i32 {
      %c0_i32_65 = arith.constant 0 : i32
      %29 = arith.addi %arg32, %c0_i32_65 : i32
      %c0_66 = arith.constant 0 : index
      %30 = arith.index_cast %29 : i32 to index
      %c0_67 = arith.constant 0 : index
      %c0_68 = arith.constant 0 : index
      %31 = vector.load %arg1[%c0_66, %30, %c0_67, %c0_68] : memref<1x36x36x1xf32, #tpu.memory_space<vmem>>, vector<1x1x36x1xf32>
      %32 = vector.shape_cast %31 : vector<1x1x36x1xf32> to vector<36x1xf32>
      %c1_i32_69 = arith.constant 1 : i32
      %33 = arith.addi %arg32, %c1_i32_69 : i32
      %c0_70 = arith.constant 0 : index
      %34 = arith.index_cast %33 : i32 to index
      %c0_71 = arith.constant 0 : index
      %c0_72 = arith.constant 0 : index
      %35 = vector.load %arg1[%c0_70, %34, %c0_71, %c0_72] : memref<1x36x36x1xf32, #tpu.memory_space<vmem>>, vector<1x1x36x1xf32>
      %36 = vector.shape_cast %35 : vector<1x1x36x1xf32> to vector<36x1xf32>
      %c2_i32 = arith.constant 2 : i32
      %37 = arith.addi %arg32, %c2_i32 : i32
      %c0_73 = arith.constant 0 : index
      %38 = arith.index_cast %37 : i32 to index
      %c0_74 = arith.constant 0 : index
      %c0_75 = arith.constant 0 : index
      %39 = vector.load %arg1[%c0_73, %38, %c0_74, %c0_75] : memref<1x36x36x1xf32, #tpu.memory_space<vmem>>, vector<1x1x36x1xf32>
      %40 = vector.shape_cast %39 : vector<1x1x36x1xf32> to vector<36x1xf32>
      %cst = arith.constant 0.000000e+00 : f32
      %41 = vector.broadcast %cst : f32 to vector<34x8xf32>
      %42 = vector.extract_strided_slice %32 {offsets = [0, 0], sizes = [34, 1], strides = [1, 1]} : vector<36x1xf32> to vector<34x1xf32>
      %43 = vector.extract_strided_slice %0 {offsets = [0, 0], sizes = [1, 8], strides = [1, 1]} : vector<9x8xf32> to vector<1x8xf32>
      %44 = vector.broadcast %42 : vector<34x1xf32> to vector<34x8xf32>
      %45 = vector.broadcast %43 : vector<1x8xf32> to vector<34x8xf32>
      %46 = arith.mulf %44, %45 : vector<34x8xf32>
      %47 = arith.addf %41, %46 : vector<34x8xf32>
      %48 = vector.extract_strided_slice %32 {offsets = [1, 0], sizes = [34, 1], strides = [1, 1]} : vector<36x1xf32> to vector<34x1xf32>
      %49 = vector.extract_strided_slice %0 {offsets = [1, 0], sizes = [1, 8], strides = [1, 1]} : vector<9x8xf32> to vector<1x8xf32>
      %50 = vector.broadcast %48 : vector<34x1xf32> to vector<34x8xf32>
      %51 = vector.broadcast %49 : vector<1x8xf32> to vector<34x8xf32>
      %52 = arith.mulf %50, %51 : vector<34x8xf32>
      %53 = arith.addf %47, %52 : vector<34x8xf32>
      %54 = vector.extract_strided_slice %32 {offsets = [2, 0], sizes = [34, 1], strides = [1, 1]} : vector<36x1xf32> to vector<34x1xf32>
      %55 = vector.extract_strided_slice %0 {offsets = [2, 0], sizes = [1, 8], strides = [1, 1]} : vector<9x8xf32> to vector<1x8xf32>
      %56 = vector.broadcast %54 : vector<34x1xf32> to vector<34x8xf32>
      %57 = vector.broadcast %55 : vector<1x8xf32> to vector<34x8xf32>
      %58 = arith.mulf %56, %57 : vector<34x8xf32>
      %59 = arith.addf %53, %58 : vector<34x8xf32>
      %60 = vector.extract_strided_slice %36 {offsets = [0, 0], sizes = [34, 1], strides = [1, 1]} : vector<36x1xf32> to vector<34x1xf32>
      %61 = vector.extract_strided_slice %0 {offsets = [3, 0], sizes = [1, 8], strides = [1, 1]} : vector<9x8xf32> to vector<1x8xf32>
      %62 = vector.broadcast %60 : vector<34x1xf32> to vector<34x8xf32>
      %63 = vector.broadcast %61 : vector<1x8xf32> to vector<34x8xf32>
      %64 = arith.mulf %62, %63 : vector<34x8xf32>
      %65 = arith.addf %59, %64 : vector<34x8xf32>
      %66 = vector.extract_strided_slice %36 {offsets = [1, 0], sizes = [34, 1], strides = [1, 1]} : vector<36x1xf32> to vector<34x1xf32>
      %67 = vector.extract_strided_slice %0 {offsets = [4, 0], sizes = [1, 8], strides = [1, 1]} : vector<9x8xf32> to vector<1x8xf32>
      %68 = vector.broadcast %66 : vector<34x1xf32> to vector<34x8xf32>
      %69 = vector.broadcast %67 : vector<1x8xf32> to vector<34x8xf32>
      %70 = arith.mulf %68, %69 : vector<34x8xf32>
      %71 = arith.addf %65, %70 : vector<34x8xf32>
      %72 = vector.extract_strided_slice %36 {offsets = [2, 0], sizes = [34, 1], strides = [1, 1]} : vector<36x1xf32> to vector<34x1xf32>
      %73 = vector.extract_strided_slice %0 {offsets = [5, 0], sizes = [1, 8], strides = [1, 1]} : vector<9x8xf32> to vector<1x8xf32>
      %74 = vector.broadcast %72 : vector<34x1xf32> to vector<34x8xf32>
      %75 = vector.broadcast %73 : vector<1x8xf32> to vector<34x8xf32>
      %76 = arith.mulf %74, %75 : vector<34x8xf32>
      %77 = arith.addf %71, %76 : vector<34x8xf32>
      %78 = vector.extract_strided_slice %40 {offsets = [0, 0], sizes = [34, 1], strides = [1, 1]} : vector<36x1xf32> to vector<34x1xf32>
      %79 = vector.extract_strided_slice %0 {offsets = [6, 0], sizes = [1, 8], strides = [1, 1]} : vector<9x8xf32> to vector<1x8xf32>
      %80 = vector.broadcast %78 : vector<34x1xf32> to vector<34x8xf32>
      %81 = vector.broadcast %79 : vector<1x8xf32> to vector<34x8xf32>
      %82 = arith.mulf %80, %81 : vector<34x8xf32>
      %83 = arith.addf %77, %82 : vector<34x8xf32>
      %84 = vector.extract_strided_slice %40 {offsets = [1, 0], sizes = [34, 1], strides = [1, 1]} : vector<36x1xf32> to vector<34x1xf32>
      %85 = vector.extract_strided_slice %0 {offsets = [7, 0], sizes = [1, 8], strides = [1, 1]} : vector<9x8xf32> to vector<1x8xf32>
      %86 = vector.broadcast %84 : vector<34x1xf32> to vector<34x8xf32>
      %87 = vector.broadcast %85 : vector<1x8xf32> to vector<34x8xf32>
      %88 = arith.mulf %86, %87 : vector<34x8xf32>
      %89 = arith.addf %83, %88 : vector<34x8xf32>
      %90 = vector.extract_strided_slice %40 {offsets = [2, 0], sizes = [34, 1], strides = [1, 1]} : vector<36x1xf32> to vector<34x1xf32>
      %91 = vector.extract_strided_slice %0 {offsets = [8, 0], sizes = [1, 8], strides = [1, 1]} : vector<9x8xf32> to vector<1x8xf32>
      %92 = vector.broadcast %90 : vector<34x1xf32> to vector<34x8xf32>
      %93 = vector.broadcast %91 : vector<1x8xf32> to vector<34x8xf32>
      %94 = arith.mulf %92, %93 : vector<34x8xf32>
      %95 = arith.addf %89, %94 : vector<34x8xf32>
      %96 = vector.broadcast %1 : vector<1x8xf32> to vector<34x8xf32>
      %97 = arith.addf %95, %96 : vector<34x8xf32>
      %cst_76 = arith.constant 0.000000e+00 : f32
      %98 = vector.broadcast %cst_76 : f32 to vector<34x8xf32>
      %99 = arith.maximumf %97, %98 : vector<34x8xf32>
      %100 = arith.index_cast %arg32 : i32 to index
      %c0_77 = arith.constant 0 : index
      %c0_78 = arith.constant 0 : index
      %101 = vector.load %arg25[%100, %c0_77, %c0_78] : memref<34x34x8xf32, #tpu.memory_space<vmem>>, vector<1x34x8xf32>
      %102 = vector.shape_cast %101 : vector<1x34x8xf32> to vector<34x8xf32>
      %103 = vector.shape_cast %99 : vector<34x8xf32> to vector<1x34x8xf32>
      tpu.vector_store %arg25[%100, %c0_77, %c0_78], %103 {strides = array<i32>} : memref<34x34x8xf32, #tpu.memory_space<vmem>>, vector<1x34x8xf32>,
    }
    %c34_i32_3 = arith.constant 34 : i32
    %c0_4 = arith.constant 0 : index
    %c0_5 = arith.constant 0 : index
    %3 = vector.load %arg4[%c0_4, %c0_5] : memref<72x8xf32, #tpu.memory_space<vmem>>, vector<72x8xf32>
    %c0_6 = arith.constant 0 : index
    %c0_7 = arith.constant 0 : index
    %4 = vector.load %arg5[%c0_6, %c0_7] : memref<1x8xf32, #tpu.memory_space<vmem>>, vector<1x8xf32>
    %c0_i32_8 = arith.constant 0 : i32
    %c32_i32 = arith.constant 32 : i32
    %5 = arith.addi %c0_i32_8, %c32_i32 : i32
    %c1_i32_9 = arith.constant 1 : i32
    scf.for %arg32 = %c0_i32_8 to %5 step %c1_i32_9  : i32 {
      %c0_i32_65 = arith.constant 0 : i32
      %29 = arith.addi %arg32, %c0_i32_65 : i32
      %30 = arith.index_cast %29 : i32 to index
      %c0_66 = arith.constant 0 : index
      %c0_67 = arith.constant 0 : index
      %31 = vector.load %arg25[%30, %c0_66, %c0_67] : memref<34x34x8xf32, #tpu.memory_space<vmem>>, vector<1x34x8xf32>
      %32 = vector.shape_cast %31 : vector<1x34x8xf32> to vector<34x8xf32>
      %c1_i32_68 = arith.constant 1 : i32
      %33 = arith.addi %arg32, %c1_i32_68 : i32
      %34 = arith.index_cast %33 : i32 to index
      %c0_69 = arith.constant 0 : index
      %c0_70 = arith.constant 0 : index
      %35 = vector.load %arg25[%34, %c0_69, %c0_70] : memref<34x34x8xf32, #tpu.memory_space<vmem>>, vector<1x34x8xf32>
      %36 = vector.shape_cast %35 : vector<1x34x8xf32> to vector<34x8xf32>
      %c2_i32 = arith.constant 2 : i32
      %37 = arith.addi %arg32, %c2_i32 : i32
      %38 = arith.index_cast %37 : i32 to index
      %c0_71 = arith.constant 0 : index
      %c0_72 = arith.constant 0 : index
      %39 = vector.load %arg25[%38, %c0_71, %c0_72] : memref<34x34x8xf32, #tpu.memory_space<vmem>>, vector<1x34x8xf32>
      %40 = vector.shape_cast %39 : vector<1x34x8xf32> to vector<34x8xf32>
      %41 = vector.extract_strided_slice %32 {offsets = [0, 0], sizes = [32, 8], strides = [1, 1]} : vector<34x8xf32> to vector<32x8xf32>
      %42 = vector.extract_strided_slice %32 {offsets = [1, 0], sizes = [32, 8], strides = [1, 1]} : vector<34x8xf32> to vector<32x8xf32>
      %43 = vector.extract_strided_slice %32 {offsets = [2, 0], sizes = [32, 8], strides = [1, 1]} : vector<34x8xf32> to vector<32x8xf32>
      %44 = vector.extract_strided_slice %36 {offsets = [0, 0], sizes = [32, 8], strides = [1, 1]} : vector<34x8xf32> to vector<32x8xf32>
      %45 = vector.extract_strided_slice %36 {offsets = [1, 0], sizes = [32, 8], strides = [1, 1]} : vector<34x8xf32> to vector<32x8xf32>
      %46 = vector.extract_strided_slice %36 {offsets = [2, 0], sizes = [32, 8], strides = [1, 1]} : vector<34x8xf32> to vector<32x8xf32>
      %47 = vector.extract_strided_slice %40 {offsets = [0, 0], sizes = [32, 8], strides = [1, 1]} : vector<34x8xf32> to vector<32x8xf32>
      %48 = vector.extract_strided_slice %40 {offsets = [1, 0], sizes = [32, 8], strides = [1, 1]} : vector<34x8xf32> to vector<32x8xf32>
      %49 = vector.extract_strided_slice %40 {offsets = [2, 0], sizes = [32, 8], strides = [1, 1]} : vector<34x8xf32> to vector<32x8xf32>
      %50 = tpu.concatenate %41, %42, %43, %44, %45, %46, %47, %48, %49 in 1 : vector<32x8xf32>, vector<32x8xf32>, vector<32x8xf32>, vector<32x8xf32>, vector<32x8xf32>, vector<32x8xf32>, vector<32x8xf32>, vector<32x8xf32>, vector<32x8xf32> -> vector<32x72xf32>
      %cst = arith.constant dense<0.000000e+00> : vector<32x8xf32>
      %51 = tpu.matmul %50, %3, %cst {dimension_numbers = #tpu.dot_dimension_numbers<[1], [0], [0], [1], [0, 0, 1, 1], [], []>} : vector<32x72xf32>, vector<72x8xf32>, vector<32x8xf32> -> vector<32x8xf32>
      %52 = vector.broadcast %4 : vector<1x8xf32> to vector<32x8xf32>
      %53 = arith.addf %51, %52 : vector<32x8xf32>
      %cst_73 = arith.constant 0.000000e+00 : f32
      %54 = vector.broadcast %cst_73 : f32 to vector<32x8xf32>
      %55 = arith.maximumf %53, %54 : vector<32x8xf32>
      %56 = arith.index_cast %arg32 : i32 to index
      %c0_74 = arith.constant 0 : index
      %c0_75 = arith.constant 0 : index
      %57 = vector.load %arg26[%56, %c0_74, %c0_75] : memref<32x32x8xf32, #tpu.memory_space<vmem>>, vector<1x32x8xf32>
      %58 = vector.shape_cast %57 : vector<1x32x8xf32> to vector<32x8xf32>
      %59 = vector.shape_cast %55 : vector<32x8xf32> to vector<1x32x8xf32>
      tpu.vector_store %arg26[%56, %c0_74, %c0_75], %59 {strides = array<i32>} : memref<32x32x8xf32, #tpu.memory_space<vmem>>, vector<1x32x8xf32>,
    }
    %c32_i32_10 = arith.constant 32 : i32
    %c0_11 = arith.constant 0 : index
    %c0_12 = arith.constant 0 : index
    %6 = vector.load %arg19[%c0_11, %c0_12] : memref<16x32xf32, #tpu.memory_space<vmem>>, vector<16x32xf32>
    %c0_13 = arith.constant 0 : index
    %c0_14 = arith.constant 0 : index
    %7 = vector.load %arg20[%c0_13, %c0_14] : memref<16x32xf32, #tpu.memory_space<vmem>>, vector<16x32xf32>
    %c0_i32_15 = arith.constant 0 : i32
    %c16_i32 = arith.constant 16 : i32
    %8 = arith.addi %c0_i32_15, %c16_i32 : i32
    %c1_i32_16 = arith.constant 1 : i32
    scf.for %arg32 = %c0_i32_15 to %8 step %c1_i32_16  : i32 {
      %c2_i32 = arith.constant 2 : i32
      %29 = arith.muli %c2_i32, %arg32 : i32
      %30 = arith.index_cast %29 : i32 to index
      %c0_65 = arith.constant 0 : index
      %c0_66 = arith.constant 0 : index
      %31 = vector.load %arg26[%30, %c0_65, %c0_66] : memref<32x32x8xf32, #tpu.memory_space<vmem>>, vector<1x32x8xf32>
      %32 = vector.shape_cast %31 : vector<1x32x8xf32> to vector<32x8xf32>
      %c2_i32_67 = arith.constant 2 : i32
      %33 = arith.muli %c2_i32_67, %arg32 : i32
      %c1_i32_68 = arith.constant 1 : i32
      %34 = arith.addi %33, %c1_i32_68 : i32
      %35 = arith.index_cast %34 : i32 to index
      %c0_69 = arith.constant 0 : index
      %c0_70 = arith.constant 0 : index
      %36 = vector.load %arg26[%35, %c0_69, %c0_70] : memref<32x32x8xf32, #tpu.memory_space<vmem>>, vector<1x32x8xf32>
      %37 = vector.shape_cast %36 : vector<1x32x8xf32> to vector<32x8xf32>
      %38 = arith.maximumf %32, %37 : vector<32x8xf32>
      %cst = arith.constant dense<0.000000e+00> : vector<16x8xf32>
      %39 = tpu.matmul %6, %38, %cst {dimension_numbers = #tpu.dot_dimension_numbers<[1], [0], [0], [1], [0, 0, 1, 1], [], []>} : vector<16x32xf32>, vector<32x8xf32>, vector<16x8xf32> -> vector<16x8xf32>
      %cst_71 = arith.constant dense<0.000000e+00> : vector<16x8xf32>
      %40 = tpu.matmul %7, %38, %cst_71 {dimension_numbers = #tpu.dot_dimension_numbers<[1], [0], [0], [1], [0, 0, 1, 1], [], []>} : vector<16x32xf32>, vector<32x8xf32>, vector<16x8xf32> -> vector<16x8xf32>
      %41 = arith.maximumf %39, %40 : vector<16x8xf32>
      %42 = arith.index_cast %arg32 : i32 to index
      %c0_72 = arith.constant 0 : index
      %c0_73 = arith.constant 0 : index
      %43 = vector.load %arg27[%42, %c0_72, %c0_73] : memref<16x16x8xf32, #tpu.memory_space<vmem>>, vector<1x16x8xf32>
      %44 = vector.shape_cast %43 : vector<1x16x8xf32> to vector<16x8xf32>
      %45 = vector.shape_cast %41 : vector<16x8xf32> to vector<1x16x8xf32>
      tpu.vector_store %arg27[%42, %c0_72, %c0_73], %45 {strides = array<i32>} : memref<16x16x8xf32, #tpu.memory_space<vmem>>, vector<1x16x8xf32>,
    }
    %c16_i32_17 = arith.constant 16 : i32
    %c0_18 = arith.constant 0 : index
    %c0_19 = arith.constant 0 : index
    %9 = vector.load %arg6[%c0_18, %c0_19] : memref<72x16xf32, #tpu.memory_space<vmem>>, vector<72x16xf32>
    %c0_20 = arith.constant 0 : index
    %c0_21 = arith.constant 0 : index
    %10 = vector.load %arg7[%c0_20, %c0_21] : memref<1x16xf32, #tpu.memory_space<vmem>>, vector<1x16xf32>
    %c0_i32_22 = arith.constant 0 : i32
    %c14_i32 = arith.constant 14 : i32
    %11 = arith.addi %c0_i32_22, %c14_i32 : i32
    %c1_i32_23 = arith.constant 1 : i32
    scf.for %arg32 = %c0_i32_22 to %11 step %c1_i32_23  : i32 {
      %c0_i32_65 = arith.constant 0 : i32
      %29 = arith.addi %arg32, %c0_i32_65 : i32
      %30 = arith.index_cast %29 : i32 to index
      %c0_66 = arith.constant 0 : index
      %c0_67 = arith.constant 0 : index
      %31 = vector.load %arg27[%30, %c0_66, %c0_67] : memref<16x16x8xf32, #tpu.memory_space<vmem>>, vector<1x16x8xf32>
      %32 = vector.shape_cast %31 : vector<1x16x8xf32> to vector<16x8xf32>
      %c1_i32_68 = arith.constant 1 : i32
      %33 = arith.addi %arg32, %c1_i32_68 : i32
      %34 = arith.index_cast %33 : i32 to index
      %c0_69 = arith.constant 0 : index
      %c0_70 = arith.constant 0 : index
      %35 = vector.load %arg27[%34, %c0_69, %c0_70] : memref<16x16x8xf32, #tpu.memory_space<vmem>>, vector<1x16x8xf32>
      %36 = vector.shape_cast %35 : vector<1x16x8xf32> to vector<16x8xf32>
      %c2_i32 = arith.constant 2 : i32
      %37 = arith.addi %arg32, %c2_i32 : i32
      %38 = arith.index_cast %37 : i32 to index
      %c0_71 = arith.constant 0 : index
      %c0_72 = arith.constant 0 : index
      %39 = vector.load %arg27[%38, %c0_71, %c0_72] : memref<16x16x8xf32, #tpu.memory_space<vmem>>, vector<1x16x8xf32>
      %40 = vector.shape_cast %39 : vector<1x16x8xf32> to vector<16x8xf32>
      %41 = vector.extract_strided_slice %32 {offsets = [0, 0], sizes = [14, 8], strides = [1, 1]} : vector<16x8xf32> to vector<14x8xf32>
      %42 = vector.extract_strided_slice %32 {offsets = [1, 0], sizes = [14, 8], strides = [1, 1]} : vector<16x8xf32> to vector<14x8xf32>
      %43 = vector.extract_strided_slice %32 {offsets = [2, 0], sizes = [14, 8], strides = [1, 1]} : vector<16x8xf32> to vector<14x8xf32>
      %44 = vector.extract_strided_slice %36 {offsets = [0, 0], sizes = [14, 8], strides = [1, 1]} : vector<16x8xf32> to vector<14x8xf32>
      %45 = vector.extract_strided_slice %36 {offsets = [1, 0], sizes = [14, 8], strides = [1, 1]} : vector<16x8xf32> to vector<14x8xf32>
      %46 = vector.extract_strided_slice %36 {offsets = [2, 0], sizes = [14, 8], strides = [1, 1]} : vector<16x8xf32> to vector<14x8xf32>
      %47 = vector.extract_strided_slice %40 {offsets = [0, 0], sizes = [14, 8], strides = [1, 1]} : vector<16x8xf32> to vector<14x8xf32>
      %48 = vector.extract_strided_slice %40 {offsets = [1, 0], sizes = [14, 8], strides = [1, 1]} : vector<16x8xf32> to vector<14x8xf32>
      %49 = vector.extract_strided_slice %40 {offsets = [2, 0], sizes = [14, 8], strides = [1, 1]} : vector<16x8xf32> to vector<14x8xf32>
      %50 = tpu.concatenate %41, %42, %43, %44, %45, %46, %47, %48, %49 in 1 : vector<14x8xf32>, vector<14x8xf32>, vector<14x8xf32>, vector<14x8xf32>, vector<14x8xf32>, vector<14x8xf32>, vector<14x8xf32>, vector<14x8xf32>, vector<14x8xf32> -> vector<14x72xf32>
      %cst = arith.constant dense<0.000000e+00> : vector<14x16xf32>
      %51 = tpu.matmul %50, %9, %cst {dimension_numbers = #tpu.dot_dimension_numbers<[1], [0], [0], [1], [0, 0, 1, 1], [], []>} : vector<14x72xf32>, vector<72x16xf32>, vector<14x16xf32> -> vector<14x16xf32>
      %52 = vector.broadcast %10 : vector<1x16xf32> to vector<14x16xf32>
      %53 = arith.addf %51, %52 : vector<14x16xf32>
      %cst_73 = arith.constant 0.000000e+00 : f32
      %54 = vector.broadcast %cst_73 : f32 to vector<14x16xf32>
      %55 = arith.maximumf %53, %54 : vector<14x16xf32>
      %56 = arith.index_cast %arg32 : i32 to index
      %c0_74 = arith.constant 0 : index
      %c0_75 = arith.constant 0 : index
      %57 = vector.load %arg28[%56, %c0_74, %c0_75] : memref<14x14x16xf32, #tpu.memory_space<vmem>>, vector<1x14x16xf32>
      %58 = vector.shape_cast %57 : vector<1x14x16xf32> to vector<14x16xf32>
      %59 = vector.shape_cast %55 : vector<14x16xf32> to vector<1x14x16xf32>
      tpu.vector_store %arg28[%56, %c0_74, %c0_75], %59 {strides = array<i32>} : memref<14x14x16xf32, #tpu.memory_space<vmem>>, vector<1x14x16xf32>,
    }
    %c14_i32_24 = arith.constant 14 : i32
    %c0_25 = arith.constant 0 : index
    %c0_26 = arith.constant 0 : index
    %12 = vector.load %arg8[%c0_25, %c0_26] : memref<144x16xf32, #tpu.memory_space<vmem>>, vector<144x16xf32>
    %c0_27 = arith.constant 0 : index
    %c0_28 = arith.constant 0 : index
    %13 = vector.load %arg9[%c0_27, %c0_28] : memref<1x16xf32, #tpu.memory_space<vmem>>, vector<1x16xf32>
    %c0_i32_29 = arith.constant 0 : i32
    %c12_i32 = arith.constant 12 : i32
    %14 = arith.addi %c0_i32_29, %c12_i32 : i32
    %c1_i32_30 = arith.constant 1 : i32
    scf.for %arg32 = %c0_i32_29 to %14 step %c1_i32_30  : i32 {
      %c0_i32_65 = arith.constant 0 : i32
      %29 = arith.addi %arg32, %c0_i32_65 : i32
      %30 = arith.index_cast %29 : i32 to index
      %c0_66 = arith.constant 0 : index
      %c0_67 = arith.constant 0 : index
      %31 = vector.load %arg28[%30, %c0_66, %c0_67] : memref<14x14x16xf32, #tpu.memory_space<vmem>>, vector<1x14x16xf32>
      %32 = vector.shape_cast %31 : vector<1x14x16xf32> to vector<14x16xf32>
      %c1_i32_68 = arith.constant 1 : i32
      %33 = arith.addi %arg32, %c1_i32_68 : i32
      %34 = arith.index_cast %33 : i32 to index
      %c0_69 = arith.constant 0 : index
      %c0_70 = arith.constant 0 : index
      %35 = vector.load %arg28[%34, %c0_69, %c0_70] : memref<14x14x16xf32, #tpu.memory_space<vmem>>, vector<1x14x16xf32>
      %36 = vector.shape_cast %35 : vector<1x14x16xf32> to vector<14x16xf32>
      %c2_i32 = arith.constant 2 : i32
      %37 = arith.addi %arg32, %c2_i32 : i32
      %38 = arith.index_cast %37 : i32 to index
      %c0_71 = arith.constant 0 : index
      %c0_72 = arith.constant 0 : index
      %39 = vector.load %arg28[%38, %c0_71, %c0_72] : memref<14x14x16xf32, #tpu.memory_space<vmem>>, vector<1x14x16xf32>
      %40 = vector.shape_cast %39 : vector<1x14x16xf32> to vector<14x16xf32>
      %41 = vector.extract_strided_slice %32 {offsets = [0, 0], sizes = [12, 16], strides = [1, 1]} : vector<14x16xf32> to vector<12x16xf32>
      %42 = vector.extract_strided_slice %32 {offsets = [1, 0], sizes = [12, 16], strides = [1, 1]} : vector<14x16xf32> to vector<12x16xf32>
      %43 = vector.extract_strided_slice %32 {offsets = [2, 0], sizes = [12, 16], strides = [1, 1]} : vector<14x16xf32> to vector<12x16xf32>
      %44 = vector.extract_strided_slice %36 {offsets = [0, 0], sizes = [12, 16], strides = [1, 1]} : vector<14x16xf32> to vector<12x16xf32>
      %45 = vector.extract_strided_slice %36 {offsets = [1, 0], sizes = [12, 16], strides = [1, 1]} : vector<14x16xf32> to vector<12x16xf32>
      %46 = vector.extract_strided_slice %36 {offsets = [2, 0], sizes = [12, 16], strides = [1, 1]} : vector<14x16xf32> to vector<12x16xf32>
      %47 = vector.extract_strided_slice %40 {offsets = [0, 0], sizes = [12, 16], strides = [1, 1]} : vector<14x16xf32> to vector<12x16xf32>
      %48 = vector.extract_strided_slice %40 {offsets = [1, 0], sizes = [12, 16], strides = [1, 1]} : vector<14x16xf32> to vector<12x16xf32>
      %49 = vector.extract_strided_slice %40 {offsets = [2, 0], sizes = [12, 16], strides = [1, 1]} : vector<14x16xf32> to vector<12x16xf32>
      %50 = tpu.concatenate %41, %42, %43, %44, %45, %46, %47, %48, %49 in 1 : vector<12x16xf32>, vector<12x16xf32>, vector<12x16xf32>, vector<12x16xf32>, vector<12x16xf32>, vector<12x16xf32>, vector<12x16xf32>, vector<12x16xf32>, vector<12x16xf32> -> vector<12x144xf32>
      %cst = arith.constant dense<0.000000e+00> : vector<12x16xf32>
      %51 = tpu.matmul %50, %12, %cst {dimension_numbers = #tpu.dot_dimension_numbers<[1], [0], [0], [1], [0, 0, 1, 1], [], []>} : vector<12x144xf32>, vector<144x16xf32>, vector<12x16xf32> -> vector<12x16xf32>
      %52 = vector.broadcast %13 : vector<1x16xf32> to vector<12x16xf32>
      %53 = arith.addf %51, %52 : vector<12x16xf32>
      %cst_73 = arith.constant 0.000000e+00 : f32
      %54 = vector.broadcast %cst_73 : f32 to vector<12x16xf32>
      %55 = arith.maximumf %53, %54 : vector<12x16xf32>
      %56 = arith.index_cast %arg32 : i32 to index
      %c0_74 = arith.constant 0 : index
      %c0_75 = arith.constant 0 : index
      %57 = vector.load %arg29[%56, %c0_74, %c0_75] : memref<12x12x16xf32, #tpu.memory_space<vmem>>, vector<1x12x16xf32>
      %58 = vector.shape_cast %57 : vector<1x12x16xf32> to vector<12x16xf32>
      %59 = vector.shape_cast %55 : vector<12x16xf32> to vector<1x12x16xf32>
      tpu.vector_store %arg29[%56, %c0_74, %c0_75], %59 {strides = array<i32>} : memref<12x12x16xf32, #tpu.memory_space<vmem>>, vector<1x12x16xf32>,
    }
    %c12_i32_31 = arith.constant 12 : i32
    %c0_32 = arith.constant 0 : index
    %c0_33 = arith.constant 0 : index
    %c0_34 = arith.constant 0 : index
    %15 = vector.load %arg10[%c0_32, %c0_33, %c0_34] : memref<4x16x16xf32, #tpu.memory_space<vmem>>, vector<4x16x16xf32>
    %c0_35 = arith.constant 0 : index
    %c0_36 = arith.constant 0 : index
    %16 = vector.load %arg11[%c0_35, %c0_36] : memref<1x16xf32, #tpu.memory_space<vmem>>, vector<1x16xf32>
    %c0_37 = arith.constant 0 : index
    %c0_38 = arith.constant 0 : index
    %17 = vector.load %arg21[%c0_37, %c0_38] : memref<24x12xf32, #tpu.memory_space<vmem>>, vector<24x12xf32>
    %c0_39 = arith.constant 0 : index
    %c0_40 = arith.constant 0 : index
    %18 = vector.load %arg22[%c0_39, %c0_40] : memref<24x12xf32, #tpu.memory_space<vmem>>, vector<24x12xf32>
    %c0_i32_41 = arith.constant 0 : i32
    %c12_i32_42 = arith.constant 12 : i32
    %19 = arith.addi %c0_i32_41, %c12_i32_42 : i32
    %c1_i32_43 = arith.constant 1 : i32
    scf.for %arg32 = %c0_i32_41 to %19 step %c1_i32_43  : i32 {
      %29 = arith.index_cast %arg32 : i32 to index
      %c0_65 = arith.constant 0 : index
      %c0_66 = arith.constant 0 : index
      %30 = vector.load %arg29[%29, %c0_65, %c0_66] : memref<12x12x16xf32, #tpu.memory_space<vmem>>, vector<1x12x16xf32>
      %31 = vector.shape_cast %30 : vector<1x12x16xf32> to vector<12x16xf32>
      %32 = vector.extract_strided_slice %15 {offsets = [0, 0, 0], sizes = [1, 16, 16], strides = [1, 1, 1]} : vector<4x16x16xf32> to vector<1x16x16xf32>
      %33 = vector.shape_cast %32 : vector<1x16x16xf32> to vector<16x16xf32>
      %cst = arith.constant dense<0.000000e+00> : vector<12x16xf32>
      %34 = tpu.matmul %31, %33, %cst {dimension_numbers = #tpu.dot_dimension_numbers<[1], [0], [0], [1], [0, 0, 1, 1], [], []>} : vector<12x16xf32>, vector<16x16xf32>, vector<12x16xf32> -> vector<12x16xf32>
      %35 = vector.extract_strided_slice %15 {offsets = [1, 0, 0], sizes = [1, 16, 16], strides = [1, 1, 1]} : vector<4x16x16xf32> to vector<1x16x16xf32>
      %36 = vector.shape_cast %35 : vector<1x16x16xf32> to vector<16x16xf32>
      %cst_67 = arith.constant dense<0.000000e+00> : vector<12x16xf32>
      %37 = tpu.matmul %31, %36, %cst_67 {dimension_numbers = #tpu.dot_dimension_numbers<[1], [0], [0], [1], [0, 0, 1, 1], [], []>} : vector<12x16xf32>, vector<16x16xf32>, vector<12x16xf32> -> vector<12x16xf32>
      %cst_68 = arith.constant dense<0.000000e+00> : vector<24x16xf32>
      %38 = tpu.matmul %17, %34, %cst_68 {dimension_numbers = #tpu.dot_dimension_numbers<[1], [0], [0], [1], [0, 0, 1, 1], [], []>} : vector<24x12xf32>, vector<12x16xf32>, vector<24x16xf32> -> vector<24x16xf32>
      %cst_69 = arith.constant dense<0.000000e+00> : vector<24x16xf32>
      %39 = tpu.matmul %18, %37, %cst_69 {dimension_numbers = #tpu.dot_dimension_numbers<[1], [0], [0], [1], [0, 0, 1, 1], [], []>} : vector<24x12xf32>, vector<12x16xf32>, vector<24x16xf32> -> vector<24x16xf32>
      %40 = arith.addf %38, %39 : vector<24x16xf32>
      %41 = vector.broadcast %16 : vector<1x16xf32> to vector<24x16xf32>
      %42 = arith.addf %40, %41 : vector<24x16xf32>
      %c2_i32 = arith.constant 2 : i32
      %43 = arith.muli %c2_i32, %arg32 : i32
      %c0_i32_70 = arith.constant 0 : i32
      %44 = arith.addi %43, %c0_i32_70 : i32
      %45 = arith.index_cast %44 : i32 to index
      %c0_71 = arith.constant 0 : index
      %c0_72 = arith.constant 0 : index
      %46 = vector.load %arg30[%45, %c0_71, %c0_72] : memref<24x24x16xf32, #tpu.memory_space<vmem>>, vector<1x24x16xf32>
      %47 = vector.shape_cast %46 : vector<1x24x16xf32> to vector<24x16xf32>
      %48 = vector.shape_cast %42 : vector<24x16xf32> to vector<1x24x16xf32>
      tpu.vector_store %arg30[%45, %c0_71, %c0_72], %48 {strides = array<i32>} : memref<24x24x16xf32, #tpu.memory_space<vmem>>, vector<1x24x16xf32>,
      %49 = vector.extract_strided_slice %15 {offsets = [2, 0, 0], sizes = [1, 16, 16], strides = [1, 1, 1]} : vector<4x16x16xf32> to vector<1x16x16xf32>
      %50 = vector.shape_cast %49 : vector<1x16x16xf32> to vector<16x16xf32>
      %cst_73 = arith.constant dense<0.000000e+00> : vector<12x16xf32>
      %51 = tpu.matmul %31, %50, %cst_73 {dimension_numbers = #tpu.dot_dimension_numbers<[1], [0], [0], [1], [0, 0, 1, 1], [], []>} : vector<12x16xf32>, vector<16x16xf32>, vector<12x16xf32> -> vector<12x16xf32>
      %52 = vector.extract_strided_slice %15 {offsets = [3, 0, 0], sizes = [1, 16, 16], strides = [1, 1, 1]} : vector<4x16x16xf32> to vector<1x16x16xf32>
      %53 = vector.shape_cast %52 : vector<1x16x16xf32> to vector<16x16xf32>
      %cst_74 = arith.constant dense<0.000000e+00> : vector<12x16xf32>
      %54 = tpu.matmul %31, %53, %cst_74 {dimension_numbers = #tpu.dot_dimension_numbers<[1], [0], [0], [1], [0, 0, 1, 1], [], []>} : vector<12x16xf32>, vector<16x16xf32>, vector<12x16xf32> -> vector<12x16xf32>
      %cst_75 = arith.constant dense<0.000000e+00> : vector<24x16xf32>
      %55 = tpu.matmul %17, %51, %cst_75 {dimension_numbers = #tpu.dot_dimension_numbers<[1], [0], [0], [1], [0, 0, 1, 1], [], []>} : vector<24x12xf32>, vector<12x16xf32>, vector<24x16xf32> -> vector<24x16xf32>
      %cst_76 = arith.constant dense<0.000000e+00> : vector<24x16xf32>
      %56 = tpu.matmul %18, %54, %cst_76 {dimension_numbers = #tpu.dot_dimension_numbers<[1], [0], [0], [1], [0, 0, 1, 1], [], []>} : vector<24x12xf32>, vector<12x16xf32>, vector<24x16xf32> -> vector<24x16xf32>
      %57 = arith.addf %55, %56 : vector<24x16xf32>
      %58 = vector.broadcast %16 : vector<1x16xf32> to vector<24x16xf32>
      %59 = arith.addf %57, %58 : vector<24x16xf32>
      %c2_i32_77 = arith.constant 2 : i32
      %60 = arith.muli %c2_i32_77, %arg32 : i32
      %c1_i32_78 = arith.constant 1 : i32
      %61 = arith.addi %60, %c1_i32_78 : i32
      %62 = arith.index_cast %61 : i32 to index
      %c0_79 = arith.constant 0 : index
      %c0_80 = arith.constant 0 : index
      %63 = vector.load %arg30[%62, %c0_79, %c0_80] : memref<24x24x16xf32, #tpu.memory_space<vmem>>, vector<1x24x16xf32>
      %64 = vector.shape_cast %63 : vector<1x24x16xf32> to vector<24x16xf32>
      %65 = vector.shape_cast %59 : vector<24x16xf32> to vector<1x24x16xf32>
      tpu.vector_store %arg30[%62, %c0_79, %c0_80], %65 {strides = array<i32>} : memref<24x24x16xf32, #tpu.memory_space<vmem>>, vector<1x24x16xf32>,
    }
    %c12_i32_44 = arith.constant 12 : i32
    %c0_45 = arith.constant 0 : index
    %c0_46 = arith.constant 0 : index
    %20 = vector.load %arg12[%c0_45, %c0_46] : memref<72x8xf32, #tpu.memory_space<vmem>>, vector<72x8xf32>
    %c0_47 = arith.constant 0 : index
    %c0_48 = arith.constant 0 : index
    %21 = vector.load %arg13[%c0_47, %c0_48] : memref<144x8xf32, #tpu.memory_space<vmem>>, vector<144x8xf32>
    %c0_49 = arith.constant 0 : index
    %c0_50 = arith.constant 0 : index
    %22 = vector.load %arg14[%c0_49, %c0_50] : memref<1x8xf32, #tpu.memory_space<vmem>>, vector<1x8xf32>
    %c0_i32_51 = arith.constant 0 : i32
    %c22_i32 = arith.constant 22 : i32
    %23 = arith.addi %c0_i32_51, %c22_i32 : i32
    %c1_i32_52 = arith.constant 1 : i32
    scf.for %arg32 = %c0_i32_51 to %23 step %c1_i32_52  : i32 {
      %c0_i32_65 = arith.constant 0 : i32
      %29 = arith.addi %arg32, %c0_i32_65 : i32
      %c4_i32 = arith.constant 4 : i32
      %30 = arith.addi %29, %c4_i32 : i32
      %31 = arith.index_cast %30 : i32 to index
      %c0_66 = arith.constant 0 : index
      %c0_67 = arith.constant 0 : index
      %32 = vector.load %arg26[%31, %c0_66, %c0_67] : memref<32x32x8xf32, #tpu.memory_space<vmem>>, vector<1x32x8xf32>
      %33 = vector.shape_cast %32 : vector<1x32x8xf32> to vector<32x8xf32>
      %34 = vector.extract_strided_slice %33 {offsets = [4, 0], sizes = [22, 8], strides = [1, 1]} : vector<32x8xf32> to vector<22x8xf32>
      %c0_i32_68 = arith.constant 0 : i32
      %35 = arith.addi %arg32, %c0_i32_68 : i32
      %c4_i32_69 = arith.constant 4 : i32
      %36 = arith.addi %35, %c4_i32_69 : i32
      %37 = arith.index_cast %36 : i32 to index
      %c0_70 = arith.constant 0 : index
      %c0_71 = arith.constant 0 : index
      %38 = vector.load %arg26[%37, %c0_70, %c0_71] : memref<32x32x8xf32, #tpu.memory_space<vmem>>, vector<1x32x8xf32>
      %39 = vector.shape_cast %38 : vector<1x32x8xf32> to vector<32x8xf32>
      %40 = vector.extract_strided_slice %39 {offsets = [5, 0], sizes = [22, 8], strides = [1, 1]} : vector<32x8xf32> to vector<22x8xf32>
      %c0_i32_72 = arith.constant 0 : i32
      %41 = arith.addi %arg32, %c0_i32_72 : i32
      %c4_i32_73 = arith.constant 4 : i32
      %42 = arith.addi %41, %c4_i32_73 : i32
      %43 = arith.index_cast %42 : i32 to index
      %c0_74 = arith.constant 0 : index
      %c0_75 = arith.constant 0 : index
      %44 = vector.load %arg26[%43, %c0_74, %c0_75] : memref<32x32x8xf32, #tpu.memory_space<vmem>>, vector<1x32x8xf32>
      %45 = vector.shape_cast %44 : vector<1x32x8xf32> to vector<32x8xf32>
      %46 = vector.extract_strided_slice %45 {offsets = [6, 0], sizes = [22, 8], strides = [1, 1]} : vector<32x8xf32> to vector<22x8xf32>
      %c1_i32_76 = arith.constant 1 : i32
      %47 = arith.addi %arg32, %c1_i32_76 : i32
      %c4_i32_77 = arith.constant 4 : i32
      %48 = arith.addi %47, %c4_i32_77 : i32
      %49 = arith.index_cast %48 : i32 to index
      %c0_78 = arith.constant 0 : index
      %c0_79 = arith.constant 0 : index
      %50 = vector.load %arg26[%49, %c0_78, %c0_79] : memref<32x32x8xf32, #tpu.memory_space<vmem>>, vector<1x32x8xf32>
      %51 = vector.shape_cast %50 : vector<1x32x8xf32> to vector<32x8xf32>
      %52 = vector.extract_strided_slice %51 {offsets = [4, 0], sizes = [22, 8], strides = [1, 1]} : vector<32x8xf32> to vector<22x8xf32>
      %c1_i32_80 = arith.constant 1 : i32
      %53 = arith.addi %arg32, %c1_i32_80 : i32
      %c4_i32_81 = arith.constant 4 : i32
      %54 = arith.addi %53, %c4_i32_81 : i32
      %55 = arith.index_cast %54 : i32 to index
      %c0_82 = arith.constant 0 : index
      %c0_83 = arith.constant 0 : index
      %56 = vector.load %arg26[%55, %c0_82, %c0_83] : memref<32x32x8xf32, #tpu.memory_space<vmem>>, vector<1x32x8xf32>
      %57 = vector.shape_cast %56 : vector<1x32x8xf32> to vector<32x8xf32>
      %58 = vector.extract_strided_slice %57 {offsets = [5, 0], sizes = [22, 8], strides = [1, 1]} : vector<32x8xf32> to vector<22x8xf32>
      %c1_i32_84 = arith.constant 1 : i32
      %59 = arith.addi %arg32, %c1_i32_84 : i32
      %c4_i32_85 = arith.constant 4 : i32
      %60 = arith.addi %59, %c4_i32_85 : i32
      %61 = arith.index_cast %60 : i32 to index
      %c0_86 = arith.constant 0 : index
      %c0_87 = arith.constant 0 : index
      %62 = vector.load %arg26[%61, %c0_86, %c0_87] : memref<32x32x8xf32, #tpu.memory_space<vmem>>, vector<1x32x8xf32>
      %63 = vector.shape_cast %62 : vector<1x32x8xf32> to vector<32x8xf32>
      %64 = vector.extract_strided_slice %63 {offsets = [6, 0], sizes = [22, 8], strides = [1, 1]} : vector<32x8xf32> to vector<22x8xf32>
      %c2_i32 = arith.constant 2 : i32
      %65 = arith.addi %arg32, %c2_i32 : i32
      %c4_i32_88 = arith.constant 4 : i32
      %66 = arith.addi %65, %c4_i32_88 : i32
      %67 = arith.index_cast %66 : i32 to index
      %c0_89 = arith.constant 0 : index
      %c0_90 = arith.constant 0 : index
      %68 = vector.load %arg26[%67, %c0_89, %c0_90] : memref<32x32x8xf32, #tpu.memory_space<vmem>>, vector<1x32x8xf32>
      %69 = vector.shape_cast %68 : vector<1x32x8xf32> to vector<32x8xf32>
      %70 = vector.extract_strided_slice %69 {offsets = [4, 0], sizes = [22, 8], strides = [1, 1]} : vector<32x8xf32> to vector<22x8xf32>
      %c2_i32_91 = arith.constant 2 : i32
      %71 = arith.addi %arg32, %c2_i32_91 : i32
      %c4_i32_92 = arith.constant 4 : i32
      %72 = arith.addi %71, %c4_i32_92 : i32
      %73 = arith.index_cast %72 : i32 to index
      %c0_93 = arith.constant 0 : index
      %c0_94 = arith.constant 0 : index
      %74 = vector.load %arg26[%73, %c0_93, %c0_94] : memref<32x32x8xf32, #tpu.memory_space<vmem>>, vector<1x32x8xf32>
      %75 = vector.shape_cast %74 : vector<1x32x8xf32> to vector<32x8xf32>
      %76 = vector.extract_strided_slice %75 {offsets = [5, 0], sizes = [22, 8], strides = [1, 1]} : vector<32x8xf32> to vector<22x8xf32>
      %c2_i32_95 = arith.constant 2 : i32
      %77 = arith.addi %arg32, %c2_i32_95 : i32
      %c4_i32_96 = arith.constant 4 : i32
      %78 = arith.addi %77, %c4_i32_96 : i32
      %79 = arith.index_cast %78 : i32 to index
      %c0_97 = arith.constant 0 : index
      %c0_98 = arith.constant 0 : index
      %80 = vector.load %arg26[%79, %c0_97, %c0_98] : memref<32x32x8xf32, #tpu.memory_space<vmem>>, vector<1x32x8xf32>
      %81 = vector.shape_cast %80 : vector<1x32x8xf32> to vector<32x8xf32>
      %82 = vector.extract_strided_slice %81 {offsets = [6, 0], sizes = [22, 8], strides = [1, 1]} : vector<32x8xf32> to vector<22x8xf32>
      %83 = tpu.concatenate %34, %40, %46, %52, %58, %64, %70, %76, %82 in 1 : vector<22x8xf32>, vector<22x8xf32>, vector<22x8xf32>, vector<22x8xf32>, vector<22x8xf32>, vector<22x8xf32>, vector<22x8xf32>, vector<22x8xf32>, vector<22x8xf32> -> vector<22x72xf32>
      %c0_i32_99 = arith.constant 0 : i32
      %84 = arith.addi %arg32, %c0_i32_99 : i32
      %85 = arith.index_cast %84 : i32 to index
      %c0_100 = arith.constant 0 : index
      %c0_101 = arith.constant 0 : index
      %86 = vector.load %arg30[%85, %c0_100, %c0_101] : memref<24x24x16xf32, #tpu.memory_space<vmem>>, vector<1x24x16xf32>
      %87 = vector.shape_cast %86 : vector<1x24x16xf32> to vector<24x16xf32>
      %88 = vector.extract_strided_slice %87 {offsets = [0, 0], sizes = [22, 16], strides = [1, 1]} : vector<24x16xf32> to vector<22x16xf32>
      %c0_i32_102 = arith.constant 0 : i32
      %89 = arith.addi %arg32, %c0_i32_102 : i32
      %90 = arith.index_cast %89 : i32 to index
      %c0_103 = arith.constant 0 : index
      %c0_104 = arith.constant 0 : index
      %91 = vector.load %arg30[%90, %c0_103, %c0_104] : memref<24x24x16xf32, #tpu.memory_space<vmem>>, vector<1x24x16xf32>
      %92 = vector.shape_cast %91 : vector<1x24x16xf32> to vector<24x16xf32>
      %93 = vector.extract_strided_slice %92 {offsets = [1, 0], sizes = [22, 16], strides = [1, 1]} : vector<24x16xf32> to vector<22x16xf32>
      %c0_i32_105 = arith.constant 0 : i32
      %94 = arith.addi %arg32, %c0_i32_105 : i32
      %95 = arith.index_cast %94 : i32 to index
      %c0_106 = arith.constant 0 : index
      %c0_107 = arith.constant 0 : index
      %96 = vector.load %arg30[%95, %c0_106, %c0_107] : memref<24x24x16xf32, #tpu.memory_space<vmem>>, vector<1x24x16xf32>
      %97 = vector.shape_cast %96 : vector<1x24x16xf32> to vector<24x16xf32>
      %98 = vector.extract_strided_slice %97 {offsets = [2, 0], sizes = [22, 16], strides = [1, 1]} : vector<24x16xf32> to vector<22x16xf32>
      %c1_i32_108 = arith.constant 1 : i32
      %99 = arith.addi %arg32, %c1_i32_108 : i32
      %100 = arith.index_cast %99 : i32 to index
      %c0_109 = arith.constant 0 : index
      %c0_110 = arith.constant 0 : index
      %101 = vector.load %arg30[%100, %c0_109, %c0_110] : memref<24x24x16xf32, #tpu.memory_space<vmem>>, vector<1x24x16xf32>
      %102 = vector.shape_cast %101 : vector<1x24x16xf32> to vector<24x16xf32>
      %103 = vector.extract_strided_slice %102 {offsets = [0, 0], sizes = [22, 16], strides = [1, 1]} : vector<24x16xf32> to vector<22x16xf32>
      %c1_i32_111 = arith.constant 1 : i32
      %104 = arith.addi %arg32, %c1_i32_111 : i32
      %105 = arith.index_cast %104 : i32 to index
      %c0_112 = arith.constant 0 : index
      %c0_113 = arith.constant 0 : index
      %106 = vector.load %arg30[%105, %c0_112, %c0_113] : memref<24x24x16xf32, #tpu.memory_space<vmem>>, vector<1x24x16xf32>
      %107 = vector.shape_cast %106 : vector<1x24x16xf32> to vector<24x16xf32>
      %108 = vector.extract_strided_slice %107 {offsets = [1, 0], sizes = [22, 16], strides = [1, 1]} : vector<24x16xf32> to vector<22x16xf32>
      %c1_i32_114 = arith.constant 1 : i32
      %109 = arith.addi %arg32, %c1_i32_114 : i32
      %110 = arith.index_cast %109 : i32 to index
      %c0_115 = arith.constant 0 : index
      %c0_116 = arith.constant 0 : index
      %111 = vector.load %arg30[%110, %c0_115, %c0_116] : memref<24x24x16xf32, #tpu.memory_space<vmem>>, vector<1x24x16xf32>
      %112 = vector.shape_cast %111 : vector<1x24x16xf32> to vector<24x16xf32>
      %113 = vector.extract_strided_slice %112 {offsets = [2, 0], sizes = [22, 16], strides = [1, 1]} : vector<24x16xf32> to vector<22x16xf32>
      %c2_i32_117 = arith.constant 2 : i32
      %114 = arith.addi %arg32, %c2_i32_117 : i32
      %115 = arith.index_cast %114 : i32 to index
      %c0_118 = arith.constant 0 : index
      %c0_119 = arith.constant 0 : index
      %116 = vector.load %arg30[%115, %c0_118, %c0_119] : memref<24x24x16xf32, #tpu.memory_space<vmem>>, vector<1x24x16xf32>
      %117 = vector.shape_cast %116 : vector<1x24x16xf32> to vector<24x16xf32>
      %118 = vector.extract_strided_slice %117 {offsets = [0, 0], sizes = [22, 16], strides = [1, 1]} : vector<24x16xf32> to vector<22x16xf32>
      %c2_i32_120 = arith.constant 2 : i32
      %119 = arith.addi %arg32, %c2_i32_120 : i32
      %120 = arith.index_cast %119 : i32 to index
      %c0_121 = arith.constant 0 : index
      %c0_122 = arith.constant 0 : index
      %121 = vector.load %arg30[%120, %c0_121, %c0_122] : memref<24x24x16xf32, #tpu.memory_space<vmem>>, vector<1x24x16xf32>
      %122 = vector.shape_cast %121 : vector<1x24x16xf32> to vector<24x16xf32>
      %123 = vector.extract_strided_slice %122 {offsets = [1, 0], sizes = [22, 16], strides = [1, 1]} : vector<24x16xf32> to vector<22x16xf32>
      %c2_i32_123 = arith.constant 2 : i32
      %124 = arith.addi %arg32, %c2_i32_123 : i32
      %125 = arith.index_cast %124 : i32 to index
      %c0_124 = arith.constant 0 : index
      %c0_125 = arith.constant 0 : index
      %126 = vector.load %arg30[%125, %c0_124, %c0_125] : memref<24x24x16xf32, #tpu.memory_space<vmem>>, vector<1x24x16xf32>
      %127 = vector.shape_cast %126 : vector<1x24x16xf32> to vector<24x16xf32>
      %128 = vector.extract_strided_slice %127 {offsets = [2, 0], sizes = [22, 16], strides = [1, 1]} : vector<24x16xf32> to vector<22x16xf32>
      %129 = tpu.concatenate %88, %93, %98, %103, %108, %113, %118, %123, %128 in 1 : vector<22x16xf32>, vector<22x16xf32>, vector<22x16xf32>, vector<22x16xf32>, vector<22x16xf32>, vector<22x16xf32>, vector<22x16xf32>, vector<22x16xf32>, vector<22x16xf32> -> vector<22x144xf32>
      %cst = arith.constant dense<0.000000e+00> : vector<22x8xf32>
      %130 = tpu.matmul %83, %20, %cst {dimension_numbers = #tpu.dot_dimension_numbers<[1], [0], [0], [1], [0, 0, 1, 1], [], []>} : vector<22x72xf32>, vector<72x8xf32>, vector<22x8xf32> -> vector<22x8xf32>
      %cst_126 = arith.constant dense<0.000000e+00> : vector<22x8xf32>
      %131 = tpu.matmul %129, %21, %cst_126 {dimension_numbers = #tpu.dot_dimension_numbers<[1], [0], [0], [1], [0, 0, 1, 1], [], []>} : vector<22x144xf32>, vector<144x8xf32>, vector<22x8xf32> -> vector<22x8xf32>
      %132 = arith.addf %130, %131 : vector<22x8xf32>
      %133 = vector.broadcast %22 : vector<1x8xf32> to vector<22x8xf32>
      %134 = arith.addf %132, %133 : vector<22x8xf32>
      %cst_127 = arith.constant 0.000000e+00 : f32
      %135 = vector.broadcast %cst_127 : f32 to vector<22x8xf32>
      %136 = arith.maximumf %134, %135 : vector<22x8xf32>
      %137 = arith.index_cast %arg32 : i32 to index
      %c0_128 = arith.constant 0 : index
      %c0_129 = arith.constant 0 : index
      %138 = vector.load %arg31[%137, %c0_128, %c0_129] : memref<22x22x8xf32, #tpu.memory_space<vmem>>, vector<1x22x8xf32>
      %139 = vector.shape_cast %138 : vector<1x22x8xf32> to vector<22x8xf32>
      %140 = vector.shape_cast %136 : vector<22x8xf32> to vector<1x22x8xf32>
      tpu.vector_store %arg31[%137, %c0_128, %c0_129], %140 {strides = array<i32>} : memref<22x22x8xf32, #tpu.memory_space<vmem>>, vector<1x22x8xf32>,
    }
    %c22_i32_53 = arith.constant 22 : i32
    %c0_54 = arith.constant 0 : index
    %c0_55 = arith.constant 0 : index
    %24 = vector.load %arg15[%c0_54, %c0_55] : memref<72x8xf32, #tpu.memory_space<vmem>>, vector<72x8xf32>
    %c0_56 = arith.constant 0 : index
    %c0_57 = arith.constant 0 : index
    %25 = vector.load %arg16[%c0_56, %c0_57] : memref<1x8xf32, #tpu.memory_space<vmem>>, vector<1x8xf32>
    %c0_58 = arith.constant 0 : index
    %c0_59 = arith.constant 0 : index
    %26 = vector.load %arg17[%c0_58, %c0_59] : memref<8x7xf32, #tpu.memory_space<vmem>>, vector<8x7xf32>
    %c0_60 = arith.constant 0 : index
    %c0_61 = arith.constant 0 : index
    %27 = vector.load %arg18[%c0_60, %c0_61] : memref<1x7xf32, #tpu.memory_space<vmem>>, vector<1x7xf32>
    %c0_i32_62 = arith.constant 0 : i32
    %c20_i32 = arith.constant 20 : i32
    %28 = arith.addi %c0_i32_62, %c20_i32 : i32
    %c1_i32_63 = arith.constant 1 : i32
    scf.for %arg32 = %c0_i32_62 to %28 step %c1_i32_63  : i32 {
      %c0_i32_65 = arith.constant 0 : i32
      %29 = arith.addi %arg32, %c0_i32_65 : i32
      %30 = arith.index_cast %29 : i32 to index
      %c0_66 = arith.constant 0 : index
      %c0_67 = arith.constant 0 : index
      %31 = vector.load %arg31[%30, %c0_66, %c0_67] : memref<22x22x8xf32, #tpu.memory_space<vmem>>, vector<1x22x8xf32>
      %32 = vector.shape_cast %31 : vector<1x22x8xf32> to vector<22x8xf32>
      %33 = vector.extract_strided_slice %32 {offsets = [0, 0], sizes = [20, 8], strides = [1, 1]} : vector<22x8xf32> to vector<20x8xf32>
      %c0_i32_68 = arith.constant 0 : i32
      %34 = arith.addi %arg32, %c0_i32_68 : i32
      %35 = arith.index_cast %34 : i32 to index
      %c0_69 = arith.constant 0 : index
      %c0_70 = arith.constant 0 : index
      %36 = vector.load %arg31[%35, %c0_69, %c0_70] : memref<22x22x8xf32, #tpu.memory_space<vmem>>, vector<1x22x8xf32>
      %37 = vector.shape_cast %36 : vector<1x22x8xf32> to vector<22x8xf32>
      %38 = vector.extract_strided_slice %37 {offsets = [1, 0], sizes = [20, 8], strides = [1, 1]} : vector<22x8xf32> to vector<20x8xf32>
      %c0_i32_71 = arith.constant 0 : i32
      %39 = arith.addi %arg32, %c0_i32_71 : i32
      %40 = arith.index_cast %39 : i32 to index
      %c0_72 = arith.constant 0 : index
      %c0_73 = arith.constant 0 : index
      %41 = vector.load %arg31[%40, %c0_72, %c0_73] : memref<22x22x8xf32, #tpu.memory_space<vmem>>, vector<1x22x8xf32>
      %42 = vector.shape_cast %41 : vector<1x22x8xf32> to vector<22x8xf32>
      %43 = vector.extract_strided_slice %42 {offsets = [2, 0], sizes = [20, 8], strides = [1, 1]} : vector<22x8xf32> to vector<20x8xf32>
      %c1_i32_74 = arith.constant 1 : i32
      %44 = arith.addi %arg32, %c1_i32_74 : i32
      %45 = arith.index_cast %44 : i32 to index
      %c0_75 = arith.constant 0 : index
      %c0_76 = arith.constant 0 : index
      %46 = vector.load %arg31[%45, %c0_75, %c0_76] : memref<22x22x8xf32, #tpu.memory_space<vmem>>, vector<1x22x8xf32>
      %47 = vector.shape_cast %46 : vector<1x22x8xf32> to vector<22x8xf32>
      %48 = vector.extract_strided_slice %47 {offsets = [0, 0], sizes = [20, 8], strides = [1, 1]} : vector<22x8xf32> to vector<20x8xf32>
      %c1_i32_77 = arith.constant 1 : i32
      %49 = arith.addi %arg32, %c1_i32_77 : i32
      %50 = arith.index_cast %49 : i32 to index
      %c0_78 = arith.constant 0 : index
      %c0_79 = arith.constant 0 : index
      %51 = vector.load %arg31[%50, %c0_78, %c0_79] : memref<22x22x8xf32, #tpu.memory_space<vmem>>, vector<1x22x8xf32>
      %52 = vector.shape_cast %51 : vector<1x22x8xf32> to vector<22x8xf32>
      %53 = vector.extract_strided_slice %52 {offsets = [1, 0], sizes = [20, 8], strides = [1, 1]} : vector<22x8xf32> to vector<20x8xf32>
      %c1_i32_80 = arith.constant 1 : i32
      %54 = arith.addi %arg32, %c1_i32_80 : i32
      %55 = arith.index_cast %54 : i32 to index
      %c0_81 = arith.constant 0 : index
      %c0_82 = arith.constant 0 : index
      %56 = vector.load %arg31[%55, %c0_81, %c0_82] : memref<22x22x8xf32, #tpu.memory_space<vmem>>, vector<1x22x8xf32>
      %57 = vector.shape_cast %56 : vector<1x22x8xf32> to vector<22x8xf32>
      %58 = vector.extract_strided_slice %57 {offsets = [2, 0], sizes = [20, 8], strides = [1, 1]} : vector<22x8xf32> to vector<20x8xf32>
      %c2_i32 = arith.constant 2 : i32
      %59 = arith.addi %arg32, %c2_i32 : i32
      %60 = arith.index_cast %59 : i32 to index
      %c0_83 = arith.constant 0 : index
      %c0_84 = arith.constant 0 : index
      %61 = vector.load %arg31[%60, %c0_83, %c0_84] : memref<22x22x8xf32, #tpu.memory_space<vmem>>, vector<1x22x8xf32>
      %62 = vector.shape_cast %61 : vector<1x22x8xf32> to vector<22x8xf32>
      %63 = vector.extract_strided_slice %62 {offsets = [0, 0], sizes = [20, 8], strides = [1, 1]} : vector<22x8xf32> to vector<20x8xf32>
      %c2_i32_85 = arith.constant 2 : i32
      %64 = arith.addi %arg32, %c2_i32_85 : i32
      %65 = arith.index_cast %64 : i32 to index
      %c0_86 = arith.constant 0 : index
      %c0_87 = arith.constant 0 : index
      %66 = vector.load %arg31[%65, %c0_86, %c0_87] : memref<22x22x8xf32, #tpu.memory_space<vmem>>, vector<1x22x8xf32>
      %67 = vector.shape_cast %66 : vector<1x22x8xf32> to vector<22x8xf32>
      %68 = vector.extract_strided_slice %67 {offsets = [1, 0], sizes = [20, 8], strides = [1, 1]} : vector<22x8xf32> to vector<20x8xf32>
      %c2_i32_88 = arith.constant 2 : i32
      %69 = arith.addi %arg32, %c2_i32_88 : i32
      %70 = arith.index_cast %69 : i32 to index
      %c0_89 = arith.constant 0 : index
      %c0_90 = arith.constant 0 : index
      %71 = vector.load %arg31[%70, %c0_89, %c0_90] : memref<22x22x8xf32, #tpu.memory_space<vmem>>, vector<1x22x8xf32>
      %72 = vector.shape_cast %71 : vector<1x22x8xf32> to vector<22x8xf32>
      %73 = vector.extract_strided_slice %72 {offsets = [2, 0], sizes = [20, 8], strides = [1, 1]} : vector<22x8xf32> to vector<20x8xf32>
      %74 = tpu.concatenate %33, %38, %43, %48, %53, %58, %63, %68, %73 in 1 : vector<20x8xf32>, vector<20x8xf32>, vector<20x8xf32>, vector<20x8xf32>, vector<20x8xf32>, vector<20x8xf32>, vector<20x8xf32>, vector<20x8xf32>, vector<20x8xf32> -> vector<20x72xf32>
      %cst = arith.constant dense<0.000000e+00> : vector<20x8xf32>
      %75 = tpu.matmul %74, %24, %cst {dimension_numbers = #tpu.dot_dimension_numbers<[1], [0], [0], [1], [0, 0, 1, 1], [], []>} : vector<20x72xf32>, vector<72x8xf32>, vector<20x8xf32> -> vector<20x8xf32>
      %76 = vector.broadcast %25 : vector<1x8xf32> to vector<20x8xf32>
      %77 = arith.addf %75, %76 : vector<20x8xf32>
      %cst_91 = arith.constant 0.000000e+00 : f32
      %78 = vector.broadcast %cst_91 : f32 to vector<20x8xf32>
      %79 = arith.maximumf %77, %78 : vector<20x8xf32>
      %cst_92 = arith.constant dense<0.000000e+00> : vector<20x7xf32>
      %80 = tpu.matmul %79, %26, %cst_92 {dimension_numbers = #tpu.dot_dimension_numbers<[1], [0], [0], [1], [0, 0, 1, 1], [], []>} : vector<20x8xf32>, vector<8x7xf32>, vector<20x7xf32> -> vector<20x7xf32>
      %81 = vector.broadcast %27 : vector<1x7xf32> to vector<20x7xf32>
      %82 = arith.addf %80, %81 : vector<20x7xf32>
      %83 = arith.negf %82 : vector<20x7xf32>
      %84 = math.exp %83 : vector<20x7xf32>
      %cst_93 = arith.constant 1.000000e+00 : f32
      %85 = vector.broadcast %cst_93 : f32 to vector<20x7xf32>
      %86 = arith.addf %85, %84 : vector<20x7xf32>
      %87 = arith.divf %85, %86 : vector<20x7xf32>
      %88 = vector.extract_strided_slice %87 {offsets = [0, 0], sizes = [20, 6], strides = [1, 1]} : vector<20x7xf32> to vector<20x6xf32>
      %c0_94 = arith.constant 0 : index
      %89 = arith.index_cast %arg32 : i32 to index
      %c0_95 = arith.constant 0 : index
      %c0_96 = arith.constant 0 : index
      %90 = vector.load %arg23[%c0_94, %89, %c0_95, %c0_96] : memref<1x20x20x6xf32, #tpu.memory_space<vmem>>, vector<1x1x20x6xf32>
      %91 = vector.shape_cast %90 : vector<1x1x20x6xf32> to vector<20x6xf32>
      %92 = vector.shape_cast %88 : vector<20x6xf32> to vector<1x1x20x6xf32>
      tpu.vector_store %arg23[%c0_94, %89, %c0_95, %c0_96], %92 {strides = array<i32>} : memref<1x20x20x6xf32, #tpu.memory_space<vmem>>, vector<1x1x20x6xf32>,
      %93 = vector.extract_strided_slice %87 {offsets = [0, 6], sizes = [20, 1], strides = [1, 1]} : vector<20x7xf32> to vector<20x1xf32>
      %c0_97 = arith.constant 0 : index
      %94 = arith.index_cast %arg32 : i32 to index
      %c0_98 = arith.constant 0 : index
      %c0_99 = arith.constant 0 : index
      %95 = vector.load %arg24[%c0_97, %94, %c0_98, %c0_99] : memref<1x20x20x1xf32, #tpu.memory_space<vmem>>, vector<1x1x20x1xf32>
      %96 = vector.shape_cast %95 : vector<1x1x20x1xf32> to vector<20x1xf32>
      %97 = vector.shape_cast %93 : vector<20x1xf32> to vector<1x1x20x1xf32>
      tpu.vector_store %arg24[%c0_97, %94, %c0_98, %c0_99], %97 {strides = array<i32>} : memref<1x20x20x1xf32, #tpu.memory_space<vmem>>, vector<1x1x20x1xf32>,
    }
    %c20_i32_64 = arith.constant 20 : i32
    return
  }
  func.func @transform_0(%arg0: i32) -> (i32, i32, i32, i32) {
    %c0_i32 = arith.constant 0 : i32
    %c0_i32_0 = arith.constant 0 : i32
    %c0_i32_1 = arith.constant 0 : i32
    %c0_i32_2 = arith.constant 0 : i32
    return %arg0, %c0_i32, %c0_i32_0, %c0_i32_1 : i32, i32, i32, i32
  }
  func.func @transform_1(%arg0: i32) -> (i32, i32) {
    %c0_i32 = arith.constant 0 : i32
    %c0_i32_0 = arith.constant 0 : i32
    %c0_i32_1 = arith.constant 0 : i32
    return %c0_i32, %c0_i32_0 : i32, i32
  }
  func.func @transform_2(%arg0: i32) -> (i32, i32) {
    %c0_i32 = arith.constant 0 : i32
    %c0_i32_0 = arith.constant 0 : i32
    %c0_i32_1 = arith.constant 0 : i32
    return %c0_i32, %c0_i32_0 : i32, i32
  }
  func.func @transform_3(%arg0: i32) -> (i32, i32) {
    %c0_i32 = arith.constant 0 : i32
    %c0_i32_0 = arith.constant 0 : i32
    %c0_i32_1 = arith.constant 0 : i32
    return %c0_i32, %c0_i32_0 : i32, i32
  }
  func.func @transform_4(%arg0: i32) -> (i32, i32) {
    %c0_i32 = arith.constant 0 : i32
    %c0_i32_0 = arith.constant 0 : i32
    %c0_i32_1 = arith.constant 0 : i32
    return %c0_i32, %c0_i32_0 : i32, i32
  }
  func.func @transform_5(%arg0: i32) -> (i32, i32) {
    %c0_i32 = arith.constant 0 : i32
    %c0_i32_0 = arith.constant 0 : i32
    %c0_i32_1 = arith.constant 0 : i32
    return %c0_i32, %c0_i32_0 : i32, i32
  }
  func.func @transform_6(%arg0: i32) -> (i32, i32) {
    %c0_i32 = arith.constant 0 : i32
    %c0_i32_0 = arith.constant 0 : i32
    %c0_i32_1 = arith.constant 0 : i32
    return %c0_i32, %c0_i32_0 : i32, i32
  }
  func.func @transform_7(%arg0: i32) -> (i32, i32) {
    %c0_i32 = arith.constant 0 : i32
    %c0_i32_0 = arith.constant 0 : i32
    %c0_i32_1 = arith.constant 0 : i32
    return %c0_i32, %c0_i32_0 : i32, i32
  }
  func.func @transform_8(%arg0: i32) -> (i32, i32) {
    %c0_i32 = arith.constant 0 : i32
    %c0_i32_0 = arith.constant 0 : i32
    %c0_i32_1 = arith.constant 0 : i32
    return %c0_i32, %c0_i32_0 : i32, i32
  }
  func.func @transform_9(%arg0: i32) -> (i32, i32, i32) {
    %c0_i32 = arith.constant 0 : i32
    %c0_i32_0 = arith.constant 0 : i32
    %c0_i32_1 = arith.constant 0 : i32
    %c0_i32_2 = arith.constant 0 : i32
    return %c0_i32, %c0_i32_0, %c0_i32_1 : i32, i32, i32
  }
  func.func @transform_10(%arg0: i32) -> (i32, i32) {
    %c0_i32 = arith.constant 0 : i32
    %c0_i32_0 = arith.constant 0 : i32
    %c0_i32_1 = arith.constant 0 : i32
    return %c0_i32, %c0_i32_0 : i32, i32
  }
  func.func @transform_11(%arg0: i32) -> (i32, i32) {
    %c0_i32 = arith.constant 0 : i32
    %c0_i32_0 = arith.constant 0 : i32
    %c0_i32_1 = arith.constant 0 : i32
    return %c0_i32, %c0_i32_0 : i32, i32
  }
  func.func @transform_12(%arg0: i32) -> (i32, i32) {
    %c0_i32 = arith.constant 0 : i32
    %c0_i32_0 = arith.constant 0 : i32
    %c0_i32_1 = arith.constant 0 : i32
    return %c0_i32, %c0_i32_0 : i32, i32
  }
  func.func @transform_13(%arg0: i32) -> (i32, i32) {
    %c0_i32 = arith.constant 0 : i32
    %c0_i32_0 = arith.constant 0 : i32
    %c0_i32_1 = arith.constant 0 : i32
    return %c0_i32, %c0_i32_0 : i32, i32
  }
  func.func @transform_14(%arg0: i32) -> (i32, i32) {
    %c0_i32 = arith.constant 0 : i32
    %c0_i32_0 = arith.constant 0 : i32
    %c0_i32_1 = arith.constant 0 : i32
    return %c0_i32, %c0_i32_0 : i32, i32
  }
  func.func @transform_15(%arg0: i32) -> (i32, i32) {
    %c0_i32 = arith.constant 0 : i32
    %c0_i32_0 = arith.constant 0 : i32
    %c0_i32_1 = arith.constant 0 : i32
    return %c0_i32, %c0_i32_0 : i32, i32
  }
  func.func @transform_16(%arg0: i32) -> (i32, i32) {
    %c0_i32 = arith.constant 0 : i32
    %c0_i32_0 = arith.constant 0 : i32
    %c0_i32_1 = arith.constant 0 : i32
    return %c0_i32, %c0_i32_0 : i32, i32
  }
  func.func @transform_17(%arg0: i32) -> (i32, i32) {
    %c0_i32 = arith.constant 0 : i32
    %c0_i32_0 = arith.constant 0 : i32
    %c0_i32_1 = arith.constant 0 : i32
    return %c0_i32, %c0_i32_0 : i32, i32
  }
  func.func @transform_18(%arg0: i32) -> (i32, i32) {
    %c0_i32 = arith.constant 0 : i32
    %c0_i32_0 = arith.constant 0 : i32
    %c0_i32_1 = arith.constant 0 : i32
    return %c0_i32, %c0_i32_0 : i32, i32
  }
  func.func @transform_19(%arg0: i32) -> (i32, i32) {
    %c0_i32 = arith.constant 0 : i32
    %c0_i32_0 = arith.constant 0 : i32
    %c0_i32_1 = arith.constant 0 : i32
    return %c0_i32, %c0_i32_0 : i32, i32
  }
  func.func @transform_20(%arg0: i32) -> (i32, i32) {
    %c0_i32 = arith.constant 0 : i32
    %c0_i32_0 = arith.constant 0 : i32
    %c0_i32_1 = arith.constant 0 : i32
    return %c0_i32, %c0_i32_0 : i32, i32
  }
  func.func @transform_21(%arg0: i32) -> (i32, i32) {
    %c0_i32 = arith.constant 0 : i32
    %c0_i32_0 = arith.constant 0 : i32
    %c0_i32_1 = arith.constant 0 : i32
    return %c0_i32, %c0_i32_0 : i32, i32
  }
  func.func @transform_22(%arg0: i32) -> (i32, i32, i32, i32) {
    %c0_i32 = arith.constant 0 : i32
    %c0_i32_0 = arith.constant 0 : i32
    %c0_i32_1 = arith.constant 0 : i32
    %c0_i32_2 = arith.constant 0 : i32
    return %arg0, %c0_i32, %c0_i32_0, %c0_i32_1 : i32, i32, i32, i32
  }
  func.func @transform_23(%arg0: i32) -> (i32, i32, i32, i32) {
    %c0_i32 = arith.constant 0 : i32
    %c0_i32_0 = arith.constant 0 : i32
    %c0_i32_1 = arith.constant 0 : i32
    %c0_i32_2 = arith.constant 0 : i32
    return %arg0, %c0_i32, %c0_i32_0, %c0_i32_1 : i32, i32, i32, i32
  }
}

</mosaic_0001>

<llo_original>
// kernel: unet_model_forward.1
$region0: #{unet_model_forward.1}
  #allocation0 [shape = 'u32[]', space=smem, size = 0x4, offset = 0x4, fixed_abs, tag = 'smem constant byte address 0x4 - core index']
  #allocation1 [shape = 'u32[144,128]{1,0:T(1,128)}', space=vmem, size = 0x12000, scoped, tag = 'internal scratch']
  #allocation2 [shape = 'f32[34,34,8]{2,1,0:T(8,128)}', space=vmem, size = 0xaa000, scoped, tag = 'scratch operand']
  #allocation3 [shape = 'f32[32,32,8]{2,1,0:T(8,128)}', space=vmem, size = 0x80000, scoped, tag = 'scratch operand']
  #allocation4 [shape = 'f32[16,16,8]{2,1,0:T(8,128)}', space=vmem, size = 0x20000, scoped, tag = 'scratch operand']
  #allocation5 [shape = 'f32[14,14,16]{2,1,0:T(8,128)}', space=vmem, size = 0x1c000, scoped, tag = 'scratch operand']
  #allocation6 [shape = 'f32[12,12,16]{2,1,0:T(8,128)}', space=vmem, size = 0x18000, scoped, tag = 'scratch operand']
  #allocation7 [shape = 'f32[24,24,16]{2,1,0:T(8,128)}', space=vmem, size = 0x48000, scoped, tag = 'scratch operand']
  #allocation8 [shape = 'f32[22,22,8]{2,1,0:T(8,128)}', space=vmem, size = 0x42000, scoped, tag = 'scratch operand']
  %s0 = inlined_call_operand.vmem [shape: f32[2,36,36,1], index: 0, kind: input, shape index: {}]
  %s1 = inlined_call_operand.vmem [shape: f32[9,8], index: 1, kind: input, shape index: {}]
  %s2 = inlined_call_operand.vmem [shape: f32[1,8], index: 2, kind: input, shape index: {}]
  %s3 = inlined_call_operand.vmem [shape: f32[72,8], index: 3, kind: input, shape index: {}]
  %s4 = inlined_call_operand.vmem [shape: f32[1,8], index: 4, kind: input, shape index: {}]
  %s5 = inlined_call_operand.vmem [shape: f32[72,16], index: 5, kind: input, shape index: {}]
  %s6 = inlined_call_operand.vmem [shape: f32[1,16], index: 6, kind: input, shape index: {}]
  %s7 = inlined_call_operand.vmem [shape: f32[144,16], index: 7, kind: input, shape index: {}]
  %s8 = inlined_call_operand.vmem [shape: f32[1,16], index: 8, kind: input, shape index: {}]
  %s9 = inlined_call_operand.vmem [shape: f32[4,16,16], index: 9, kind: input, shape index: {}]
  %s10 = inlined_call_operand.vmem [shape: f32[1,16], index: 10, kind: input, shape index: {}]
  %s11 = inlined_call_operand.vmem [shape: f32[72,8], index: 11, kind: input, shape index: {}]
  %s12 = inlined_call_operand.vmem [shape: f32[144,8], index: 12, kind: input, shape index: {}]
  %s13 = inlined_call_operand.vmem [shape: f32[1,8], index: 13, kind: input, shape index: {}]
  %s14 = inlined_call_operand.vmem [shape: f32[72,8], index: 14, kind: input, shape index: {}]
  %s15 = inlined_call_operand.vmem [shape: f32[1,8], index: 15, kind: input, shape index: {}]
  %s16 = inlined_call_operand.vmem [shape: f32[8,7], index: 16, kind: input, shape index: {}]
  %s17 = inlined_call_operand.vmem [shape: f32[1,7], index: 17, kind: input, shape index: {}]
  %s18 = inlined_call_operand.vmem [shape: f32[16,32], index: 18, kind: input, shape index: {}]
  %s19 = inlined_call_operand.vmem [shape: f32[16,32], index: 19, kind: input, shape index: {}]
  %s20 = inlined_call_operand.vmem [shape: f32[24,12], index: 20, kind: input, shape index: {}]
  %s21 = inlined_call_operand.vmem [shape: f32[24,12], index: 21, kind: input, shape index: {}]
  %s22 = inlined_call_operand.vmem [shape: f32[2,20,20,6], index: 22, kind: output, shape index: {0}]
  %s23 = inlined_call_operand.vmem [shape: f32[2,20,20,1], index: 23, kind: output, shape index: {1}]
  %24 = xla_tuple %s22, %s23
  %s25 = sld [smem:[#allocation0]]
  $region185: #{unet_model_forward.1} parent=0
    _
  %s27 = ssub.s32 1, %s25
  %s28 = scalar_select 0, %s27, %s25
  loop: start=0, step=1, limit=4
  $region2: #{unet_model_forward.1} parent=0 // loop_pre_header
    _
  $region3: #{unet_model_forward.1} parent=0 // loop_header
    %s30 = sphi 0, %s34
    %p31 = scmp.ge.s32.totalorder %s30, 4
    %s40 = sphi 0, %s42
    %s43 = sphi 0, %s40
    %s44 = sphi 0, %s43
    %s60 = sphi 0, %s44
    %s64 = sphi 0, %s64
    %s66 = sphi 0, %s64
    %s67 = sphi 0, %s66
    %s81 = sphi 0, %s67
    %s85 = sphi 0, %s85
    %s87 = sphi 0, %s85
    %s88 = sphi 0, %s87
    %s102 = sphi 0, %s88
    %s106 = sphi 0, %s106
    %s108 = sphi 0, %s106
    %s109 = sphi 0, %s108
    %s123 = sphi 0, %s109
    %s127 = sphi 0, %s127
    %s129 = sphi 0, %s127
    %s130 = sphi 0, %s129
    %s144 = sphi 0, %s130
    %s148 = sphi 0, %s148
    %s150 = sphi 0, %s148
    %s151 = sphi 0, %s150
    %s165 = sphi 0, %s151
    %s169 = sphi 0, %s169
    %s171 = sphi 0, %s169
    %s172 = sphi 0, %s171
    %s186 = sphi 0, %s172
    %s190 = sphi 0, %s190
    %s192 = sphi 0, %s190
    %s193 = sphi 0, %s192
    %s207 = sphi 0, %s193
    %s211 = sphi 0, %s211
    %s213 = sphi 0, %s211
    %s214 = sphi 0, %s213
    %s228 = sphi 0, %s214
    %s232 = sphi 0, %s232
    %s234 = sphi 0, %s232
    %s235 = sphi 0, %s234
    %s249 = sphi 0, %s235
    %s253 = sphi 0, %s253
    %s255 = sphi 0, %s253
    %s256 = sphi 0, %s255
    %s270 = sphi 0, %s256
    %s274 = sphi 0, %s274
    %s276 = sphi 0, %s274
    %s277 = sphi 0, %s276
    %s291 = sphi 0, %s277
    %s295 = sphi 0, %s295
    %s297 = sphi 0, %s295
    %s298 = sphi 0, %s297
    %s312 = sphi 0, %s298
    %s316 = sphi 0, %s316
    %s318 = sphi 0, %s316
    %s319 = sphi 0, %s318
    %s333 = sphi 0, %s319
    %s337 = sphi 0, %s337
    %s339 = sphi 0, %s337
    %s340 = sphi 0, %s339
    %s354 = sphi 0, %s340
    %s358 = sphi 0, %s358
    %s360 = sphi 0, %s358
    %s361 = sphi 0, %s360
    %s375 = sphi 0, %s361
    %s379 = sphi 0, %s379
    %s381 = sphi 0, %s379
    %s382 = sphi 0, %s381
    %s396 = sphi 0, %s382
    %s400 = sphi 0, %s400
    %s402 = sphi 0, %s400
    %s403 = sphi 0, %s402
    %s417 = sphi 0, %s403
    %s421 = sphi 0, %s421
    %s423 = sphi 0, %s421
    %s424 = sphi 0, %s423
    %s438 = sphi 0, %s424
    %s442 = sphi 0, %s442
    %s444 = sphi 0, %s442
    %s445 = sphi 0, %s444
    %s459 = sphi 0, %s445
    %s463 = sphi 0, %s463
    %s465 = sphi 0, %s463
    %s466 = sphi 0, %s465
    %s480 = sphi 0, %s466
    %s484 = sphi 0, %s484
    %s486 = sphi 0, %s484
    %s487 = sphi 0, %s486
    %s501 = sphi 0, %s487
    %s507 = sphi 0, %s509
    %s510 = sphi 0, %s507
    %s511 = sphi 0, %s510
    %s527 = sphi 0, %s511
    %s533 = sphi 0, %s535
    %s536 = sphi 0, %s533
    %s537 = sphi 0, %s536
    %s553 = sphi 0, %s537
  $region4: #{unet_model_forward.1} parent=0 // loop_header_branch
    %33 = sbr.rel (%p31) target = $region8
  $region5: #{unet_model_forward.1} parent=0 // loop_body
    %s35 = ssub.s32 %s30, 1
    %s36 = ssub.s32 %s30, 2
    %s37 = sadd.s32 %s30, 1
    %s38 = ssub.s32 %s30, %s37
    %p39 = scmp.eq.s32.totalorder %s38, 0
    %s41 = sadd.s32 %s40, 1
    %s42 = scalar_select %p39, %s40, %s41
    %p45 = pneg %p39
    %p46 = scmp.eq.s32.totalorder %s30, 1
    %p47 = por %p45, %p46
    %p48 = scmp.ne.s32.totalorder %s40, %s43
    %p49 = scmp.eq.s32.totalorder %s30, 0
    %p50 = por %p48, %p49
    %p51 = scmp.ne.s32.totalorder %s40, %s43
    %p52 = scmp.eq.s32.totalorder %s35, 1
    %p53 = por %p51, %p52
    %p54 = scmp.ne.s32.totalorder %s43, %s44
    %p55 = scmp.eq.s32.totalorder %s35, 0
    %p56 = por %p54, %p55
    %p57 = scmp.ne.s32.totalorder %s43, %s44
    %p58 = scmp.eq.s32.totalorder %s36, 1
    %p59 = por %p57, %p58
    %p61 = scmp.ne.s32.totalorder %s44, %s60
    %p62 = scmp.eq.s32.totalorder %s36, 0
    %p63 = por %p61, %p62
    %s65 = sadd.s32 %s64, 1
    %p68 = scmp.eq.s32.totalorder %s30, 1
    %p69 = scmp.ne.s32.totalorder %s64, %s66
    %p70 = scmp.eq.s32.totalorder %s30, 0
    %p71 = por %p69, %p70
    %p72 = scmp.ne.s32.totalorder %s64, %s66
    %p73 = scmp.eq.s32.totalorder %s35, 1
    %p74 = por %p72, %p73
    %p75 = scmp.ne.s32.totalorder %s66, %s67
    %p76 = scmp.eq.s32.totalorder %s35, 0
    %p77 = por %p75, %p76
    %p78 = scmp.ne.s32.totalorder %s66, %s67
    %p79 = scmp.eq.s32.totalorder %s36, 1
    %p80 = por %p78, %p79
    %p82 = scmp.ne.s32.totalorder %s67, %s81
    %p83 = scmp.eq.s32.totalorder %s36, 0
    %p84 = por %p82, %p83
    %s86 = sadd.s32 %s85, 1
    %p89 = scmp.eq.s32.totalorder %s30, 1
    %p90 = scmp.ne.s32.totalorder %s85, %s87
    %p91 = scmp.eq.s32.totalorder %s30, 0
    %p92 = por %p90, %p91
    %p93 = scmp.ne.s32.totalorder %s85, %s87
    %p94 = scmp.eq.s32.totalorder %s35, 1
    %p95 = por %p93, %p94
    %p96 = scmp.ne.s32.totalorder %s87, %s88
    %p97 = scmp.eq.s32.totalorder %s35, 0
    %p98 = por %p96, %p97
    %p99 = scmp.ne.s32.totalorder %s87, %s88
    %p100 = scmp.eq.s32.totalorder %s36, 1
    %p101 = por %p99, %p100
    %p103 = scmp.ne.s32.totalorder %s88, %s102
    %p104 = scmp.eq.s32.totalorder %s36, 0
    %p105 = por %p103, %p104
    %s107 = sadd.s32 %s106, 1
    %p110 = scmp.eq.s32.totalorder %s30, 1
    %p111 = scmp.ne.s32.totalorder %s106, %s108
    %p112 = scmp.eq.s32.totalorder %s30, 0
    %p113 = por %p111, %p112
    %p114 = scmp.ne.s32.totalorder %s106, %s108
    %p115 = scmp.eq.s32.totalorder %s35, 1
    %p116 = por %p114, %p115
    %p117 = scmp.ne.s32.totalorder %s108, %s109
    %p118 = scmp.eq.s32.totalorder %s35, 0
    %p119 = por %p117, %p118
    %p120 = scmp.ne.s32.totalorder %s108, %s109
    %p121 = scmp.eq.s32.totalorder %s36, 1
    %p122 = por %p120, %p121
    %p124 = scmp.ne.s32.totalorder %s109, %s123
    %p125 = scmp.eq.s32.totalorder %s36, 0
    %p126 = por %p124, %p125
    %s128 = sadd.s32 %s127, 1
    %p131 = scmp.eq.s32.totalorder %s30, 1
    %p132 = scmp.ne.s32.totalorder %s127, %s129
    %p133 = scmp.eq.s32.totalorder %s30, 0
    %p134 = por %p132, %p133
    %p135 = scmp.ne.s32.totalorder %s127, %s129
    %p136 = scmp.eq.s32.totalorder %s35, 1
    %p137 = por %p135, %p136
    %p138 = scmp.ne.s32.totalorder %s129, %s130
    %p139 = scmp.eq.s32.totalorder %s35, 0
    %p140 = por %p138, %p139
    %p141 = scmp.ne.s32.totalorder %s129, %s130
    %p142 = scmp.eq.s32.totalorder %s36, 1
    %p143 = por %p141, %p142
    %p145 = scmp.ne.s32.totalorder %s130, %s144
    %p146 = scmp.eq.s32.totalorder %s36, 0
    %p147 = por %p145, %p146
    %s149 = sadd.s32 %s148, 1
    %p152 = scmp.eq.s32.totalorder %s30, 1
    %p153 = scmp.ne.s32.totalorder %s148, %s150
    %p154 = scmp.eq.s32.totalorder %s30, 0
    %p155 = por %p153, %p154
    %p156 = scmp.ne.s32.totalorder %s148, %s150
    %p157 = scmp.eq.s32.totalorder %s35, 1
    %p158 = por %p156, %p157
    %p159 = scmp.ne.s32.totalorder %s150, %s151
    %p160 = scmp.eq.s32.totalorder %s35, 0
    %p161 = por %p159, %p160
    %p162 = scmp.ne.s32.totalorder %s150, %s151
    %p163 = scmp.eq.s32.totalorder %s36, 1
    %p164 = por %p162, %p163
    %p166 = scmp.ne.s32.totalorder %s151, %s165
    %p167 = scmp.eq.s32.totalorder %s36, 0
    %p168 = por %p166, %p167
    %s170 = sadd.s32 %s169, 1
    %p173 = scmp.eq.s32.totalorder %s30, 1
    %p174 = scmp.ne.s32.totalorder %s169, %s171
    %p175 = scmp.eq.s32.totalorder %s30, 0
    %p176 = por %p174, %p175
    %p177 = scmp.ne.s32.totalorder %s169, %s171
    %p178 = scmp.eq.s32.totalorder %s35, 1
    %p179 = por %p177, %p178
    %p180 = scmp.ne.s32.totalorder %s171, %s172
    %p181 = scmp.eq.s32.totalorder %s35, 0
    %p182 = por %p180, %p181
    %p183 = scmp.ne.s32.totalorder %s171, %s172
    %p184 = scmp.eq.s32.totalorder %s36, 1
    %p185 = por %p183, %p184
    %p187 = scmp.ne.s32.totalorder %s172, %s186
    %p188 = scmp.eq.s32.totalorder %s36, 0
    %p189 = por %p187, %p188
    %s191 = sadd.s32 %s190, 1
    %p194 = scmp.eq.s32.totalorder %s30, 1
    %p195 = scmp.ne.s32.totalorder %s190, %s192
    %p196 = scmp.eq.s32.totalorder %s30, 0
    %p197 = por %p195, %p196
    %p198 = scmp.ne.s32.totalorder %s190, %s192
    %p199 = scmp.eq.s32.totalorder %s35, 1
    %p200 = por %p198, %p199
    %p201 = scmp.ne.s32.totalorder %s192, %s193
    %p202 = scmp.eq.s32.totalorder %s35, 0
    %p203 = por %p201, %p202
    %p204 = scmp.ne.s32.totalorder %s192, %s193
    %p205 = scmp.eq.s32.totalorder %s36, 1
    %p206 = por %p204, %p205
    %p208 = scmp.ne.s32.totalorder %s193, %s207
    %p209 = scmp.eq.s32.totalorder %s36, 0
    %p210 = por %p208, %p209
    %s212 = sadd.s32 %s211, 1
    %p215 = scmp.eq.s32.totalorder %s30, 1
    %p216 = scmp.ne.s32.totalorder %s211, %s213
    %p217 = scmp.eq.s32.totalorder %s30, 0
    %p218 = por %p216, %p217
    %p219 = scmp.ne.s32.totalorder %s211, %s213
    %p220 = scmp.eq.s32.totalorder %s35, 1
    %p221 = por %p219, %p220
    %p222 = scmp.ne.s32.totalorder %s213, %s214
    %p223 = scmp.eq.s32.totalorder %s35, 0
    %p224 = por %p222, %p223
    %p225 = scmp.ne.s32.totalorder %s213, %s214
    %p226 = scmp.eq.s32.totalorder %s36, 1
    %p227 = por %p225, %p226
    %p229 = scmp.ne.s32.totalorder %s214, %s228
    %p230 = scmp.eq.s32.totalorder %s36, 0
    %p231 = por %p229, %p230
    %s233 = sadd.s32 %s232, 1
    %p236 = scmp.eq.s32.totalorder %s30, 1
    %p237 = scmp.ne.s32.totalorder %s232, %s234
    %p238 = scmp.eq.s32.totalorder %s30, 0
    %p239 = por %p237, %p238
    %p240 = scmp.ne.s32.totalorder %s232, %s234
    %p241 = scmp.eq.s32.totalorder %s35, 1
    %p242 = por %p240, %p241
    %p243 = scmp.ne.s32.totalorder %s234, %s235
    %p244 = scmp.eq.s32.totalorder %s35, 0
    %p245 = por %p243, %p244
    %p246 = scmp.ne.s32.totalorder %s234, %s235
    %p247 = scmp.eq.s32.totalorder %s36, 1
    %p248 = por %p246, %p247
    %p250 = scmp.ne.s32.totalorder %s235, %s249
    %p251 = scmp.eq.s32.totalorder %s36, 0
    %p252 = por %p250, %p251
    %s254 = sadd.s32 %s253, 1
    %p257 = scmp.eq.s32.totalorder %s30, 1
    %p258 = scmp.ne.s32.totalorder %s253, %s255
    %p259 = scmp.eq.s32.totalorder %s30, 0
    %p260 = por %p258, %p259
    %p261 = scmp.ne.s32.totalorder %s253, %s255
    %p262 = scmp.eq.s32.totalorder %s35, 1
    %p263 = por %p261, %p262
    %p264 = scmp.ne.s32.totalorder %s255, %s256
    %p265 = scmp.eq.s32.totalorder %s35, 0
    %p266 = por %p264, %p265
    %p267 = scmp.ne.s32.totalorder %s255, %s256
    %p268 = scmp.eq.s32.totalorder %s36, 1
    %p269 = por %p267, %p268
    %p271 = scmp.ne.s32.totalorder %s256, %s270
    %p272 = scmp.eq.s32.totalorder %s36, 0
    %p273 = por %p271, %p272
    %s275 = sadd.s32 %s274, 1
    %p278 = scmp.eq.s32.totalorder %s30, 1
    %p279 = scmp.ne.s32.totalorder %s274, %s276
    %p280 = scmp.eq.s32.totalorder %s30, 0
    %p281 = por %p279, %p280
    %p282 = scmp.ne.s32.totalorder %s274, %s276
    %p283 = scmp.eq.s32.totalorder %s35, 1
    %p284 = por %p282, %p283
    %p285 = scmp.ne.s32.totalorder %s276, %s277
    %p286 = scmp.eq.s32.totalorder %s35, 0
    %p287 = por %p285, %p286
    %p288 = scmp.ne.s32.totalorder %s276, %s277
    %p289 = scmp.eq.s32.totalorder %s36, 1
    %p290 = por %p288, %p289
    %p292 = scmp.ne.s32.totalorder %s277, %s291
    %p293 = scmp.eq.s32.totalorder %s36, 0
    %p294 = por %p292, %p293
    %s296 = sadd.s32 %s295, 1
    %p299 = scmp.eq.s32.totalorder %s30, 1
    %p300 = scmp.ne.s32.totalorder %s295, %s297
    %p301 = scmp.eq.s32.totalorder %s30, 0
    %p302 = por %p300, %p301
    %p303 = scmp.ne.s32.totalorder %s295, %s297
    %p304 = scmp.eq.s32.totalorder %s35, 1
    %p305 = por %p303, %p304
    %p306 = scmp.ne.s32.totalorder %s297, %s298
    %p307 = scmp.eq.s32.totalorder %s35, 0
    %p308 = por %p306, %p307
    %p309 = scmp.ne.s32.totalorder %s297, %s298
    %p310 = scmp.eq.s32.totalorder %s36, 1
    %p311 = por %p309, %p310
    %p313 = scmp.ne.s32.totalorder %s298, %s312
    %p314 = scmp.eq.s32.totalorder %s36, 0
    %p315 = por %p313, %p314
    %s317 = sadd.s32 %s316, 1
    %p320 = scmp.eq.s32.totalorder %s30, 1
    %p321 = scmp.ne.s32.totalorder %s316, %s318
    %p322 = scmp.eq.s32.totalorder %s30, 0
    %p323 = por %p321, %p322
    %p324 = scmp.ne.s32.totalorder %s316, %s318
    %p325 = scmp.eq.s32.totalorder %s35, 1
    %p326 = por %p324, %p325
    %p327 = scmp.ne.s32.totalorder %s318, %s319
    %p328 = scmp.eq.s32.totalorder %s35, 0
    %p329 = por %p327, %p328
    %p330 = scmp.ne.s32.totalorder %s318, %s319
    %p331 = scmp.eq.s32.totalorder %s36, 1
    %p332 = por %p330, %p331
    %p334 = scmp.ne.s32.totalorder %s319, %s333
    %p335 = scmp.eq.s32.totalorder %s36, 0
    %p336 = por %p334, %p335
    %s338 = sadd.s32 %s337, 1
    %p341 = scmp.eq.s32.totalorder %s30, 1
    %p342 = scmp.ne.s32.totalorder %s337, %s339
    %p343 = scmp.eq.s32.totalorder %s30, 0
    %p344 = por %p342, %p343
    %p345 = scmp.ne.s32.totalorder %s337, %s339
    %p346 = scmp.eq.s32.totalorder %s35, 1
    %p347 = por %p345, %p346
    %p348 = scmp.ne.s32.totalorder %s339, %s340
    %p349 = scmp.eq.s32.totalorder %s35, 0
    %p350 = por %p348, %p349
    %p351 = scmp.ne.s32.totalorder %s339, %s340
    %p352 = scmp.eq.s32.totalorder %s36, 1
    %p353 = por %p351, %p352
    %p355 = scmp.ne.s32.totalorder %s340, %s354
    %p356 = scmp.eq.s32.totalorder %s36, 0
    %p357 = por %p355, %p356
    %s359 = sadd.s32 %s358, 1
    %p362 = scmp.eq.s32.totalorder %s30, 1
    %p363 = scmp.ne.s32.totalorder %s358, %s360
    %p364 = scmp.eq.s32.totalorder %s30, 0
    %p365 = por %p363, %p364
    %p366 = scmp.ne.s32.totalorder %s358, %s360
    %p367 = scmp.eq.s32.totalorder %s35, 1
    %p368 = por %p366, %p367
    %p369 = scmp.ne.s32.totalorder %s360, %s361
    %p370 = scmp.eq.s32.totalorder %s35, 0
    %p371 = por %p369, %p370
    %p372 = scmp.ne.s32.totalorder %s360, %s361
    %p373 = scmp.eq.s32.totalorder %s36, 1
    %p374 = por %p372, %p373
    %p376 = scmp.ne.s32.totalorder %s361, %s375
    %p377 = scmp.eq.s32.totalorder %s36, 0
    %p378 = por %p376, %p377
    %s380 = sadd.s32 %s379, 1
    %p383 = scmp.eq.s32.totalorder %s30, 1
    %p384 = scmp.ne.s32.totalorder %s379, %s381
    %p385 = scmp.eq.s32.totalorder %s30, 0
    %p386 = por %p384, %p385
    %p387 = scmp.ne.s32.totalorder %s379, %s381
    %p388 = scmp.eq.s32.totalorder %s35, 1
    %p389 = por %p387, %p388
    %p390 = scmp.ne.s32.totalorder %s381, %s382
    %p391 = scmp.eq.s32.totalorder %s35, 0
    %p392 = por %p390, %p391
    %p393 = scmp.ne.s32.totalorder %s381, %s382
    %p394 = scmp.eq.s32.totalorder %s36, 1
    %p395 = por %p393, %p394
    %p397 = scmp.ne.s32.totalorder %s382, %s396
    %p398 = scmp.eq.s32.totalorder %s36, 0
    %p399 = por %p397, %p398
    %s401 = sadd.s32 %s400, 1
    %p404 = scmp.eq.s32.totalorder %s30, 1
    %p405 = scmp.ne.s32.totalorder %s400, %s402
    %p406 = scmp.eq.s32.totalorder %s30, 0
    %p407 = por %p405, %p406
    %p408 = scmp.ne.s32.totalorder %s400, %s402
    %p409 = scmp.eq.s32.totalorder %s35, 1
    %p410 = por %p408, %p409
    %p411 = scmp.ne.s32.totalorder %s402, %s403
    %p412 = scmp.eq.s32.totalorder %s35, 0
    %p413 = por %p411, %p412
    %p414 = scmp.ne.s32.totalorder %s402, %s403
    %p415 = scmp.eq.s32.totalorder %s36, 1
    %p416 = por %p414, %p415
    %p418 = scmp.ne.s32.totalorder %s403, %s417
    %p419 = scmp.eq.s32.totalorder %s36, 0
    %p420 = por %p418, %p419
    %s422 = sadd.s32 %s421, 1
    %p425 = scmp.eq.s32.totalorder %s30, 1
    %p426 = scmp.ne.s32.totalorder %s421, %s423
    %p427 = scmp.eq.s32.totalorder %s30, 0
    %p428 = por %p426, %p427
    %p429 = scmp.ne.s32.totalorder %s421, %s423
    %p430 = scmp.eq.s32.totalorder %s35, 1
    %p431 = por %p429, %p430
    %p432 = scmp.ne.s32.totalorder %s423, %s424
    %p433 = scmp.eq.s32.totalorder %s35, 0
    %p434 = por %p432, %p433
    %p435 = scmp.ne.s32.totalorder %s423, %s424
    %p436 = scmp.eq.s32.totalorder %s36, 1
    %p437 = por %p435, %p436
    %p439 = scmp.ne.s32.totalorder %s424, %s438
    %p440 = scmp.eq.s32.totalorder %s36, 0
    %p441 = por %p439, %p440
    %s443 = sadd.s32 %s442, 1
    %p446 = scmp.eq.s32.totalorder %s30, 1
    %p447 = scmp.ne.s32.totalorder %s442, %s444
    %p448 = scmp.eq.s32.totalorder %s30, 0
    %p449 = por %p447, %p448
    %p450 = scmp.ne.s32.totalorder %s442, %s444
    %p451 = scmp.eq.s32.totalorder %s35, 1
    %p452 = por %p450, %p451
    %p453 = scmp.ne.s32.totalorder %s444, %s445
    %p454 = scmp.eq.s32.totalorder %s35, 0
    %p455 = por %p453, %p454
    %p456 = scmp.ne.s32.totalorder %s444, %s445
    %p457 = scmp.eq.s32.totalorder %s36, 1
    %p458 = por %p456, %p457
    %p460 = scmp.ne.s32.totalorder %s445, %s459
    %p461 = scmp.eq.s32.totalorder %s36, 0
    %p462 = por %p460, %p461
    %s464 = sadd.s32 %s463, 1
    %p467 = scmp.eq.s32.totalorder %s30, 1
    %p468 = scmp.ne.s32.totalorder %s463, %s465
    %p469 = scmp.eq.s32.totalorder %s30, 0
    %p470 = por %p468, %p469
    %p471 = scmp.ne.s32.totalorder %s463, %s465
    %p472 = scmp.eq.s32.totalorder %s35, 1
    %p473 = por %p471, %p472
    %p474 = scmp.ne.s32.totalorder %s465, %s466
    %p475 = scmp.eq.s32.totalorder %s35, 0
    %p476 = por %p474, %p475
    %p477 = scmp.ne.s32.totalorder %s465, %s466
    %p478 = scmp.eq.s32.totalorder %s36, 1
    %p479 = por %p477, %p478
    %p481 = scmp.ne.s32.totalorder %s466, %s480
    %p482 = scmp.eq.s32.totalorder %s36, 0
    %p483 = por %p481, %p482
    %s485 = sadd.s32 %s484, 1
    %p488 = scmp.eq.s32.totalorder %s30, 1
    %p489 = scmp.ne.s32.totalorder %s484, %s486
    %p490 = scmp.eq.s32.totalorder %s30, 0
    %p491 = por %p489, %p490
    %p492 = scmp.ne.s32.totalorder %s484, %s486
    %p493 = scmp.eq.s32.totalorder %s35, 1
    %p494 = por %p492, %p493
    %p495 = scmp.ne.s32.totalorder %s486, %s487
    %p496 = scmp.eq.s32.totalorder %s35, 0
    %p497 = por %p495, %p496
    %p498 = scmp.ne.s32.totalorder %s486, %s487
    %p499 = scmp.eq.s32.totalorder %s36, 1
    %p500 = por %p498, %p499
    %p502 = scmp.ne.s32.totalorder %s487, %s501
    %p503 = scmp.eq.s32.totalorder %s36, 0
    %p504 = por %p502, %p503
    %s505 = ssub.s32 %s30, %s37
    %p506 = scmp.eq.s32.totalorder %s505, 0
    %s508 = sadd.s32 %s507, 1
    %s509 = scalar_select %p506, %s507, %s508
    %p512 = pneg %p506
    %p513 = scmp.eq.s32.totalorder %s30, 1
    %p514 = por %p512, %p513
    %p515 = scmp.ne.s32.totalorder %s507, %s510
    %p516 = scmp.eq.s32.totalorder %s30, 0
    %p517 = por %p515, %p516
    %p518 = scmp.ne.s32.totalorder %s507, %s510
    %p519 = scmp.eq.s32.totalorder %s35, 1
    %p520 = por %p518, %p519
    %p521 = scmp.ne.s32.totalorder %s510, %s511
    %p522 = scmp.eq.s32.totalorder %s35, 0
    %p523 = por %p521, %p522
    %p524 = scmp.ne.s32.totalorder %s510, %s511
    %p525 = scmp.eq.s32.totalorder %s36, 1
    %p526 = por %p524, %p525
    %p528 = scmp.ne.s32.totalorder %s511, %s527
    %p529 = scmp.eq.s32.totalorder %s36, 0
    %p530 = por %p528, %p529
    %s531 = ssub.s32 %s30, %s37
    %p532 = scmp.eq.s32.totalorder %s531, 0
    %s534 = sadd.s32 %s533, 1
    %s535 = scalar_select %p532, %s533, %s534
    %p538 = pneg %p532
    %p539 = scmp.eq.s32.totalorder %s30, 1
    %p540 = por %p538, %p539
    %p541 = scmp.ne.s32.totalorder %s533, %s536
    %p542 = scmp.eq.s32.totalorder %s30, 0
    %p543 = por %p541, %p542
    %p544 = scmp.ne.s32.totalorder %s533, %s536
    %p545 = scmp.eq.s32.totalorder %s35, 1
    %p546 = por %p544, %p545
    %p547 = scmp.ne.s32.totalorder %s536, %s537
    %p548 = scmp.eq.s32.totalorder %s35, 0
    %p549 = por %p547, %p548
    %p550 = scmp.ne.s32.totalorder %s536, %s537
    %p551 = scmp.eq.s32.totalorder %s36, 1
    %p552 = por %p550, %p551
    %p554 = scmp.ne.s32.totalorder %s537, %s553
    %p555 = scmp.eq.s32.totalorder %s36, 0
    %p556 = por %p554, %p555
    %p557 = scmp.le.s32.totalorder 1, %s30
    %p558 = scmp.lt.s32.totalorder %s30, 3
    %p559 = pnand %p557, %p558
    %p560 = pneg %p559
    // Predicated region
    $region9: #{unet_model_forward.1} parent=5 // pred_check
      _
    $region10: #{unet_model_forward.1} parent=5 // pred_check_branch
      %562 = sbr.rel (%p559) target = $region12
    $region11: #{unet_model_forward.1} parent=5 // pred_region
      %s563 = ssub.s32 %s30, 1
      // Predicated region
      $region13: #{unet_model_forward.1} parent=11 // pred_check
        %p564 = pneg %p77
      $region14: #{unet_model_forward.1} parent=11 // pred_check_branch
        %566 = sbr.rel (%p564) target = $region16
      $region15: #{unet_model_forward.1} parent=11 // pred_region
        _
      $region16: #{unet_model_forward.1} parent=11 // pred_fallthru
        _
      // Predicated region
      $region17: #{unet_model_forward.1} parent=11 // pred_check
        %p567 = pneg %p98
      $region18: #{unet_model_forward.1} parent=11 // pred_check_branch
        %569 = sbr.rel (%p567) target = $region20
      $region19: #{unet_model_forward.1} parent=11 // pred_region
        _
      $region20: #{unet_model_forward.1} parent=11 // pred_fallthru
        _
      // Predicated region
      $region21: #{unet_model_forward.1} parent=11 // pred_check
        %p570 = pneg %p119
      $region22: #{unet_model_forward.1} parent=11 // pred_check_branch
        %572 = sbr.rel (%p570) target = $region24
      $region23: #{unet_model_forward.1} parent=11 // pred_region
        _
      $region24: #{unet_model_forward.1} parent=11 // pred_fallthru
        _
      // Predicated region
      $region25: #{unet_model_forward.1} parent=11 // pred_check
        %p573 = pneg %p140
      $region26: #{unet_model_forward.1} parent=11 // pred_check_branch
        %575 = sbr.rel (%p573) target = $region28
      $region27: #{unet_model_forward.1} parent=11 // pred_region
        _
      $region28: #{unet_model_forward.1} parent=11 // pred_fallthru
        _
      // Predicated region
      $region29: #{unet_model_forward.1} parent=11 // pred_check
        %p576 = pneg %p161
      $region30: #{unet_model_forward.1} parent=11 // pred_check_branch
        %578 = sbr.rel (%p576) target = $region32
      $region31: #{unet_model_forward.1} parent=11 // pred_region
        _
      $region32: #{unet_model_forward.1} parent=11 // pred_fallthru
        _
      // Predicated region
      $region33: #{unet_model_forward.1} parent=11 // pred_check
        %p579 = pneg %p182
      $region34: #{unet_model_forward.1} parent=11 // pred_check_branch
        %581 = sbr.rel (%p579) target = $region36
      $region35: #{unet_model_forward.1} parent=11 // pred_region
        _
      $region36: #{unet_model_forward.1} parent=11 // pred_fallthru
        _
      // Predicated region
      $region37: #{unet_model_forward.1} parent=11 // pred_check
        %p582 = pneg %p203
      $region38: #{unet_model_forward.1} parent=11 // pred_check_branch
        %584 = sbr.rel (%p582) target = $region40
      $region39: #{unet_model_forward.1} parent=11 // pred_region
        _
      $region40: #{unet_model_forward.1} parent=11 // pred_fallthru
        _
      // Predicated region
      $region41: #{unet_model_forward.1} parent=11 // pred_check
        %p585 = pneg %p224
      $region42: #{unet_model_forward.1} parent=11 // pred_check_branch
        %587 = sbr.rel (%p585) target = $region44
      $region43: #{unet_model_forward.1} parent=11 // pred_region
        _
      $region44: #{unet_model_forward.1} parent=11 // pred_fallthru
        _
      // Predicated region
      $region45: #{unet_model_forward.1} parent=11 // pred_check
        %p588 = pneg %p245
      $region46: #{unet_model_forward.1} parent=11 // pred_check_branch
        %590 = sbr.rel (%p588) target = $region48
      $region47: #{unet_model_forward.1} parent=11 // pred_region
        _
      $region48: #{unet_model_forward.1} parent=11 // pred_fallthru
        _
      // Predicated region
      $region49: #{unet_model_forward.1} parent=11 // pred_check
        %p591 = pneg %p266
      $region50: #{unet_model_forward.1} parent=11 // pred_check_branch
        %593 = sbr.rel (%p591) target = $region52
      $region51: #{unet_model_forward.1} parent=11 // pred_region
        _
      $region52: #{unet_model_forward.1} parent=11 // pred_fallthru
        _
      // Predicated region
      $region53: #{unet_model_forward.1} parent=11 // pred_check
        %p594 = pneg %p287
      $region54: #{unet_model_forward.1} parent=11 // pred_check_branch
        %596 = sbr.rel (%p594) target = $region56
      $region55: #{unet_model_forward.1} parent=11 // pred_region
        _
      $region56: #{unet_model_forward.1} parent=11 // pred_fallthru
        _
      // Predicated region
      $region57: #{unet_model_forward.1} parent=11 // pred_check
        %p597 = pneg %p308
      $region58: #{unet_model_forward.1} parent=11 // pred_check_branch
        %599 = sbr.rel (%p597) target = $region60
      $region59: #{unet_model_forward.1} parent=11 // pred_region
        _
      $region60: #{unet_model_forward.1} parent=11 // pred_fallthru
        _
      // Predicated region
      $region61: #{unet_model_forward.1} parent=11 // pred_check
        %p600 = pneg %p329
      $region62: #{unet_model_forward.1} parent=11 // pred_check_branch
        %602 = sbr.rel (%p600) target = $region64
      $region63: #{unet_model_forward.1} parent=11 // pred_region
        _
      $region64: #{unet_model_forward.1} parent=11 // pred_fallthru
        _
      // Predicated region
      $region65: #{unet_model_forward.1} parent=11 // pred_check
        %p603 = pneg %p350
      $region66: #{unet_model_forward.1} parent=11 // pred_check_branch
        %605 = sbr.rel (%p603) target = $region68
      $region67: #{unet_model_forward.1} parent=11 // pred_region
        _
      $region68: #{unet_model_forward.1} parent=11 // pred_fallthru
        _
      // Predicated region
      $region69: #{unet_model_forward.1} parent=11 // pred_check
        %p606 = pneg %p371
      $region70: #{unet_model_forward.1} parent=11 // pred_check_branch
        %608 = sbr.rel (%p606) target = $region72
      $region71: #{unet_model_forward.1} parent=11 // pred_region
        _
      $region72: #{unet_model_forward.1} parent=11 // pred_fallthru
        _
      // Predicated region
      $region73: #{unet_model_forward.1} parent=11 // pred_check
        %p609 = pneg %p392
      $region74: #{unet_model_forward.1} parent=11 // pred_check_branch
        %611 = sbr.rel (%p609) target = $region76
      $region75: #{unet_model_forward.1} parent=11 // pred_region
        _
      $region76: #{unet_model_forward.1} parent=11 // pred_fallthru
        _
      // Predicated region
      $region77: #{unet_model_forward.1} parent=11 // pred_check
        %p612 = pneg %p413
      $region78: #{unet_model_forward.1} parent=11 // pred_check_branch
        %614 = sbr.rel (%p612) target = $region80
      $region79: #{unet_model_forward.1} parent=11 // pred_region
        _
      $region80: #{unet_model_forward.1} parent=11 // pred_fallthru
        _
      // Predicated region
      $region81: #{unet_model_forward.1} parent=11 // pred_check
        %p615 = pneg %p434
      $region82: #{unet_model_forward.1} parent=11 // pred_check_branch
        %617 = sbr.rel (%p615) target = $region84
      $region83: #{unet_model_forward.1} parent=11 // pred_region
        _
      $region84: #{unet_model_forward.1} parent=11 // pred_fallthru
        _
      // Predicated region
      $region85: #{unet_model_forward.1} parent=11 // pred_check
        %p618 = pneg %p455
      $region86: #{unet_model_forward.1} parent=11 // pred_check_branch
        %620 = sbr.rel (%p618) target = $region88
      $region87: #{unet_model_forward.1} parent=11 // pred_region
        _
      $region88: #{unet_model_forward.1} parent=11 // pred_fallthru
        _
      // Predicated region
      $region89: #{unet_model_forward.1} parent=11 // pred_check
        %p621 = pneg %p476
      $region90: #{unet_model_forward.1} parent=11 // pred_check_branch
        %623 = sbr.rel (%p621) target = $region92
      $region91: #{unet_model_forward.1} parent=11 // pred_region
        _
      $region92: #{unet_model_forward.1} parent=11 // pred_fallthru
        _
      // Predicated region
      $region93: #{unet_model_forward.1} parent=11 // pred_check
        %p624 = pneg %p497
      $region94: #{unet_model_forward.1} parent=11 // pred_check_branch
        %626 = sbr.rel (%p624) target = $region96
      $region95: #{unet_model_forward.1} parent=11 // pred_region
        _
      $region96: #{unet_model_forward.1} parent=11 // pred_fallthru
        _
    $region12: #{unet_model_forward.1} parent=5 // pred_fallthru
      _
    %p627 = scmp.lt.s32.totalorder %s30, 2
    // Predicated region
    $region97: #{unet_model_forward.1} parent=5 // pred_check
      %p628 = pneg %p627
    $region98: #{unet_model_forward.1} parent=5 // pred_check_branch
      %630 = sbr.rel (%p628) target = $region100
    $region99: #{unet_model_forward.1} parent=5 // pred_region
      // Predicated region
      $region101: #{unet_model_forward.1} parent=99 // pred_check
        %p631 = pneg %p50
      $region102: #{unet_model_forward.1} parent=99 // pred_check_branch
        %633 = sbr.rel (%p631) target = $region104
      $region103: #{unet_model_forward.1} parent=99 // pred_region
        %p634 = scmp.lt.s32.totalorder %s30, 1
        %s635 = scalar_select %p634, %s30, 1
        %s636 = smul.addr %s635, 180
        %s637 = smul.addr %s636, 8
        %s638 = scalar_lea.vmem %s0, %s637
      $region104: #{unet_model_forward.1} parent=99 // pred_fallthru
        _
    $region100: #{unet_model_forward.1} parent=5 // pred_fallthru
      _
    %p639 = scmp.le.s32.totalorder 1, %s30
    %p640 = scmp.lt.s32.totalorder %s30, 3
    %p641 = pnand %p639, %p640
    %p642 = pneg %p641
    // Predicated region
    $region105: #{unet_model_forward.1} parent=5 // pred_check
      _
    $region106: #{unet_model_forward.1} parent=5 // pred_check_branch
      %644 = sbr.rel (%p641) target = $region108
    $region107: #{unet_model_forward.1} parent=5 // pred_region
      %s645 = ssub.s32 %s30, 1
      %p646 = scmp.lt.s32.totalorder %s35, 1
      %s647 = scalar_select %p646, %s35, 1
      %s648 = smul.addr %s647, 180
      %s649 = smul.addr %s648, 8
      %s650 = scalar_lea.vmem %s0, %s649
      %p651 = pneg %p56
      %p652 = pneg %p53
      %p653 = pneg %p77
      %p654 = pneg %p74
      %p655 = pneg %p98
      %p656 = pneg %p95
      %p657 = pneg %p119
      %p658 = pneg %p116
      %p659 = pneg %p140
      %p660 = pneg %p137
      %p661 = pneg %p161
      %p662 = pneg %p158
      %p663 = pneg %p182
      %p664 = pneg %p179
      %p665 = pneg %p203
      %p666 = pneg %p200
      %p667 = pneg %p224
      %p668 = pneg %p221
      %p669 = pneg %p245
      %p670 = pneg %p242
      %p671 = pneg %p266
      %p672 = pneg %p263
      %p673 = pneg %p287
      %p674 = pneg %p284
      %p675 = pneg %p308
      %p676 = pneg %p305
      %p677 = pneg %p329
      %p678 = pneg %p326
      %p679 = pneg %p350
      %p680 = pneg %p347
      %p681 = pneg %p371
      %p682 = pneg %p368
      %p683 = pneg %p392
      %p684 = pneg %p389
      %p685 = pneg %p413
      %p686 = pneg %p410
      %p687 = pneg %p434
      %p688 = pneg %p431
      %p689 = pneg %p455
      %p690 = pneg %p452
      %p691 = pneg %p476
      %p692 = pneg %p473
      %p693 = pneg %p497
      %p694 = pneg %p494
      %p695 = pneg %p523
      %p696 = pneg %p520
      %p697 = scmp.lt.s32.totalorder %s35, 1
      %s698 = scalar_select %p697, %s35, 1
      %s699 = smul.addr %s698, 60
      %s700 = smul.addr %s699, 8
      %s701 = scalar_lea.vmem %s22, %s700
      %p702 = pneg %p549
      %p703 = pneg %p546
      %p704 = scmp.lt.s32.totalorder %s35, 1
      %s705 = scalar_select %p704, %s35, 1
      %s706 = smul.addr %s705, 60
      %s707 = smul.addr %s706, 8
      %s708 = scalar_lea.vmem %s23, %s707
      %p709 = scmp.lt.s32.totalorder %s35, 1
      %s710 = scalar_select %p709, %s35, 1
      %s711 = smul.addr %s710, 180
      %s712 = smul.addr %s711, 8
      %s713 = scalar_lea.vmem %s0, %s712
      %p714 = scmp.lt.s32.totalorder %s35, 1
      %s715 = scalar_select %p714, %s35, 1
      %s716 = smul.addr %s715, 60
      %s717 = smul.addr %s716, 8
      %s718 = scalar_lea.vmem %s22, %s717
      %p719 = scmp.lt.s32.totalorder %s35, 1
      %s720 = scalar_select %p719, %s35, 1
      %s721 = smul.addr %s720, 60
      %s722 = smul.addr %s721, 8
      %s723 = scalar_lea.vmem %s23, %s722
      %v724 = vld [vmem:[%s1] sm:$0xff]
      %v725 = vld [vmem:[%s1 + $0x8] sm:$0x1]
      %v726 = vld [vmem:[%s2] sm:$0x1]
      loop: start=0, step=1, limit=34
      $region109: #{unet_model_forward.1} parent=107 // loop_pre_header
        _
      $region110: #{unet_model_forward.1} parent=107 // loop_header
        %s728 = sphi 0, %s732
        %p729 = scmp.ge.s32.totalorder %s728, 34
      $region111: #{unet_model_forward.1} parent=107 // loop_header_branch
        %731 = sbr.rel (%p729) target = $region115
      $region112: #{unet_model_forward.1} parent=107 // loop_body
        %s733 = smul.u32 %s728, 40
        %s734 = scalar_lea.vmem %s713, %s733
        %v735 = vld [vmem:[%s734] sm:$0xff]
        %v736 = vld [vmem:[%s734 + $0x8] sm:$0xff]
        %v737 = vld [vmem:[%s734 + $0x10] sm:$0xff]
        %v738 = vld [vmem:[%s734 + $0x18] sm:$0xff]
        %v739 = vld [vmem:[%s734 + $0x20] sm:$0xf]
        %s740 = sadd.s32 %s728, 1
        %s741 = smul.u32 %s740, 40
        %s742 = scalar_lea.vmem %s713, %s741
        %v743 = vld [vmem:[%s742] sm:$0xff]
        %v744 = vld [vmem:[%s742 + $0x8] sm:$0xff]
        %v745 = vld [vmem:[%s742 + $0x10] sm:$0xff]
        %v746 = vld [vmem:[%s742 + $0x18] sm:$0xff]
        %v747 = vld [vmem:[%s742 + $0x20] sm:$0xf]
        %s748 = sadd.s32 %s728, 2
        %s749 = smul.u32 %s748, 40
        %s750 = scalar_lea.vmem %s713, %s749
        %v751 = vld [vmem:[%s750] sm:$0xff]
        %v752 = vld [vmem:[%s750 + $0x8] sm:$0xff]
        %v753 = vld [vmem:[%s750 + $0x10] sm:$0xff]
        %v754 = vld [vmem:[%s750 + $0x18] sm:$0xff]
        %v755 = vld [vmem:[%s750 + $0x20] sm:$0xf]
        %757 = vset.pattern.permute.xlu0 0
        %758 = vperm.xlu0 %757, %v735
        %v759 = vpop.permute.xlu0 %758
        %762 = vset.pattern.permute.xlu0 0
        %763 = vperm.xlu0 %762, %v736
        %v764 = vpop.permute.xlu0 %763
        %767 = vset.pattern.permute.xlu0 0
        %768 = vperm.xlu0 %767, %v737
        %v769 = vpop.permute.xlu0 %768
        %772 = vset.pattern.permute.xlu0 0
        %773 = vperm.xlu0 %772, %v738
        %v774 = vpop.permute.xlu0 %773
        %777 = vset.pattern.permute.xlu0 0
        %778 = vperm.xlu0 %777, %v739
        %v779 = vpop.permute.xlu0 %778
        %v781 = vlaneseq
        %v782 = vshrl.u32 %v781, 7
        %v783 = vsub.s32 0, %v782
        %v784 = vrot.slane %v724, %v783
        %v785 = vmul.f32 %v759, %v784
        %v786 = vmul.f32 %v764, %v784
        %v787 = vmul.f32 %v769, %v784
        %v788 = vmul.f32 %v774, %v784
        %v789 = vmul.f32 %v779, %v784
        %v790 = vadd.f32 %v785, 0.0
        %v791 = vadd.f32 %v786, 0.0
        %v792 = vadd.f32 %v787, 0.0
        %v793 = vadd.f32 %v788, 0.0
        %v794 = vadd.f32 %v789, 0.0
        %v795 = vlaneseq
        %v796 = vshrl.u32 %v795, 7
        %v797 = vsub.s32 1, %v796
        %v798 = vrot.slane %v724, %v797
        %v799 = vmul.f32 %v759, %v798
        %v800 = vmul.f32 %v764, %v798
        %v801 = vmul.f32 %v769, %v798
        %v802 = vmul.f32 %v774, %v798
        %v803 = vmul.f32 %v779, %v798
        %vm809 = vcmask 1046528
        %v810 = vrot.slane %v799, 1
        %v811 = vrot.slane %v800, 1
        %v812 = vsel %vm809, %v810, %v811
        %v813 = vrot.slane %v801, 1
        %v814 = vsel %vm809, %v811, %v813
        %v815 = vrot.slane %v802, 1
        %v816 = vsel %vm809, %v813, %v815
        %v817 = vrot.slane %v803, 1
        %v818 = vsel %vm809, %v815, %v817
        %v824 = vadd.f32 %v790, %v812
        %v825 = vadd.f32 %v791, %v814
        %v826 = vadd.f32 %v792, %v816
        %v827 = vadd.f32 %v793, %v818
        %v828 = vadd.f32 %v794, %v817
        %v829 = vlaneseq
        %v830 = vshrl.u32 %v829, 7
        %v831 = vsub.s32 2, %v830
        %v832 = vrot.slane %v724, %v831
        %v833 = vmul.f32 %v759, %v832
        %v834 = vmul.f32 %v764, %v832
        %v835 = vmul.f32 %v769, %v832
        %v836 = vmul.f32 %v774, %v832
        %v837 = vmul.f32 %v779, %v832
        %vm843 = vcmask 1045504
        %v844 = vrot.slane %v833, 2
        %v845 = vrot.slane %v834, 2
        %v846 = vsel %vm843, %v844, %v845
        %v847 = vrot.slane %v835, 2
        %v848 = vsel %vm843, %v845, %v847
        %v849 = vrot.slane %v836, 2
        %v850 = vsel %vm843, %v847, %v849
        %v851 = vrot.slane %v837, 2
        %v852 = vsel %vm843, %v849, %v851
        %v858 = vadd.f32 %v824, %v846
        %v859 = vadd.f32 %v825, %v848
        %v860 = vadd.f32 %v826, %v850
        %v861 = vadd.f32 %v827, %v852
        %v862 = vadd.f32 %v828, %v851
        %864 = vset.pattern.permute.xlu0 0
        %865 = vperm.xlu0 %864, %v743
        %v866 = vpop.permute.xlu0 %865
        %869 = vset.pattern.permute.xlu0 0
        %870 = vperm.xlu0 %869, %v744
        %v871 = vpop.permute.xlu0 %870
        %874 = vset.pattern.permute.xlu0 0
        %875 = vperm.xlu0 %874, %v745
        %v876 = vpop.permute.xlu0 %875
        %879 = vset.pattern.permute.xlu0 0
        %880 = vperm.xlu0 %879, %v746
        %v881 = vpop.permute.xlu0 %880
        %884 = vset.pattern.permute.xlu0 0
        %885 = vperm.xlu0 %884, %v747
        %v886 = vpop.permute.xlu0 %885
        %v888 = vlaneseq
        %v889 = vshrl.u32 %v888, 7
        %v890 = vsub.s32 3, %v889
        %v891 = vrot.slane %v724, %v890
        %v892 = vmul.f32 %v866, %v891
        %v893 = vmul.f32 %v871, %v891
        %v894 = vmul.f32 %v876, %v891
        %v895 = vmul.f32 %v881, %v891
        %v896 = vmul.f32 %v886, %v891
        %v897 = vadd.f32 %v858, %v892
        %v898 = vadd.f32 %v859, %v893
        %v899 = vadd.f32 %v860, %v894
        %v900 = vadd.f32 %v861, %v895
        %v901 = vadd.f32 %v862, %v896
        %v902 = vlaneseq
        %v903 = vshrl.u32 %v902, 7
        %v904 = vsub.s32 4, %v903
        %v905 = vrot.slane %v724, %v904
        %v906 = vmul.f32 %v866, %v905
        %v907 = vmul.f32 %v871, %v905
        %v908 = vmul.f32 %v876, %v905
        %v909 = vmul.f32 %v881, %v905
        %v910 = vmul.f32 %v886, %v905
        %v916 = vrot.slane %v906, 1
        %v917 = vrot.slane %v907, 1
        %v918 = vsel %vm809, %v916, %v917
        %v919 = vrot.slane %v908, 1
        %v920 = vsel %vm809, %v917, %v919
        %v921 = vrot.slane %v909, 1
        %v922 = vsel %vm809, %v919, %v921
        %v923 = vrot.slane %v910, 1
        %v924 = vsel %vm809, %v921, %v923
        %v930 = vadd.f32 %v897, %v918
        %v931 = vadd.f32 %v898, %v920
        %v932 = vadd.f32 %v899, %v922
        %v933 = vadd.f32 %v900, %v924
        %v934 = vadd.f32 %v901, %v923
        %v935 = vlaneseq
        %v936 = vshrl.u32 %v935, 7
        %v937 = vsub.s32 5, %v936
        %v938 = vrot.slane %v724, %v937
        %v939 = vmul.f32 %v866, %v938
        %v940 = vmul.f32 %v871, %v938
        %v941 = vmul.f32 %v876, %v938
        %v942 = vmul.f32 %v881, %v938
        %v943 = vmul.f32 %v886, %v938
        %v949 = vrot.slane %v939, 2
        %v950 = vrot.slane %v940, 2
        %v951 = vsel %vm843, %v949, %v950
        %v952 = vrot.slane %v941, 2
        %v953 = vsel %vm843, %v950, %v952
        %v954 = vrot.slane %v942, 2
        %v955 = vsel %vm843, %v952, %v954
        %v956 = vrot.slane %v943, 2
        %v957 = vsel %vm843, %v954, %v956
        %v963 = vadd.f32 %v930, %v951
        %v964 = vadd.f32 %v931, %v953
        %v965 = vadd.f32 %v932, %v955
        %v966 = vadd.f32 %v933, %v957
        %v967 = vadd.f32 %v934, %v956
        %969 = vset.pattern.permute.xlu0 0
        %970 = vperm.xlu0 %969, %v751
        %v971 = vpop.permute.xlu0 %970
        %974 = vset.pattern.permute.xlu0 0
        %975 = vperm.xlu0 %974, %v752
        %v976 = vpop.permute.xlu0 %975
        %979 = vset.pattern.permute.xlu0 0
        %980 = vperm.xlu0 %979, %v753
        %v981 = vpop.permute.xlu0 %980
        %984 = vset.pattern.permute.xlu0 0
        %985 = vperm.xlu0 %984, %v754
        %v986 = vpop.permute.xlu0 %985
        %989 = vset.pattern.permute.xlu0 0
        %990 = vperm.xlu0 %989, %v755
        %v991 = vpop.permute.xlu0 %990
        %v993 = vlaneseq
        %v994 = vshrl.u32 %v993, 7
        %v995 = vsub.s32 6, %v994
        %v996 = vrot.slane %v724, %v995
        %v997 = vmul.f32 %v971, %v996
        %v998 = vmul.f32 %v976, %v996
        %v999 = vmul.f32 %v981, %v996
        %v1000 = vmul.f32 %v986, %v996
        %v1001 = vmul.f32 %v991, %v996
        %v1002 = vadd.f32 %v963, %v997
        %v1003 = vadd.f32 %v964, %v998
        %v1004 = vadd.f32 %v965, %v999
        %v1005 = vadd.f32 %v966, %v1000
        %v1006 = vadd.f32 %v967, %v1001
        %v1007 = vlaneseq
        %v1008 = vshrl.u32 %v1007, 7
        %v1009 = vsub.s32 7, %v1008
        %v1010 = vrot.slane %v724, %v1009
        %v1011 = vmul.f32 %v971, %v1010
        %v1012 = vmul.f32 %v976, %v1010
        %v1013 = vmul.f32 %v981, %v1010
        %v1014 = vmul.f32 %v986, %v1010
        %v1015 = vmul.f32 %v991, %v1010
        %v1021 = vrot.slane %v1011, 1
        %v1022 = vrot.slane %v1012, 1
        %v1023 = vsel %vm809, %v1021, %v1022
        %v1024 = vrot.slane %v1013, 1
        %v1025 = vsel %vm809, %v1022, %v1024
        %v1026 = vrot.slane %v1014, 1
        %v1027 = vsel %vm809, %v1024, %v1026
        %v1028 = vrot.slane %v1015, 1
        %v1029 = vsel %vm809, %v1026, %v1028
        %v1035 = vadd.f32 %v1002, %v1023
        %v1036 = vadd.f32 %v1003, %v1025
        %v1037 = vadd.f32 %v1004, %v1027
        %v1038 = vadd.f32 %v1005, %v1029
        %v1039 = vadd.f32 %v1006, %v1028
        %v1040 = vlaneseq
        %v1041 = vshrl.u32 %v1040, 7
        %v1042 = vsub.s32 0, %v1041
        %v1043 = vrot.slane %v725, %v1042
        %v1044 = vmul.f32 %v971, %v1043
        %v1045 = vmul.f32 %v976, %v1043
        %v1046 = vmul.f32 %v981, %v1043
        %v1047 = vmul.f32 %v986, %v1043
        %v1048 = vmul.f32 %v991, %v1043
        %v1054 = vrot.slane %v1044, 2
        %v1055 = vrot.slane %v1045, 2
        %v1056 = vsel %vm843, %v1054, %v1055
        %v1057 = vrot.slane %v1046, 2
        %v1058 = vsel %vm843, %v1055, %v1057
        %v1059 = vrot.slane %v1047, 2
        %v1060 = vsel %vm843, %v1057, %v1059
        %v1061 = vrot.slane %v1048, 2
        %v1062 = vsel %vm843, %v1059, %v1061
        %v1068 = vadd.f32 %v1035, %v1056
        %v1069 = vadd.f32 %v1036, %v1058
        %v1070 = vadd.f32 %v1037, %v1060
        %v1071 = vadd.f32 %v1038, %v1062
        %v1072 = vadd.f32 %v1039, %v1061
        %v1074 = vlaneseq
        %v1075 = vshrl.u32 %v1074, 7
        %v1076 = vsub.s32 0, %v1075
        %v1077 = vrot.slane %v726, %v1076
        %v1079 = vadd.f32 %v1068, %v1077
        %v1080 = vadd.f32 %v1069, %v1077
        %v1081 = vadd.f32 %v1070, %v1077
        %v1082 = vadd.f32 %v1071, %v1077
        %v1083 = vadd.f32 %v1072, %v1077
        %v1084 = vmax.f32 %v1079, 0.0
        %v1085 = vmax.f32 %v1080, 0.0
        %v1086 = vmax.f32 %v1081, 0.0
        %v1087 = vmax.f32 %v1082, 0.0
        %v1088 = vmax.f32 %v1083, 0.0
        %s1089 = scalar_lea.vmem [#allocation2], %s733
        %vm1090 = vcmask 64512
        %1091 = vst.msk [vmem:[%s1089] sm:$0xff] %vm1090, %v1084
        %1092 = vst.msk [vmem:[%s1089 + $0x8] sm:$0xff] %vm1090, %v1085
        %1093 = vst.msk [vmem:[%s1089 + $0x10] sm:$0xff] %vm1090, %v1086
        %1094 = vst.msk [vmem:[%s1089 + $0x18] sm:$0xff] %vm1090, %v1087
        %vm1095 = vcmask 58368
        %1096 = vst.msk [vmem:[%s1089 + $0x20] sm:$0x3] %vm1095, %v1088
      $region113: #{unet_model_forward.1} parent=107 // loop_footer
        %s732 = sadd.s32 1, %s728
      $region114: #{unet_model_forward.1} parent=107 // loop_footer_branch
        %727 = sbr.rel target = $region110
      $region115: #{unet_model_forward.1} parent=107 // loop_exit
        _
      %v1097 = vld [vmem:[%s3] sm:$0xff]
      %v1098 = vld [vmem:[%s3 + $0x8] sm:$0xff]
      %v1099 = vld [vmem:[%s3 + $0x10] sm:$0xff]
      %v1100 = vld [vmem:[%s3 + $0x18] sm:$0xff]
      %v1101 = vld [vmem:[%s3 + $0x20] sm:$0xff]
      %v1102 = vld [vmem:[%s3 + $0x28] sm:$0xff]
      %v1103 = vld [vmem:[%s3 + $0x30] sm:$0xff]
      %v1104 = vld [vmem:[%s3 + $0x38] sm:$0xff]
      %v1105 = vld [vmem:[%s3 + $0x40] sm:$0xff]
      %v1106 = vld [vmem:[%s4] sm:$0x1]
      loop: start=0, step=1, limit=32
      $region116: #{unet_model_forward.1} parent=107 // loop_pre_header
        _
      $region117: #{unet_model_forward.1} parent=107 // loop_header
        %s1108 = sphi 0, %s1112
        %p1109 = scmp.ge.s32.totalorder %s1108, 32
      $region118: #{unet_model_forward.1} parent=107 // loop_header_branch
        %1111 = sbr.rel (%p1109) target = $region122
      $region119: #{unet_model_forward.1} parent=107 // loop_body
        %s1113 = smul.u32 %s1108, 40
        %s1114 = scalar_lea.vmem [#allocation2], %s1113
        %v1115 = vld [vmem:[%s1114] sm:$0xff]
        %v1116 = vld [vmem:[%s1114 + $0x8] sm:$0xff]
        %v1117 = vld [vmem:[%s1114 + $0x10] sm:$0xff]
        %v1118 = vld [vmem:[%s1114 + $0x18] sm:$0xff]
        %v1119 = vld [vmem:[%s1114 + $0x20] sm:$0x3]
        %s1120 = sadd.s32 %s1108, 1
        %s1121 = smul.u32 %s1120, 40
        %s1122 = scalar_lea.vmem [#allocation2], %s1121
        %v1123 = vld [vmem:[%s1122] sm:$0xff]
        %v1124 = vld [vmem:[%s1122 + $0x8] sm:$0xff]
        %v1125 = vld [vmem:[%s1122 + $0x10] sm:$0xff]
        %v1126 = vld [vmem:[%s1122 + $0x18] sm:$0xff]
        %v1127 = vld [vmem:[%s1122 + $0x20] sm:$0x3]
        %s1128 = sadd.s32 %s1108, 2
        %s1129 = smul.u32 %s1128, 40
        %s1130 = scalar_lea.vmem [#allocation2], %s1129
        %v1131 = vld [vmem:[%s1130] sm:$0xff]
        %v1132 = vld [vmem:[%s1130 + $0x8] sm:$0xff]
        %v1133 = vld [vmem:[%s1130 + $0x10] sm:$0xff]
        %v1134 = vld [vmem:[%s1130 + $0x18] sm:$0xff]
        %v1135 = vld [vmem:[%s1130 + $0x20] sm:$0x3]
        %vm1141 = vcmask 1046528
        %v1142 = vrot.slane %v1115, 1
        %v1143 = vrot.slane %v1116, 1
        %v1144 = vsel %vm1141, %v1142, %v1143
        %v1145 = vrot.slane %v1117, 1
        %v1146 = vsel %vm1141, %v1143, %v1145
        %v1147 = vrot.slane %v1118, 1
        %v1148 = vsel %vm1141, %v1145, %v1147
        %v1149 = vrot.slane %v1119, 1
        %v1150 = vsel %vm1141, %v1147, %v1149
        %1151 = vrot.lane.b32.xlu0 %v1144, 8
        %v1152 = vpop.permute.xlu0 %1151
        %1153 = vrot.lane.b32.xlu0 %v1146, 8
        %v1154 = vpop.permute.xlu0 %1153
        %1155 = vrot.lane.b32.xlu0 %v1148, 8
        %v1156 = vpop.permute.xlu0 %1155
        %1157 = vrot.lane.b32.xlu0 %v1150, 8
        %v1158 = vpop.permute.xlu0 %1157
        %vm1163 = vcmask 1045504
        %v1164 = vrot.slane %v1115, 2
        %v1165 = vrot.slane %v1116, 2
        %v1166 = vsel %vm1163, %v1164, %v1165
        %v1167 = vrot.slane %v1117, 2
        %v1168 = vsel %vm1163, %v1165, %v1167
        %v1169 = vrot.slane %v1118, 2
        %v1170 = vsel %vm1163, %v1167, %v1169
        %v1171 = vrot.slane %v1119, 2
        %v1172 = vsel %vm1163, %v1169, %v1171
        %1173 = vrot.lane.b32.xlu0 %v1166, 16
        %v1174 = vpop.permute.xlu0 %1173
        %1175 = vrot.lane.b32.xlu0 %v1168, 16
        %v1176 = vpop.permute.xlu0 %1175
        %1177 = vrot.lane.b32.xlu0 %v1170, 16
        %v1178 = vpop.permute.xlu0 %1177
        %1179 = vrot.lane.b32.xlu0 %v1172, 16
        %v1180 = vpop.permute.xlu0 %1179
        %1189 = vrot.lane.b32.xlu0 %v1123, 24
        %v1190 = vpop.permute.xlu0 %1189
        %1191 = vrot.lane.b32.xlu0 %v1124, 24
        %v1192 = vpop.permute.xlu0 %1191
        %1193 = vrot.lane.b32.xlu0 %v1125, 24
        %v1194 = vpop.permute.xlu0 %1193
        %1195 = vrot.lane.b32.xlu0 %v1126, 24
        %v1196 = vpop.permute.xlu0 %1195
        %v1202 = vrot.slane %v1123, 1
        %v1203 = vrot.slane %v1124, 1
        %v1204 = vsel %vm1141, %v1202, %v1203
        %v1205 = vrot.slane %v1125, 1
        %v1206 = vsel %vm1141, %v1203, %v1205
        %v1207 = vrot.slane %v1126, 1
        %v1208 = vsel %vm1141, %v1205, %v1207
        %v1209 = vrot.slane %v1127, 1
        %v1210 = vsel %vm1141, %v1207, %v1209
        %1211 = vrot.lane.b32.xlu0 %v1204, 32
        %v1212 = vpop.permute.xlu0 %1211
        %1213 = vrot.lane.b32.xlu0 %v1206, 32
        %v1214 = vpop.permute.xlu0 %1213
        %1215 = vrot.lane.b32.xlu0 %v1208, 32
        %v1216 = vpop.permute.xlu0 %1215
        %1217 = vrot.lane.b32.xlu0 %v1210, 32
        %v1218 = vpop.permute.xlu0 %1217
        %v1223 = vrot.slane %v1123, 2
        %v1224 = vrot.slane %v1124, 2
        %v1225 = vsel %vm1163, %v1223, %v1224
        %v1226 = vrot.slane %v1125, 2
        %v1227 = vsel %vm1163, %v1224, %v1226
        %v1228 = vrot.slane %v1126, 2
        %v1229 = vsel %vm1163, %v1226, %v1228
        %v1230 = vrot.slane %v1127, 2
        %v1231 = vsel %vm1163, %v1228, %v1230
        %1232 = vrot.lane.b32.xlu0 %v1225, 40
        %v1233 = vpop.permute.xlu0 %1232
        %1234 = vrot.lane.b32.xlu0 %v1227, 40
        %v1235 = vpop.permute.xlu0 %1234
        %1236 = vrot.lane.b32.xlu0 %v1229, 40
        %v1237 = vpop.permute.xlu0 %1236
        %1238 = vrot.lane.b32.xlu0 %v1231, 40
        %v1239 = vpop.permute.xlu0 %1238
        %1248 = vrot.lane.b32.xlu0 %v1131, 48
        %v1249 = vpop.permute.xlu0 %1248
        %1250 = vrot.lane.b32.xlu0 %v1132, 48
        %v1251 = vpop.permute.xlu0 %1250
        %1252 = vrot.lane.b32.xlu0 %v1133, 48
        %v1253 = vpop.permute.xlu0 %1252
        %1254 = vrot.lane.b32.xlu0 %v1134, 48
        %v1255 = vpop.permute.xlu0 %1254
        %v1261 = vrot.slane %v1131, 1
        %v1262 = vrot.slane %v1132, 1
        %v1263 = vsel %vm1141, %v1261, %v1262
        %v1264 = vrot.slane %v1133, 1
        %v1265 = vsel %vm1141, %v1262, %v1264
        %v1266 = vrot.slane %v1134, 1
        %v1267 = vsel %vm1141, %v1264, %v1266
        %v1268 = vrot.slane %v1135, 1
        %v1269 = vsel %vm1141, %v1266, %v1268
        %1270 = vrot.lane.b32.xlu0 %v1263, 56
        %v1271 = vpop.permute.xlu0 %1270
        %1272 = vrot.lane.b32.xlu0 %v1265, 56
        %v1273 = vpop.permute.xlu0 %1272
        %1274 = vrot.lane.b32.xlu0 %v1267, 56
        %v1275 = vpop.permute.xlu0 %1274
        %1276 = vrot.lane.b32.xlu0 %v1269, 56
        %v1277 = vpop.permute.xlu0 %1276
        %v1282 = vrot.slane %v1131, 2
        %v1283 = vrot.slane %v1132, 2
        %v1284 = vsel %vm1163, %v1282, %v1283
        %v1285 = vrot.slane %v1133, 2
        %v1286 = vsel %vm1163, %v1283, %v1285
        %v1287 = vrot.slane %v1134, 2
        %v1288 = vsel %vm1163, %v1285, %v1287
        %v1289 = vrot.slane %v1135, 2
        %v1290 = vsel %vm1163, %v1287, %v1289
        %1291 = vrot.lane.b32.xlu0 %v1284, 64
        %v1292 = vpop.permute.xlu0 %1291
        %1293 = vrot.lane.b32.xlu0 %v1286, 64
        %v1294 = vpop.permute.xlu0 %1293
        %1295 = vrot.lane.b32.xlu0 %v1288, 64
        %v1296 = vpop.permute.xlu0 %1295
        %1297 = vrot.lane.b32.xlu0 %v1290, 64
        %v1298 = vpop.permute.xlu0 %1297
        %vm1303 = vcmask 64512
        %v1304 = vsel %vm1303, %v1115, %v1152
        %v1305 = vsel %vm1303, %v1116, %v1154
        %v1306 = vsel %vm1303, %v1117, %v1156
        %v1307 = vsel %vm1303, %v1118, %v1158
        %vm1308 = vcmask 130048
        %v1309 = vsel %vm1308, %v1304, %v1174
        %v1310 = vsel %vm1308, %v1305, %v1176
        %v1311 = vsel %vm1308, %v1306, %v1178
        %v1312 = vsel %vm1308, %v1307, %v1180
        %vm1313 = vcmask 195584
        %v1314 = vsel %vm1313, %v1309, %v1190
        %v1315 = vsel %vm1313, %v1310, %v1192
        %v1316 = vsel %vm1313, %v1311, %v1194
        %v1317 = vsel %vm1313, %v1312, %v1196
        %vm1318 = vcmask 261120
        %v1319 = vsel %vm1318, %v1314, %v1212
        %v1320 = vsel %vm1318, %v1315, %v1214
        %v1321 = vsel %vm1318, %v1316, %v1216
        %v1322 = vsel %vm1318, %v1317, %v1218
        %vm1323 = vcmask 326656
        %v1324 = vsel %vm1323, %v1319, %v1233
        %v1325 = vsel %vm1323, %v1320, %v1235
        %v1326 = vsel %vm1323, %v1321, %v1237
        %v1327 = vsel %vm1323, %v1322, %v1239
        %vm1328 = vcmask 392192
        %v1329 = vsel %vm1328, %v1324, %v1249
        %v1330 = vsel %vm1328, %v1325, %v1251
        %v1331 = vsel %vm1328, %v1326, %v1253
        %v1332 = vsel %vm1328, %v1327, %v1255
        %vm1333 = vcmask 457728
        %v1334 = vsel %vm1333, %v1329, %v1271
        %v1335 = vsel %vm1333, %v1330, %v1273
        %v1336 = vsel %vm1333, %v1331, %v1275
        %v1337 = vsel %vm1333, %v1332, %v1277
        %vm1338 = vcmask 523264
        %v1339 = vsel %vm1338, %v1334, %v1292
        %v1340 = vsel %vm1338, %v1335, %v1294
        %v1341 = vsel %vm1338, %v1336, %v1296
        %v1342 = vsel %vm1338, %v1337, %v1298
        %v1344 = vlaneseq
        %v1345 = vshrl.u32 %v1344, 7
        %v1346 = vsub.s32 0, %v1345
        %v1347 = vrot.slane %v1106, %v1346
        %vm1349 = vcmask 588800
        %v1351 = vsel %vm1349, %v1339, 0
        %v1354 = vsel %vm1349, %v1340, 0
        %v1357 = vsel %vm1349, %v1341, 0
        %v1360 = vsel %vm1349, %v1342, 0
        %1362 = vmatprep.subr.mxu0 0.0
        %1363 = vmatpush1.msra.mxu0 %v1097
        %1364 = vmatprep.subr.mxu0 0.0
        %1365 = vmatpush1.msra.mxu0 %v1098
        %1366 = vmatprep.subr.mxu0 0.0
        %1367 = vmatpush1.msra.mxu0 %v1099
        %1368 = vmatprep.subr.mxu0 0.0
        %1369 = vmatpush1.msra.mxu0 %v1100
        %1370 = vmatprep.subr.mxu0 0.0
        %1371 = vmatpush1.msra.mxu0 %v1101
        %1372 = vmatprep.subr.mxu0 0.0
        %1373 = vmatpush1.msra.mxu0 %v1102
        %1374 = vmatprep.subr.mxu0 0.0
        %1375 = vmatpush1.msra.mxu0 %v1103
        %1376 = vmatprep.subr.mxu0 0.0
        %1377 = vmatpush1.msra.mxu0 %v1104
        %1378 = vmatprep.subr.mxu0 0.0
        %1379 = vmatpush1.msra.mxu0 %v1105
        %1380 = vmatprep.subr.mxu0 0.0
        %1381 = vmatpush1.msra.mxu0 0.0
        %1382 = vmatprep.subr.mxu0 0.0
        %1383 = vmatpush1.msra.mxu0 0.0
        %1384 = vmatprep.subr.mxu0 0.0
        %1385 = vmatpush1.msra.mxu0 0.0
        %1386 = vmatprep.subr.mxu0 0.0
        %1387 = vmatpush1.msra.mxu0 0.0
        %1388 = vmatprep.subr.mxu0 0.0
        %1389 = vmatpush1.msra.mxu0 0.0
        %1390 = vmatprep.subr.mxu0 0.0
        %1391 = vmatpush1.msra.mxu0 0.0
        %1392 = vmatprep.subr.mxu0 0.0
        %1393 = vmatpush1.msra.mxu0 0.0
        %1394 = vmatprep.subr.mxu0 0.0
        %1395 = vmatpush1.msra.mxu0 0.0
        %1396 = vmatprep.subr.mxu0 0.0
        %1397 = vmatpush1.msra.mxu0 0.0
        %1398 = vmatprep.subr.mxu0 0.0
        %1399 = vmatpush1.msra.mxu0 0.0
        %1400 = vmatprep.subr.mxu0 0.0
        %1401 = vmatpush1.msra.mxu0 0.0
        %1402 = vmatprep.subr.mxu0 0.0
        %1403 = vmatpush1.msra.mxu0 0.0
        %1404 = vmatprep.subr.mxu0 0.0
        %1405 = vmatpush1.msra.mxu0 0.0
        %1406 = vmatprep.subr.mxu0 0.0
        %1407 = vmatpush1.msra.mxu0 0.0
        %1408 = vmatprep.subr.mxu0 0.0
        %1409 = vmatpush1.msra.mxu0 0.0
        %1410 = vmatprep.subr.mxu0 0.0
        %1411 = vmatpush1.msra.mxu0 0.0
        %1412 = vmatprep.subr.mxu0 0.0
        %1413 = vmatpush1.msra.mxu0 0.0
        %1414 = vmatprep.subr.mxu0 0.0
        %1415 = vmatpush1.msra.mxu0 0.0
        %1416 = vmatprep.subr.mxu0 0.0
        %1417 = vmatpush1.msra.mxu0 0.0
        %1418 = vmatprep.subr.mxu0 0.0
        %1419 = vmatpush1.msra.mxu0 0.0
        %1420 = vmatprep.subr.mxu0 0.0
        %1421 = vmatpush1.msra.mxu0 0.0
        %1422 = vmatprep.subr.mxu0 0.0
        %1423 = vmatpush1.msra.mxu0 0.0
        %1424 = vmatprep.subr.mxu0 0.0
        %1425 = vmatpush1.msra.mxu0 0.0
        %1426 = vmatprep.mubr.f32.mxu0 0.0
        %1427 = vmatmul.mubr.f32.gmra.mrb[0].mxu0 %v1351
        %v1428 = vpop.f32.mrb[0].mxu0
        %v1429 = vadd.f32 %v1347, %v1428
        %v1430 = vpop.f32.mrb[0].mxu0
        %1431 = vmatprep.mubr.f32.mxu0 0.0
        %1432 = vmatmul.mubr.f32.gmra.mrb[0].mxu0 %v1354
        %v1433 = vpop.f32.mrb[0].mxu0
        %v1434 = vadd.f32 %v1347, %v1433
        %v1435 = vpop.f32.mrb[0].mxu0
        %1436 = vmatprep.mubr.f32.mxu0 0.0
        %1437 = vmatmul.mubr.f32.gmra.mrb[0].mxu0 %v1357
        %v1438 = vpop.f32.mrb[0].mxu0
        %v1439 = vadd.f32 %v1347, %v1438
        %v1440 = vpop.f32.mrb[0].mxu0
        %1441 = vmatprep.mubr.f32.mxu0 0.0
        %1442 = vmatmul.mubr.f32.gmra.mrb[0].mxu0 %v1360
        %v1443 = vpop.f32.mrb[0].mxu0
        %v1444 = vadd.f32 %v1347, %v1443
        %v1445 = vpop.f32.mrb[0].mxu0
        %1446 = vdwg.mxu0
        %v1447 = vmax.f32 %v1429, 0.0
        %v1448 = vmax.f32 %v1434, 0.0
        %v1449 = vmax.f32 %v1439, 0.0
        %v1450 = vmax.f32 %v1444, 0.0
        %s1451 = smul.u32 %s1108, 32
        %s1452 = scalar_lea.vmem [#allocation3], %s1451
        %1453 = vst.msk [vmem:[%s1452] sm:$0xff] %vm1303, %v1447
        %1454 = vst.msk [vmem:[%s1452 + $0x8] sm:$0xff] %vm1303, %v1448
        %1455 = vst.msk [vmem:[%s1452 + $0x10] sm:$0xff] %vm1303, %v1449
        %1456 = vst.msk [vmem:[%s1452 + $0x18] sm:$0xff] %vm1303, %v1450
      $region120: #{unet_model_forward.1} parent=107 // loop_footer
        %s1112 = sadd.s32 1, %s1108
      $region121: #{unet_model_forward.1} parent=107 // loop_footer_branch
        %1107 = sbr.rel target = $region117
      $region122: #{unet_model_forward.1} parent=107 // loop_exit
        _
      %v1457 = vld [vmem:[%s18] sm:$0xff]
      %v1458 = vld [vmem:[%s18 + $0x8] sm:$0xff]
      %v1459 = vld [vmem:[%s19] sm:$0xff]
      %v1460 = vld [vmem:[%s19 + $0x8] sm:$0xff]
      loop: start=0, step=1, limit=16
      $region123: #{unet_model_forward.1} parent=107 // loop_pre_header
        _
      $region124: #{unet_model_forward.1} parent=107 // loop_header
        %s1462 = sphi 0, %s1466
        %p1463 = scmp.ge.s32.totalorder %s1462, 16
      $region125: #{unet_model_forward.1} parent=107 // loop_header_branch
        %1465 = sbr.rel (%p1463) target = $region129
      $region126: #{unet_model_forward.1} parent=107 // loop_body
        %s1467 = smul.u32 %s1462, 2
        %s1468 = smul.u32 %s1467, 32
        %s1469 = scalar_lea.vmem [#allocation3], %s1468
        %v1470 = vld [vmem:[%s1469] sm:$0xff]
        %v1471 = vld [vmem:[%s1469 + $0x8] sm:$0xff]
        %v1472 = vld [vmem:[%s1469 + $0x10] sm:$0xff]
        %v1473 = vld [vmem:[%s1469 + $0x18] sm:$0xff]
        %s1474 = sadd.s32 %s1467, 1
        %s1475 = smul.u32 %s1474, 32
        %s1476 = scalar_lea.vmem [#allocation3], %s1475
        %v1477 = vld [vmem:[%s1476] sm:$0xff]
        %v1478 = vld [vmem:[%s1476 + $0x8] sm:$0xff]
        %v1479 = vld [vmem:[%s1476 + $0x10] sm:$0xff]
        %v1480 = vld [vmem:[%s1476 + $0x18] sm:$0xff]
        %v1481 = vmax.f32 %v1470, %v1477
        %v1482 = vmax.f32 %v1471, %v1478
        %v1483 = vmax.f32 %v1472, %v1479
        %v1484 = vmax.f32 %v1473, %v1480
        %vm1485 = vcmask 261120
        %v1487 = vsel %vm1485, %v1457, 0
        %v1490 = vsel %vm1485, %v1458, 0
        %1492 = vmatprep.subr.mxu0 0.0
        %1493 = vmatpush1.msra.mxu0 %v1481
        %1494 = vmatprep.subr.mxu0 0.0
        %1495 = vmatpush1.msra.mxu0 %v1482
        %1496 = vmatprep.subr.mxu0 0.0
        %1497 = vmatpush1.msra.mxu0 %v1483
        %1498 = vmatprep.subr.mxu0 0.0
        %1499 = vmatpush1.msra.mxu0 %v1484
        %1500 = vmatprep.subr.mxu0 0.0
        %1501 = vmatpush1.msra.mxu0 0.0
        %1502 = vmatprep.subr.mxu0 0.0
        %1503 = vmatpush1.msra.mxu0 0.0
        %1504 = vmatprep.subr.mxu0 0.0
        %1505 = vmatpush1.msra.mxu0 0.0
        %1506 = vmatprep.subr.mxu0 0.0
        %1507 = vmatpush1.msra.mxu0 0.0
        %1508 = vmatprep.subr.mxu0 0.0
        %1509 = vmatpush1.msra.mxu0 0.0
        %1510 = vmatprep.subr.mxu0 0.0
        %1511 = vmatpush1.msra.mxu0 0.0
        %1512 = vmatprep.subr.mxu0 0.0
        %1513 = vmatpush1.msra.mxu0 0.0
        %1514 = vmatprep.subr.mxu0 0.0
        %1515 = vmatpush1.msra.mxu0 0.0
        %1516 = vmatprep.subr.mxu0 0.0
        %1517 = vmatpush1.msra.mxu0 0.0
        %1518 = vmatprep.subr.mxu0 0.0
        %1519 = vmatpush1.msra.mxu0 0.0
        %1520 = vmatprep.subr.mxu0 0.0
        %1521 = vmatpush1.msra.mxu0 0.0
        %1522 = vmatprep.subr.mxu0 0.0
        %1523 = vmatpush1.msra.mxu0 0.0
        %1524 = vmatprep.subr.mxu0 0.0
        %1525 = vmatpush1.msra.mxu0 0.0
        %1526 = vmatprep.subr.mxu0 0.0
        %1527 = vmatpush1.msra.mxu0 0.0
        %1528 = vmatprep.subr.mxu0 0.0
        %1529 = vmatpush1.msra.mxu0 0.0
        %1530 = vmatprep.subr.mxu0 0.0
        %1531 = vmatpush1.msra.mxu0 0.0
        %1532 = vmatprep.subr.mxu0 0.0
        %1533 = vmatpush1.msra.mxu0 0.0
        %1534 = vmatprep.subr.mxu0 0.0
        %1535 = vmatpush1.msra.mxu0 0.0
        %1536 = vmatprep.subr.mxu0 0.0
        %1537 = vmatpush1.msra.mxu0 0.0
        %1538 = vmatprep.subr.mxu0 0.0
        %1539 = vmatpush1.msra.mxu0 0.0
        %1540 = vmatprep.subr.mxu0 0.0
        %1541 = vmatpush1.msra.mxu0 0.0
        %1542 = vmatprep.subr.mxu0 0.0
        %1543 = vmatpush1.msra.mxu0 0.0
        %1544 = vmatprep.subr.mxu0 0.0
        %1545 = vmatpush1.msra.mxu0 0.0
        %1546 = vmatprep.subr.mxu0 0.0
        %1547 = vmatpush1.msra.mxu0 0.0
        %1548 = vmatprep.subr.mxu0 0.0
        %1549 = vmatpush1.msra.mxu0 0.0
        %1550 = vmatprep.subr.mxu0 0.0
        %1551 = vmatpush1.msra.mxu0 0.0
        %1552 = vmatprep.subr.mxu0 0.0
        %1553 = vmatpush1.msra.mxu0 0.0
        %1554 = vmatprep.subr.mxu0 0.0
        %1555 = vmatpush1.msra.mxu0 0.0
        %1556 = vmatprep.mubr.f32.mxu0 0.0
        %1557 = vmatmul.mubr.f32.gmra.mrb[0].mxu0 %v1487
        %v1558 = vpop.f32.mrb[0].mxu0
        %v1559 = vadd.f32 0.0, %v1558
        %v1560 = vpop.f32.mrb[0].mxu0
        %1561 = vmatprep.mubr.f32.mxu0 0.0
        %1562 = vmatmul.mubr.f32.gmra.mrb[0].mxu0 %v1490
        %v1563 = vpop.f32.mrb[0].mxu0
        %v1564 = vadd.f32 0.0, %v1563
        %v1565 = vpop.f32.mrb[0].mxu0
        %1566 = vdwg.mxu0
        %v1568 = vsel %vm1485, %v1459, 0
        %v1571 = vsel %vm1485, %v1460, 0
        %1573 = vmatprep.subr.mxu0 0.0
        %1574 = vmatpush1.msra.mxu0 %v1481
        %1575 = vmatprep.subr.mxu0 0.0
        %1576 = vmatpush1.msra.mxu0 %v1482
        %1577 = vmatprep.subr.mxu0 0.0
        %1578 = vmatpush1.msra.mxu0 %v1483
        %1579 = vmatprep.subr.mxu0 0.0
        %1580 = vmatpush1.msra.mxu0 %v1484
        %1581 = vmatprep.subr.mxu0 0.0
        %1582 = vmatpush1.msra.mxu0 0.0
        %1583 = vmatprep.subr.mxu0 0.0
        %1584 = vmatpush1.msra.mxu0 0.0
        %1585 = vmatprep.subr.mxu0 0.0
        %1586 = vmatpush1.msra.mxu0 0.0
        %1587 = vmatprep.subr.mxu0 0.0
        %1588 = vmatpush1.msra.mxu0 0.0
        %1589 = vmatprep.subr.mxu0 0.0
        %1590 = vmatpush1.msra.mxu0 0.0
        %1591 = vmatprep.subr.mxu0 0.0
        %1592 = vmatpush1.msra.mxu0 0.0
        %1593 = vmatprep.subr.mxu0 0.0
        %1594 = vmatpush1.msra.mxu0 0.0
        %1595 = vmatprep.subr.mxu0 0.0
        %1596 = vmatpush1.msra.mxu0 0.0
        %1597 = vmatprep.subr.mxu0 0.0
        %1598 = vmatpush1.msra.mxu0 0.0
        %1599 = vmatprep.subr.mxu0 0.0
        %1600 = vmatpush1.msra.mxu0 0.0
        %1601 = vmatprep.subr.mxu0 0.0
        %1602 = vmatpush1.msra.mxu0 0.0
        %1603 = vmatprep.subr.mxu0 0.0
        %1604 = vmatpush1.msra.mxu0 0.0
        %1605 = vmatprep.subr.mxu0 0.0
        %1606 = vmatpush1.msra.mxu0 0.0
        %1607 = vmatprep.subr.mxu0 0.0
        %1608 = vmatpush1.msra.mxu0 0.0
        %1609 = vmatprep.subr.mxu0 0.0
        %1610 = vmatpush1.msra.mxu0 0.0
        %1611 = vmatprep.subr.mxu0 0.0
        %1612 = vmatpush1.msra.mxu0 0.0
        %1613 = vmatprep.subr.mxu0 0.0
        %1614 = vmatpush1.msra.mxu0 0.0
        %1615 = vmatprep.subr.mxu0 0.0
        %1616 = vmatpush1.msra.mxu0 0.0
        %1617 = vmatprep.subr.mxu0 0.0
        %1618 = vmatpush1.msra.mxu0 0.0
        %1619 = vmatprep.subr.mxu0 0.0
        %1620 = vmatpush1.msra.mxu0 0.0
        %1621 = vmatprep.subr.mxu0 0.0
        %1622 = vmatpush1.msra.mxu0 0.0
        %1623 = vmatprep.subr.mxu0 0.0
        %1624 = vmatpush1.msra.mxu0 0.0
        %1625 = vmatprep.subr.mxu0 0.0
        %1626 = vmatpush1.msra.mxu0 0.0
        %1627 = vmatprep.subr.mxu0 0.0
        %1628 = vmatpush1.msra.mxu0 0.0
        %1629 = vmatprep.subr.mxu0 0.0
        %1630 = vmatpush1.msra.mxu0 0.0
        %1631 = vmatprep.subr.mxu0 0.0
        %1632 = vmatpush1.msra.mxu0 0.0
        %1633 = vmatprep.subr.mxu0 0.0
        %1634 = vmatpush1.msra.mxu0 0.0
        %1635 = vmatprep.subr.mxu0 0.0
        %1636 = vmatpush1.msra.mxu0 0.0
        %1637 = vmatprep.mubr.f32.mxu0 0.0
        %1638 = vmatmul.mubr.f32.gmra.mrb[0].mxu0 %v1568
        %v1639 = vpop.f32.mrb[0].mxu0
        %v1640 = vadd.f32 0.0, %v1639
        %v1641 = vpop.f32.mrb[0].mxu0
        %1642 = vmatprep.mubr.f32.mxu0 0.0
        %1643 = vmatmul.mubr.f32.gmra.mrb[0].mxu0 %v1571
        %v1644 = vpop.f32.mrb[0].mxu0
        %v1645 = vadd.f32 0.0, %v1644
        %v1646 = vpop.f32.mrb[0].mxu0
        %1647 = vdwg.mxu0
        %v1648 = vmax.f32 %v1559, %v1640
        %v1649 = vmax.f32 %v1564, %v1645
        %s1650 = smul.u32 %s1462, 16
        %s1651 = scalar_lea.vmem [#allocation4], %s1650
        %vm1652 = vcmask 64512
        %1653 = vst.msk [vmem:[%s1651] sm:$0xff] %vm1652, %v1648
        %1654 = vst.msk [vmem:[%s1651 + $0x8] sm:$0xff] %vm1652, %v1649
      $region127: #{unet_model_forward.1} parent=107 // loop_footer
        %s1466 = sadd.s32 1, %s1462
      $region128: #{unet_model_forward.1} parent=107 // loop_footer_branch
        %1461 = sbr.rel target = $region124
      $region129: #{unet_model_forward.1} parent=107 // loop_exit
        _
      %v1655 = vld [vmem:[%s5] sm:$0xff]
      %v1656 = vld [vmem:[%s5 + $0x8] sm:$0xff]
      %v1657 = vld [vmem:[%s5 + $0x10] sm:$0xff]
      %v1658 = vld [vmem:[%s5 + $0x18] sm:$0xff]
      %v1659 = vld [vmem:[%s5 + $0x20] sm:$0xff]
      %v1660 = vld [vmem:[%s5 + $0x28] sm:$0xff]
      %v1661 = vld [vmem:[%s5 + $0x30] sm:$0xff]
      %v1662 = vld [vmem:[%s5 + $0x38] sm:$0xff]
      %v1663 = vld [vmem:[%s5 + $0x40] sm:$0xff]
      %v1664 = vld [vmem:[%s6] sm:$0x1]
      loop: start=0, step=1, limit=14
      $region130: #{unet_model_forward.1} parent=107 // loop_pre_header
        _
      $region131: #{unet_model_forward.1} parent=107 // loop_header
        %s1666 = sphi 0, %s1670
        %p1667 = scmp.ge.s32.totalorder %s1666, 14
      $region132: #{unet_model_forward.1} parent=107 // loop_header_branch
        %1669 = sbr.rel (%p1667) target = $region136
      $region133: #{unet_model_forward.1} parent=107 // loop_body
        %s1671 = smul.u32 %s1666, 16
        %s1672 = scalar_lea.vmem [#allocation4], %s1671
        %v1673 = vld [vmem:[%s1672] sm:$0xff]
        %v1674 = vld [vmem:[%s1672 + $0x8] sm:$0xff]
        %s1675 = sadd.s32 %s1666, 1
        %s1676 = smul.u32 %s1675, 16
        %s1677 = scalar_lea.vmem [#allocation4], %s1676
        %v1678 = vld [vmem:[%s1677] sm:$0xff]
        %v1679 = vld [vmem:[%s1677 + $0x8] sm:$0xff]
        %s1680 = sadd.s32 %s1666, 2
        %s1681 = smul.u32 %s1680, 16
        %s1682 = scalar_lea.vmem [#allocation4], %s1681
        %v1683 = vld [vmem:[%s1682] sm:$0xff]
        %v1684 = vld [vmem:[%s1682 + $0x8] sm:$0xff]
        %vm1687 = vcmask 1046528
        %v1688 = vrot.slane %v1673, 1
        %v1689 = vrot.slane %v1674, 1
        %v1690 = vsel %vm1687, %v1688, %v1689
        %1691 = vrot.lane.b32.xlu0 %v1690, 8
        %v1692 = vpop.permute.xlu0 %1691
        %1693 = vrot.lane.b32.xlu0 %v1689, 8
        %v1694 = vpop.permute.xlu0 %1693
        %vm1697 = vcmask 1045504
        %v1698 = vrot.slane %v1673, 2
        %v1699 = vrot.slane %v1674, 2
        %v1700 = vsel %vm1697, %v1698, %v1699
        %1701 = vrot.lane.b32.xlu0 %v1700, 16
        %v1702 = vpop.permute.xlu0 %1701
        %1703 = vrot.lane.b32.xlu0 %v1699, 16
        %v1704 = vpop.permute.xlu0 %1703
        %1709 = vrot.lane.b32.xlu0 %v1678, 24
        %v1710 = vpop.permute.xlu0 %1709
        %1711 = vrot.lane.b32.xlu0 %v1679, 24
        %v1712 = vpop.permute.xlu0 %1711
        %v1715 = vrot.slane %v1678, 1
        %v1716 = vrot.slane %v1679, 1
        %v1717 = vsel %vm1687, %v1715, %v1716
        %1718 = vrot.lane.b32.xlu0 %v1717, 32
        %v1719 = vpop.permute.xlu0 %1718
        %1720 = vrot.lane.b32.xlu0 %v1716, 32
        %v1721 = vpop.permute.xlu0 %1720
        %v1724 = vrot.slane %v1678, 2
        %v1725 = vrot.slane %v1679, 2
        %v1726 = vsel %vm1697, %v1724, %v1725
        %1727 = vrot.lane.b32.xlu0 %v1726, 40
        %v1728 = vpop.permute.xlu0 %1727
        %1729 = vrot.lane.b32.xlu0 %v1725, 40
        %v1730 = vpop.permute.xlu0 %1729
        %1735 = vrot.lane.b32.xlu0 %v1683, 48
        %v1736 = vpop.permute.xlu0 %1735
        %1737 = vrot.lane.b32.xlu0 %v1684, 48
        %v1738 = vpop.permute.xlu0 %1737
        %v1741 = vrot.slane %v1683, 1
        %v1742 = vrot.slane %v1684, 1
        %v1743 = vsel %vm1687, %v1741, %v1742
        %1744 = vrot.lane.b32.xlu0 %v1743, 56
        %v1745 = vpop.permute.xlu0 %1744
        %1746 = vrot.lane.b32.xlu0 %v1742, 56
        %v1747 = vpop.permute.xlu0 %1746
        %v1750 = vrot.slane %v1683, 2
        %v1751 = vrot.slane %v1684, 2
        %v1752 = vsel %vm1697, %v1750, %v1751
        %1753 = vrot.lane.b32.xlu0 %v1752, 64
        %v1754 = vpop.permute.xlu0 %1753
        %1755 = vrot.lane.b32.xlu0 %v1751, 64
        %v1756 = vpop.permute.xlu0 %1755
        %vm1759 = vcmask 64512
        %v1760 = vsel %vm1759, %v1673, %v1692
        %v1761 = vsel %vm1759, %v1674, %v1694
        %vm1762 = vcmask 130048
        %v1763 = vsel %vm1762, %v1760, %v1702
        %v1764 = vsel %vm1762, %v1761, %v1704
        %vm1765 = vcmask 195584
        %v1766 = vsel %vm1765, %v1763, %v1710
        %v1767 = vsel %vm1765, %v1764, %v1712
        %vm1768 = vcmask 261120
        %v1769 = vsel %vm1768, %v1766, %v1719
        %v1770 = vsel %vm1768, %v1767, %v1721
        %vm1771 = vcmask 326656
        %v1772 = vsel %vm1771, %v1769, %v1728
        %v1773 = vsel %vm1771, %v1770, %v1730
        %vm1774 = vcmask 392192
        %v1775 = vsel %vm1774, %v1772, %v1736
        %v1776 = vsel %vm1774, %v1773, %v1738
        %vm1777 = vcmask 457728
        %v1778 = vsel %vm1777, %v1775, %v1745
        %v1779 = vsel %vm1777, %v1776, %v1747
        %vm1780 = vcmask 523264
        %v1781 = vsel %vm1780, %v1778, %v1754
        %v1782 = vsel %vm1780, %v1779, %v1756
        %v1784 = vlaneseq
        %v1785 = vshrl.u32 %v1784, 7
        %v1786 = vsub.s32 0, %v1785
        %v1787 = vrot.slane %v1664, %v1786
        %vm1789 = vcmask 588800
        %v1791 = vsel %vm1789, %v1781, 0
        %v1794 = vsel %vm1789, %v1782, 0
        %1796 = vmatprep.subr.mxu0 0.0
        %1797 = vmatpush1.msra.mxu0 %v1655
        %1798 = vmatprep.subr.mxu0 0.0
        %1799 = vmatpush1.msra.mxu0 %v1656
        %1800 = vmatprep.subr.mxu0 0.0
        %1801 = vmatpush1.msra.mxu0 %v1657
        %1802 = vmatprep.subr.mxu0 0.0
        %1803 = vmatpush1.msra.mxu0 %v1658
        %1804 = vmatprep.subr.mxu0 0.0
        %1805 = vmatpush1.msra.mxu0 %v1659
        %1806 = vmatprep.subr.mxu0 0.0
        %1807 = vmatpush1.msra.mxu0 %v1660
        %1808 = vmatprep.subr.mxu0 0.0
        %1809 = vmatpush1.msra.mxu0 %v1661
        %1810 = vmatprep.subr.mxu0 0.0
        %1811 = vmatpush1.msra.mxu0 %v1662
        %1812 = vmatprep.subr.mxu0 0.0
        %1813 = vmatpush1.msra.mxu0 %v1663
        %1814 = vmatprep.subr.mxu0 0.0
        %1815 = vmatpush1.msra.mxu0 0.0
        %1816 = vmatprep.subr.mxu0 0.0
        %1817 = vmatpush1.msra.mxu0 0.0
        %1818 = vmatprep.subr.mxu0 0.0
        %1819 = vmatpush1.msra.mxu0 0.0
        %1820 = vmatprep.subr.mxu0 0.0
        %1821 = vmatpush1.msra.mxu0 0.0
        %1822 = vmatprep.subr.mxu0 0.0
        %1823 = vmatpush1.msra.mxu0 0.0
        %1824 = vmatprep.subr.mxu0 0.0
        %1825 = vmatpush1.msra.mxu0 0.0
        %1826 = vmatprep.subr.mxu0 0.0
        %1827 = vmatpush1.msra.mxu0 0.0
        %1828 = vmatprep.subr.mxu0 0.0
        %1829 = vmatpush1.msra.mxu0 0.0
        %1830 = vmatprep.subr.mxu0 0.0
        %1831 = vmatpush1.msra.mxu0 0.0
        %1832 = vmatprep.subr.mxu0 0.0
        %1833 = vmatpush1.msra.mxu0 0.0
        %1834 = vmatprep.subr.mxu0 0.0
        %1835 = vmatpush1.msra.mxu0 0.0
        %1836 = vmatprep.subr.mxu0 0.0
        %1837 = vmatpush1.msra.mxu0 0.0
        %1838 = vmatprep.subr.mxu0 0.0
        %1839 = vmatpush1.msra.mxu0 0.0
        %1840 = vmatprep.subr.mxu0 0.0
        %1841 = vmatpush1.msra.mxu0 0.0
        %1842 = vmatprep.subr.mxu0 0.0
        %1843 = vmatpush1.msra.mxu0 0.0
        %1844 = vmatprep.subr.mxu0 0.0
        %1845 = vmatpush1.msra.mxu0 0.0
        %1846 = vmatprep.subr.mxu0 0.0
        %1847 = vmatpush1.msra.mxu0 0.0
        %1848 = vmatprep.subr.mxu0 0.0
        %1849 = vmatpush1.msra.mxu0 0.0
        %1850 = vmatprep.subr.mxu0 0.0
        %1851 = vmatpush1.msra.mxu0 0.0
        %1852 = vmatprep.subr.mxu0 0.0
        %1853 = vmatpush1.msra.mxu0 0.0
        %1854 = vmatprep.subr.mxu0 0.0
        %1855 = vmatpush1.msra.mxu0 0.0
        %1856 = vmatprep.subr.mxu0 0.0
        %1857 = vmatpush1.msra.mxu0 0.0
        %1858 = vmatprep.subr.mxu0 0.0
        %1859 = vmatpush1.msra.mxu0 0.0
        %1860 = vmatprep.mubr.f32.mxu0 0.0
        %1861 = vmatmul.mubr.f32.gmra.mrb[0].mxu0 %v1791
        %v1862 = vpop.f32.mrb[0].mxu0
        %v1863 = vadd.f32 %v1787, %v1862
        %v1864 = vpop.f32.mrb[0].mxu0
        %1865 = vmatprep.mubr.f32.mxu0 0.0
        %1866 = vmatmul.mubr.f32.gmra.mrb[0].mxu0 %v1794
        %v1867 = vpop.f32.mrb[0].mxu0
        %v1868 = vadd.f32 %v1787, %v1867
        %v1869 = vpop.f32.mrb[0].mxu0
        %1870 = vdwg.mxu0
        %v1871 = vmax.f32 %v1863, 0.0
        %v1872 = vmax.f32 %v1868, 0.0
        %s1873 = scalar_lea.vmem [#allocation5], %s1671
        %1874 = vst.msk [vmem:[%s1873] sm:$0xff] %vm1762, %v1871
        %vm1875 = vcmask 128000
        %1876 = vst.msk [vmem:[%s1873 + $0x8] sm:$0x3f] %vm1875, %v1872
      $region134: #{unet_model_forward.1} parent=107 // loop_footer
        %s1670 = sadd.s32 1, %s1666
      $region135: #{unet_model_forward.1} parent=107 // loop_footer_branch
        %1665 = sbr.rel target = $region131
      $region136: #{unet_model_forward.1} parent=107 // loop_exit
        _
      %v1877 = vld [vmem:[%s7] sm:$0xff]
      %v1878 = vld [vmem:[%s7 + $0x8] sm:$0xff]
      %v1879 = vld [vmem:[%s7 + $0x10] sm:$0xff]
      %v1880 = vld [vmem:[%s7 + $0x18] sm:$0xff]
      %v1881 = vld [vmem:[%s7 + $0x20] sm:$0xff]
      %v1882 = vld [vmem:[%s7 + $0x28] sm:$0xff]
      %v1883 = vld [vmem:[%s7 + $0x30] sm:$0xff]
      %v1884 = vld [vmem:[%s7 + $0x38] sm:$0xff]
      %v1885 = vld [vmem:[%s7 + $0x40] sm:$0xff]
      %v1886 = vld [vmem:[%s7 + $0x48] sm:$0xff]
      %v1887 = vld [vmem:[%s7 + $0x50] sm:$0xff]
      %v1888 = vld [vmem:[%s7 + $0x58] sm:$0xff]
      %v1889 = vld [vmem:[%s7 + $0x60] sm:$0xff]
      %v1890 = vld [vmem:[%s7 + $0x68] sm:$0xff]
      %v1891 = vld [vmem:[%s7 + $0x70] sm:$0xff]
      %v1892 = vld [vmem:[%s7 + $0x78] sm:$0xff]
      %v1893 = vld [vmem:[%s7 + $0x80] sm:$0xff]
      %v1894 = vld [vmem:[%s7 + $0x88] sm:$0xff]
      %v1895 = vld [vmem:[%s8] sm:$0x1]
      loop: start=0, step=1, limit=12
      $region137: #{unet_model_forward.1} parent=107 // loop_pre_header
        _
      $region138: #{unet_model_forward.1} parent=107 // loop_header
        %s1897 = sphi 0, %s1901
        %p1898 = scmp.ge.s32.totalorder %s1897, 12
      $region139: #{unet_model_forward.1} parent=107 // loop_header_branch
        %1900 = sbr.rel (%p1898) target = $region143
      $region140: #{unet_model_forward.1} parent=107 // loop_body
        %s1902 = smul.u32 %s1897, 16
        %s1903 = scalar_lea.vmem [#allocation5], %s1902
        %v1904 = vld [vmem:[%s1903] sm:$0xff]
        %v1905 = vld [vmem:[%s1903 + $0x8] sm:$0x3f]
        %s1906 = sadd.s32 %s1897, 1
        %s1907 = smul.u32 %s1906, 16
        %s1908 = scalar_lea.vmem [#allocation5], %s1907
        %v1909 = vld [vmem:[%s1908] sm:$0xff]
        %v1910 = vld [vmem:[%s1908 + $0x8] sm:$0x3f]
        %s1911 = sadd.s32 %s1897, 2
        %s1912 = smul.u32 %s1911, 16
        %s1913 = scalar_lea.vmem [#allocation5], %s1912
        %v1914 = vld [vmem:[%s1913] sm:$0xff]
        %v1915 = vld [vmem:[%s1913 + $0x8] sm:$0x3f]
        %vm1918 = vcmask 1046528
        %v1919 = vrot.slane %v1904, 1
        %v1920 = vrot.slane %v1905, 1
        %v1921 = vsel %vm1918, %v1919, %v1920
        %1922 = vrot.lane.b32.xlu0 %v1921, 16
        %v1923 = vpop.permute.xlu0 %1922
        %1924 = vrot.lane.b32.xlu0 %v1920, 16
        %v1925 = vpop.permute.xlu0 %1924
        %vm1928 = vcmask 1045504
        %v1929 = vrot.slane %v1904, 2
        %v1930 = vrot.slane %v1905, 2
        %v1931 = vsel %vm1928, %v1929, %v1930
        %1932 = vrot.lane.b32.xlu0 %v1931, 32
        %v1933 = vpop.permute.xlu0 %1932
        %1934 = vrot.lane.b32.xlu0 %v1930, 32
        %v1935 = vpop.permute.xlu0 %1934
        %1940 = vrot.lane.b32.xlu0 %v1909, 48
        %v1941 = vpop.permute.xlu0 %1940
        %1942 = vrot.lane.b32.xlu0 %v1910, 48
        %v1943 = vpop.permute.xlu0 %1942
        %v1946 = vrot.slane %v1909, 1
        %v1947 = vrot.slane %v1910, 1
        %v1948 = vsel %vm1918, %v1946, %v1947
        %1949 = vrot.lane.b32.xlu0 %v1948, 64
        %v1950 = vpop.permute.xlu0 %1949
        %1951 = vrot.lane.b32.xlu0 %v1947, 64
        %v1952 = vpop.permute.xlu0 %1951
        %v1955 = vrot.slane %v1909, 2
        %v1956 = vrot.slane %v1910, 2
        %v1957 = vsel %vm1928, %v1955, %v1956
        %1958 = vrot.lane.b32.xlu0 %v1957, 80
        %v1959 = vpop.permute.xlu0 %1958
        %1960 = vrot.lane.b32.xlu0 %v1956, 80
        %v1961 = vpop.permute.xlu0 %1960
        %1966 = vrot.lane.b32.xlu0 %v1914, 96
        %v1967 = vpop.permute.xlu0 %1966
        %1968 = vrot.lane.b32.xlu0 %v1915, 96
        %v1969 = vpop.permute.xlu0 %1968
        %v1972 = vrot.slane %v1914, 1
        %v1973 = vrot.slane %v1915, 1
        %v1974 = vsel %vm1918, %v1972, %v1973
        %1975 = vrot.lane.b32.xlu0 %v1974, 112
        %v1976 = vpop.permute.xlu0 %1975
        %1977 = vrot.lane.b32.xlu0 %v1973, 112
        %v1978 = vpop.permute.xlu0 %1977
        %v1981 = vrot.slane %v1914, 2
        %v1982 = vrot.slane %v1915, 2
        %v1983 = vsel %vm1928, %v1981, %v1982
        %vm1984 = vcmask 130048
        %v1985 = vsel %vm1984, %v1904, %v1923
        %v1986 = vsel %vm1984, %v1905, %v1925
        %vm1987 = vcmask 261120
        %v1988 = vsel %vm1987, %v1985, %v1933
        %v1989 = vsel %vm1987, %v1986, %v1935
        %vm1990 = vcmask 392192
        %v1991 = vsel %vm1990, %v1988, %v1941
        %v1992 = vsel %vm1990, %v1989, %v1943
        %vm1993 = vcmask 523264
        %v1994 = vsel %vm1993, %v1991, %v1950
        %v1995 = vsel %vm1993, %v1992, %v1952
        %vm1996 = vcmask 654336
        %v1997 = vsel %vm1996, %v1994, %v1959
        %v1998 = vsel %vm1996, %v1995, %v1961
        %vm1999 = vcmask 785408
        %v2000 = vsel %vm1999, %v1997, %v1967
        %v2001 = vsel %vm1999, %v1998, %v1969
        %vm2002 = vcmask 916480
        %v2003 = vsel %vm2002, %v2000, %v1976
        %v2004 = vsel %vm2002, %v2001, %v1978
        %v2006 = vlaneseq
        %v2007 = vshrl.u32 %v2006, 7
        %v2008 = vsub.s32 0, %v2007
        %v2009 = vrot.slane %v1895, %v2008
        %v2011 = vsel %vm1984, %v1983, 0
        %v2013 = vsel %vm1984, %v1982, 0
        %2015 = vmatprep.subr.mxu0 0.0
        %2016 = vmatpush1.msra.mxu0 %v1877
        %2017 = vmatprep.subr.mxu0 0.0
        %2018 = vmatpush1.msra.mxu0 %v1878
        %2019 = vmatprep.subr.mxu0 0.0
        %2020 = vmatpush1.msra.mxu0 %v1879
        %2021 = vmatprep.subr.mxu0 0.0
        %2022 = vmatpush1.msra.mxu0 %v1880
        %2023 = vmatprep.subr.mxu0 0.0
        %2024 = vmatpush1.msra.mxu0 %v1881
        %2025 = vmatprep.subr.mxu0 0.0
        %2026 = vmatpush1.msra.mxu0 %v1882
        %2027 = vmatprep.subr.mxu0 0.0
        %2028 = vmatpush1.msra.mxu0 %v1883
        %2029 = vmatprep.subr.mxu0 0.0
        %2030 = vmatpush1.msra.mxu0 %v1884
        %2031 = vmatprep.subr.mxu0 0.0
        %2032 = vmatpush1.msra.mxu0 %v1885
        %2033 = vmatprep.subr.mxu0 0.0
        %2034 = vmatpush1.msra.mxu0 %v1886
        %2035 = vmatprep.subr.mxu0 0.0
        %2036 = vmatpush1.msra.mxu0 %v1887
        %2037 = vmatprep.subr.mxu0 0.0
        %2038 = vmatpush1.msra.mxu0 %v1888
        %2039 = vmatprep.subr.mxu0 0.0
        %2040 = vmatpush1.msra.mxu0 %v1889
        %2041 = vmatprep.subr.mxu0 0.0
        %2042 = vmatpush1.msra.mxu0 %v1890
        %2043 = vmatprep.subr.mxu0 0.0
        %2044 = vmatpush1.msra.mxu0 %v1891
        %2045 = vmatprep.subr.mxu0 0.0
        %2046 = vmatpush1.msra.mxu0 %v1892
        %2047 = vmatprep.subr.mxu0 0.0
        %2048 = vmatpush1.msra.mxu0 %v1893
        %2049 = vmatprep.subr.mxu0 0.0
        %2050 = vmatpush1.msra.mxu0 %v1894
        %2051 = vmatprep.subr.mxu0 0.0
        %2052 = vmatpush1.msra.mxu0 0.0
        %2053 = vmatprep.subr.mxu0 0.0
        %2054 = vmatpush1.msra.mxu0 0.0
        %2055 = vmatprep.subr.mxu0 0.0
        %2056 = vmatpush1.msra.mxu0 0.0
        %2057 = vmatprep.subr.mxu0 0.0
        %2058 = vmatpush1.msra.mxu0 0.0
        %2059 = vmatprep.subr.mxu0 0.0
        %2060 = vmatpush1.msra.mxu0 0.0
        %2061 = vmatprep.subr.mxu0 0.0
        %2062 = vmatpush1.msra.mxu0 0.0
        %2063 = vmatprep.subr.mxu0 0.0
        %2064 = vmatpush1.msra.mxu0 0.0
        %2065 = vmatprep.subr.mxu0 0.0
        %2066 = vmatpush1.msra.mxu0 0.0
        %2067 = vmatprep.subr.mxu0 0.0
        %2068 = vmatpush1.msra.mxu0 0.0
        %2069 = vmatprep.subr.mxu0 0.0
        %2070 = vmatpush1.msra.mxu0 0.0
        %2071 = vmatprep.subr.mxu0 0.0
        %2072 = vmatpush1.msra.mxu0 0.0
        %2073 = vmatprep.subr.mxu0 0.0
        %2074 = vmatpush1.msra.mxu0 0.0
        %2075 = vmatprep.subr.mxu0 0.0
        %2076 = vmatpush1.msra.mxu0 0.0
        %2077 = vmatprep.subr.mxu0 0.0
        %2078 = vmatpush1.msra.mxu0 0.0
        %2079 = vmatprep.mubr.f32.mxu0 %v2011
        %2080 = vmatmul.mubr.f32.gmra.mrb[0].mxu0 %v2003
        %v2081 = vpop.f32.mrb[0].mxu0
        %v2082 = vadd.f32 %v2009, %v2081
        %v2083 = vpop.f32.mrb[0].mxu0
        %2084 = vmatprep.mubr.f32.mxu0 %v2013
        %2085 = vmatmul.mubr.f32.gmra.mrb[0].mxu0 %v2004
        %v2086 = vpop.f32.mrb[0].mxu0
        %v2087 = vadd.f32 %v2009, %v2086
        %v2088 = vpop.f32.mrb[0].mxu0
        %2089 = vdwg.mxu0
        %v2090 = vmax.f32 %v2082, 0.0
        %v2091 = vmax.f32 %v2087, 0.0
        %s2092 = scalar_lea.vmem [#allocation6], %s1902
        %2093 = vst.msk [vmem:[%s2092] sm:$0xff] %vm1984, %v2090
        %vm2094 = vcmask 125952
        %2095 = vst.msk [vmem:[%s2092 + $0x8] sm:$0xf] %vm2094, %v2091
      $region141: #{unet_model_forward.1} parent=107 // loop_footer
        %s1901 = sadd.s32 1, %s1897
      $region142: #{unet_model_forward.1} parent=107 // loop_footer_branch
        %1896 = sbr.rel target = $region138
      $region143: #{unet_model_forward.1} parent=107 // loop_exit
        _
      %v2096 = vld [vmem:[%s9] sm:$0xff]
      %v2097 = vld [vmem:[%s9 + $0x8] sm:$0xff]
      %v2098 = vld [vmem:[%s9 + $0x10] sm:$0xff]
      %v2099 = vld [vmem:[%s9 + $0x18] sm:$0xff]
      %v2100 = vld [vmem:[%s9 + $0x20] sm:$0xff]
      %v2101 = vld [vmem:[%s9 + $0x28] sm:$0xff]
      %v2102 = vld [vmem:[%s9 + $0x30] sm:$0xff]
      %v2103 = vld [vmem:[%s9 + $0x38] sm:$0xff]
      %v2104 = vld [vmem:[%s10] sm:$0x1]
      %v2105 = vld [vmem:[%s20] sm:$0xff]
      %v2106 = vld [vmem:[%s20 + $0x8] sm:$0xff]
      %v2107 = vld [vmem:[%s20 + $0x10] sm:$0xff]
      %v2108 = vld [vmem:[%s21] sm:$0xff]
      %v2109 = vld [vmem:[%s21 + $0x8] sm:$0xff]
      %v2110 = vld [vmem:[%s21 + $0x10] sm:$0xff]
      loop: start=0, step=1, limit=12
      $region144: #{unet_model_forward.1} parent=107 // loop_pre_header
        _
      $region145: #{unet_model_forward.1} parent=107 // loop_header
        %s2112 = sphi 0, %s2116
        %p2113 = scmp.ge.s32.totalorder %s2112, 12
      $region146: #{unet_model_forward.1} parent=107 // loop_header_branch
        %2115 = sbr.rel (%p2113) target = $region150
      $region147: #{unet_model_forward.1} parent=107 // loop_body
        %s2117 = smul.u32 %s2112, 16
        %s2118 = scalar_lea.vmem [#allocation6], %s2117
        %v2119 = vld [vmem:[%s2118] sm:$0xff]
        %v2120 = vld [vmem:[%s2118 + $0x8] sm:$0xf]
        %vm2121 = vcmask 130048
        %v2123 = vsel %vm2121, %v2119, 0
        %v2126 = vsel %vm2121, %v2120, 0
        %2128 = vmatprep.subr.mxu0 0.0
        %2129 = vmatpush1.msra.mxu0 %v2096
        %2130 = vmatprep.subr.mxu0 0.0
        %2131 = vmatpush1.msra.mxu0 %v2097
        %2132 = vmatprep.subr.mxu0 0.0
        %2133 = vmatpush1.msra.mxu0 0.0
        %2134 = vmatprep.subr.mxu0 0.0
        %2135 = vmatpush1.msra.mxu0 0.0
        %2136 = vmatprep.subr.mxu0 0.0
        %2137 = vmatpush1.msra.mxu0 0.0
        %2138 = vmatprep.subr.mxu0 0.0
        %2139 = vmatpush1.msra.mxu0 0.0
        %2140 = vmatprep.subr.mxu0 0.0
        %2141 = vmatpush1.msra.mxu0 0.0
        %2142 = vmatprep.subr.mxu0 0.0
        %2143 = vmatpush1.msra.mxu0 0.0
        %2144 = vmatprep.subr.mxu0 0.0
        %2145 = vmatpush1.msra.mxu0 0.0
        %2146 = vmatprep.subr.mxu0 0.0
        %2147 = vmatpush1.msra.mxu0 0.0
        %2148 = vmatprep.subr.mxu0 0.0
        %2149 = vmatpush1.msra.mxu0 0.0
        %2150 = vmatprep.subr.mxu0 0.0
        %2151 = vmatpush1.msra.mxu0 0.0
        %2152 = vmatprep.subr.mxu0 0.0
        %2153 = vmatpush1.msra.mxu0 0.0
        %2154 = vmatprep.subr.mxu0 0.0
        %2155 = vmatpush1.msra.mxu0 0.0
        %2156 = vmatprep.subr.mxu0 0.0
        %2157 = vmatpush1.msra.mxu0 0.0
        %2158 = vmatprep.subr.mxu0 0.0
        %2159 = vmatpush1.msra.mxu0 0.0
        %2160 = vmatprep.subr.mxu0 0.0
        %2161 = vmatpush1.msra.mxu0 0.0
        %2162 = vmatprep.subr.mxu0 0.0
        %2163 = vmatpush1.msra.mxu0 0.0
        %2164 = vmatprep.subr.mxu0 0.0
        %2165 = vmatpush1.msra.mxu0 0.0
        %2166 = vmatprep.subr.mxu0 0.0
        %2167 = vmatpush1.msra.mxu0 0.0
        %2168 = vmatprep.subr.mxu0 0.0
        %2169 = vmatpush1.msra.mxu0 0.0
        %2170 = vmatprep.subr.mxu0 0.0
        %2171 = vmatpush1.msra.mxu0 0.0
        %2172 = vmatprep.subr.mxu0 0.0
        %2173 = vmatpush1.msra.mxu0 0.0
        %2174 = vmatprep.subr.mxu0 0.0
        %2175 = vmatpush1.msra.mxu0 0.0
        %2176 = vmatprep.subr.mxu0 0.0
        %2177 = vmatpush1.msra.mxu0 0.0
        %2178 = vmatprep.subr.mxu0 0.0
        %2179 = vmatpush1.msra.mxu0 0.0
        %2180 = vmatprep.subr.mxu0 0.0
        %2181 = vmatpush1.msra.mxu0 0.0
        %2182 = vmatprep.subr.mxu0 0.0
        %2183 = vmatpush1.msra.mxu0 0.0
        %2184 = vmatprep.subr.mxu0 0.0
        %2185 = vmatpush1.msra.mxu0 0.0
        %2186 = vmatprep.subr.mxu0 0.0
        %2187 = vmatpush1.msra.mxu0 0.0
        %2188 = vmatprep.subr.mxu0 0.0
        %2189 = vmatpush1.msra.mxu0 0.0
        %2190 = vmatprep.subr.mxu0 0.0
        %2191 = vmatpush1.msra.mxu0 0.0
        %2192 = vmatprep.mubr.f32.mxu0 0.0
        %2193 = vmatmul.mubr.f32.gmra.mrb[0].mxu0 %v2123
        %v2194 = vpop.f32.mrb[0].mxu0
        %v2195 = vadd.f32 0.0, %v2194
        %v2196 = vpop.f32.mrb[0].mxu0
        %2197 = vmatprep.mubr.f32.mxu0 0.0
        %2198 = vmatmul.mubr.f32.gmra.mrb[0].mxu0 %v2126
        %v2199 = vpop.f32.mrb[0].mxu0
        %v2200 = vadd.f32 0.0, %v2199
        %v2201 = vpop.f32.mrb[0].mxu0
        %2202 = vdwg.mxu0
        %2203 = vmatprep.subr.mxu0 0.0
        %2204 = vmatpush1.msra.mxu0 %v2098
        %2205 = vmatprep.subr.mxu0 0.0
        %2206 = vmatpush1.msra.mxu0 %v2099
        %2207 = vmatprep.subr.mxu0 0.0
        %2208 = vmatpush1.msra.mxu0 0.0
        %2209 = vmatprep.subr.mxu0 0.0
        %2210 = vmatpush1.msra.mxu0 0.0
        %2211 = vmatprep.subr.mxu0 0.0
        %2212 = vmatpush1.msra.mxu0 0.0
        %2213 = vmatprep.subr.mxu0 0.0
        %2214 = vmatpush1.msra.mxu0 0.0
        %2215 = vmatprep.subr.mxu0 0.0
        %2216 = vmatpush1.msra.mxu0 0.0
        %2217 = vmatprep.subr.mxu0 0.0
        %2218 = vmatpush1.msra.mxu0 0.0
        %2219 = vmatprep.subr.mxu0 0.0
        %2220 = vmatpush1.msra.mxu0 0.0
        %2221 = vmatprep.subr.mxu0 0.0
        %2222 = vmatpush1.msra.mxu0 0.0
        %2223 = vmatprep.subr.mxu0 0.0
        %2224 = vmatpush1.msra.mxu0 0.0
        %2225 = vmatprep.subr.mxu0 0.0
        %2226 = vmatpush1.msra.mxu0 0.0
        %2227 = vmatprep.subr.mxu0 0.0
        %2228 = vmatpush1.msra.mxu0 0.0
        %2229 = vmatprep.subr.mxu0 0.0
        %2230 = vmatpush1.msra.mxu0 0.0
        %2231 = vmatprep.subr.mxu0 0.0
        %2232 = vmatpush1.msra.mxu0 0.0
        %2233 = vmatprep.subr.mxu0 0.0
        %2234 = vmatpush1.msra.mxu0 0.0
        %2235 = vmatprep.subr.mxu0 0.0
        %2236 = vmatpush1.msra.mxu0 0.0
        %2237 = vmatprep.subr.mxu0 0.0
        %2238 = vmatpush1.msra.mxu0 0.0
        %2239 = vmatprep.subr.mxu0 0.0
        %2240 = vmatpush1.msra.mxu0 0.0
        %2241 = vmatprep.subr.mxu0 0.0
        %2242 = vmatpush1.msra.mxu0 0.0
        %2243 = vmatprep.subr.mxu0 0.0
        %2244 = vmatpush1.msra.mxu0 0.0
        %2245 = vmatprep.subr.mxu0 0.0
        %2246 = vmatpush1.msra.mxu0 0.0
        %2247 = vmatprep.subr.mxu0 0.0
        %2248 = vmatpush1.msra.mxu0 0.0
        %2249 = vmatprep.subr.mxu0 0.0
        %2250 = vmatpush1.msra.mxu0 0.0
        %2251 = vmatprep.subr.mxu0 0.0
        %2252 = vmatpush1.msra.mxu0 0.0
        %2253 = vmatprep.subr.mxu0 0.0
        %2254 = vmatpush1.msra.mxu0 0.0
        %2255 = vmatprep.subr.mxu0 0.0
        %2256 = vmatpush1.msra.mxu0 0.0
        %2257 = vmatprep.subr.mxu0 0.0
        %2258 = vmatpush1.msra.mxu0 0.0
        %2259 = vmatprep.subr.mxu0 0.0
        %2260 = vmatpush1.msra.mxu0 0.0
        %2261 = vmatprep.subr.mxu0 0.0
        %2262 = vmatpush1.msra.mxu0 0.0
        %2263 = vmatprep.subr.mxu0 0.0
        %2264 = vmatpush1.msra.mxu0 0.0
        %2265 = vmatprep.subr.mxu0 0.0
        %2266 = vmatpush1.msra.mxu0 0.0
        %2267 = vmatprep.mubr.f32.mxu0 0.0
        %2268 = vmatmul.mubr.f32.gmra.mrb[0].mxu0 %v2123
        %v2269 = vpop.f32.mrb[0].mxu0
        %v2270 = vadd.f32 0.0, %v2269
        %v2271 = vpop.f32.mrb[0].mxu0
        %2272 = vmatprep.mubr.f32.mxu0 0.0
        %2273 = vmatmul.mubr.f32.gmra.mrb[0].mxu0 %v2126
        %v2274 = vpop.f32.mrb[0].mxu0
        %v2275 = vadd.f32 0.0, %v2274
        %v2276 = vpop.f32.mrb[0].mxu0
        %2277 = vdwg.mxu0
        %vm2278 = vcmask 97280
        %v2280 = vsel %vm2278, %v2108, 0
        %v2283 = vsel %vm2278, %v2109, 0
        %v2286 = vsel %vm2278, %v2110, 0
        %vm2288 = vcmask 1043456
        %v2290 = vsel %vm2288, %v2275, 0
        %2292 = vmatprep.subr.mxu0 0.0
        %2293 = vmatpush1.msra.mxu0 %v2270
        %2294 = vmatprep.subr.mxu0 0.0
        %2295 = vmatpush1.msra.mxu0 %v2290
        %2296 = vmatprep.subr.mxu0 0.0
        %2297 = vmatpush1.msra.mxu0 0.0
        %2298 = vmatprep.subr.mxu0 0.0
        %2299 = vmatpush1.msra.mxu0 0.0
        %2300 = vmatprep.subr.mxu0 0.0
        %2301 = vmatpush1.msra.mxu0 0.0
        %2302 = vmatprep.subr.mxu0 0.0
        %2303 = vmatpush1.msra.mxu0 0.0
        %2304 = vmatprep.subr.mxu0 0.0
        %2305 = vmatpush1.msra.mxu0 0.0
        %2306 = vmatprep.subr.mxu0 0.0
        %2307 = vmatpush1.msra.mxu0 0.0
        %2308 = vmatprep.subr.mxu0 0.0
        %2309 = vmatpush1.msra.mxu0 0.0
        %2310 = vmatprep.subr.mxu0 0.0
        %2311 = vmatpush1.msra.mxu0 0.0
        %2312 = vmatprep.subr.mxu0 0.0
        %2313 = vmatpush1.msra.mxu0 0.0
        %2314 = vmatprep.subr.mxu0 0.0
        %2315 = vmatpush1.msra.mxu0 0.0
        %2316 = vmatprep.subr.mxu0 0.0
        %2317 = vmatpush1.msra.mxu0 0.0
        %2318 = vmatprep.subr.mxu0 0.0
        %2319 = vmatpush1.msra.mxu0 0.0
        %2320 = vmatprep.subr.mxu0 0.0
        %2321 = vmatpush1.msra.mxu0 0.0
        %2322 = vmatprep.subr.mxu0 0.0
        %2323 = vmatpush1.msra.mxu0 0.0
        %2324 = vmatprep.subr.mxu0 0.0
        %2325 = vmatpush1.msra.mxu0 0.0
        %2326 = vmatprep.subr.mxu0 0.0
        %2327 = vmatpush1.msra.mxu0 0.0
        %2328 = vmatprep.subr.mxu0 0.0
        %2329 = vmatpush1.msra.mxu0 0.0
        %2330 = vmatprep.subr.mxu0 0.0
        %2331 = vmatpush1.msra.mxu0 0.0
        %2332 = vmatprep.subr.mxu0 0.0
        %2333 = vmatpush1.msra.mxu0 0.0
        %2334 = vmatprep.subr.mxu0 0.0
        %2335 = vmatpush1.msra.mxu0 0.0
        %2336 = vmatprep.subr.mxu0 0.0
        %2337 = vmatpush1.msra.mxu0 0.0
        %2338 = vmatprep.subr.mxu0 0.0
        %2339 = vmatpush1.msra.mxu0 0.0
        %2340 = vmatprep.subr.mxu0 0.0
        %2341 = vmatpush1.msra.mxu0 0.0
        %2342 = vmatprep.subr.mxu0 0.0
        %2343 = vmatpush1.msra.mxu0 0.0
        %2344 = vmatprep.subr.mxu0 0.0
        %2345 = vmatpush1.msra.mxu0 0.0
        %2346 = vmatprep.subr.mxu0 0.0
        %2347 = vmatpush1.msra.mxu0 0.0
        %2348 = vmatprep.subr.mxu0 0.0
        %2349 = vmatpush1.msra.mxu0 0.0
        %2350 = vmatprep.subr.mxu0 0.0
        %2351 = vmatpush1.msra.mxu0 0.0
        %2352 = vmatprep.subr.mxu0 0.0
        %2353 = vmatpush1.msra.mxu0 0.0
        %2354 = vmatprep.subr.mxu0 0.0
        %2355 = vmatpush1.msra.mxu0 0.0
        %2356 = vmatprep.mubr.f32.mxu0 0.0
        %2357 = vmatmul.mubr.f32.gmra.mrb[0].mxu0 %v2280
        %v2358 = vpop.f32.mrb[0].mxu0
        %v2359 = vadd.f32 0.0, %v2358
        %v2360 = vpop.f32.mrb[0].mxu0
        %2361 = vmatprep.mubr.f32.mxu0 0.0
        %2362 = vmatmul.mubr.f32.gmra.mrb[0].mxu0 %v2283
        %v2363 = vpop.f32.mrb[0].mxu0
        %v2364 = vadd.f32 0.0, %v2363
        %v2365 = vpop.f32.mrb[0].mxu0
        %2366 = vmatprep.mubr.f32.mxu0 0.0
        %2367 = vmatmul.mubr.f32.gmra.mrb[0].mxu0 %v2286
        %v2368 = vpop.f32.mrb[0].mxu0
        %v2369 = vadd.f32 0.0, %v2368
        %v2370 = vpop.f32.mrb[0].mxu0
        %2371 = vdwg.mxu0
        %v2373 = vsel %vm2278, %v2105, 0
        %v2376 = vsel %vm2278, %v2106, 0
        %v2379 = vsel %vm2278, %v2107, 0
        %v2382 = vsel %vm2288, %v2200, 0
        %2384 = vmatprep.subr.mxu0 0.0
        %2385 = vmatpush1.msra.mxu0 %v2195
        %2386 = vmatprep.subr.mxu0 0.0
        %2387 = vmatpush1.msra.mxu0 %v2382
        %2388 = vmatprep.subr.mxu0 0.0
        %2389 = vmatpush1.msra.mxu0 0.0
        %2390 = vmatprep.subr.mxu0 0.0
        %2391 = vmatpush1.msra.mxu0 0.0
        %2392 = vmatprep.subr.mxu0 0.0
        %2393 = vmatpush1.msra.mxu0 0.0
        %2394 = vmatprep.subr.mxu0 0.0
        %2395 = vmatpush1.msra.mxu0 0.0
        %2396 = vmatprep.subr.mxu0 0.0
        %2397 = vmatpush1.msra.mxu0 0.0
        %2398 = vmatprep.subr.mxu0 0.0
        %2399 = vmatpush1.msra.mxu0 0.0
        %2400 = vmatprep.subr.mxu0 0.0
        %2401 = vmatpush1.msra.mxu0 0.0
        %2402 = vmatprep.subr.mxu0 0.0
        %2403 = vmatpush1.msra.mxu0 0.0
        %2404 = vmatprep.subr.mxu0 0.0
        %2405 = vmatpush1.msra.mxu0 0.0
        %2406 = vmatprep.subr.mxu0 0.0
        %2407 = vmatpush1.msra.mxu0 0.0
        %2408 = vmatprep.subr.mxu0 0.0
        %2409 = vmatpush1.msra.mxu0 0.0
        %2410 = vmatprep.subr.mxu0 0.0
        %2411 = vmatpush1.msra.mxu0 0.0
        %2412 = vmatprep.subr.mxu0 0.0
        %2413 = vmatpush1.msra.mxu0 0.0
        %2414 = vmatprep.subr.mxu0 0.0
        %2415 = vmatpush1.msra.mxu0 0.0
        %2416 = vmatprep.subr.mxu0 0.0
        %2417 = vmatpush1.msra.mxu0 0.0
        %2418 = vmatprep.subr.mxu0 0.0
        %2419 = vmatpush1.msra.mxu0 0.0
        %2420 = vmatprep.subr.mxu0 0.0
        %2421 = vmatpush1.msra.mxu0 0.0
        %2422 = vmatprep.subr.mxu0 0.0
        %2423 = vmatpush1.msra.mxu0 0.0
        %2424 = vmatprep.subr.mxu0 0.0
        %2425 = vmatpush1.msra.mxu0 0.0
        %2426 = vmatprep.subr.mxu0 0.0
        %2427 = vmatpush1.msra.mxu0 0.0
        %2428 = vmatprep.subr.mxu0 0.0
        %2429 = vmatpush1.msra.mxu0 0.0
        %2430 = vmatprep.subr.mxu0 0.0
        %2431 = vmatpush1.msra.mxu0 0.0
        %2432 = vmatprep.subr.mxu0 0.0
        %2433 = vmatpush1.msra.mxu0 0.0
        %2434 = vmatprep.subr.mxu0 0.0
        %2435 = vmatpush1.msra.mxu0 0.0
        %2436 = vmatprep.subr.mxu0 0.0
        %2437 = vmatpush1.msra.mxu0 0.0
        %2438 = vmatprep.subr.mxu0 0.0
        %2439 = vmatpush1.msra.mxu0 0.0
        %2440 = vmatprep.subr.mxu0 0.0
        %2441 = vmatpush1.msra.mxu0 0.0
        %2442 = vmatprep.subr.mxu0 0.0
        %2443 = vmatpush1.msra.mxu0 0.0
        %2444 = vmatprep.subr.mxu0 0.0
        %2445 = vmatpush1.msra.mxu0 0.0
        %2446 = vmatprep.subr.mxu0 0.0
        %2447 = vmatpush1.msra.mxu0 0.0
        %2448 = vmatprep.mubr.f32.mxu0 0.0
        %2449 = vmatmul.mubr.f32.gmra.mrb[0].mxu0 %v2373
        %v2450 = vpop.f32.mrb[0].mxu0
        %v2451 = vadd.f32 %v2359, %v2450
        %v2452 = vpop.f32.mrb[0].mxu0
        %2453 = vmatprep.mubr.f32.mxu0 0.0
        %2454 = vmatmul.mubr.f32.gmra.mrb[0].mxu0 %v2376
        %v2455 = vpop.f32.mrb[0].mxu0
        %v2456 = vadd.f32 %v2364, %v2455
        %v2457 = vpop.f32.mrb[0].mxu0
        %2458 = vmatprep.mubr.f32.mxu0 0.0
        %2459 = vmatmul.mubr.f32.gmra.mrb[0].mxu0 %v2379
        %v2460 = vpop.f32.mrb[0].mxu0
        %v2461 = vadd.f32 %v2369, %v2460
        %v2462 = vpop.f32.mrb[0].mxu0
        %2463 = vdwg.mxu0
        %v2465 = vlaneseq
        %v2466 = vshrl.u32 %v2465, 7
        %v2467 = vsub.s32 0, %v2466
        %v2468 = vrot.slane %v2104, %v2467
        %v2470 = vadd.f32 %v2451, %v2468
        %v2471 = vadd.f32 %v2456, %v2468
        %v2472 = vadd.f32 %v2461, %v2468
        %s2473 = smul.u32 %s2112, 2
        %s2474 = smul.u32 %s2473, 24
        %s2475 = scalar_lea.vmem [#allocation7], %s2474
        %2476 = vst.msk [vmem:[%s2475] sm:$0xff] %vm2121, %v2470
        %2477 = vst.msk [vmem:[%s2475 + $0x8] sm:$0xff] %vm2121, %v2471
        %2478 = vst.msk [vmem:[%s2475 + $0x10] sm:$0xff] %vm2121, %v2472
        %2479 = vmatprep.subr.mxu0 0.0
        %2480 = vmatpush1.msra.mxu0 %v2100
        %2481 = vmatprep.subr.mxu0 0.0
        %2482 = vmatpush1.msra.mxu0 %v2101
        %2483 = vmatprep.subr.mxu0 0.0
        %2484 = vmatpush1.msra.mxu0 0.0
        %2485 = vmatprep.subr.mxu0 0.0
        %2486 = vmatpush1.msra.mxu0 0.0
        %2487 = vmatprep.subr.mxu0 0.0
        %2488 = vmatpush1.msra.mxu0 0.0
        %2489 = vmatprep.subr.mxu0 0.0
        %2490 = vmatpush1.msra.mxu0 0.0
        %2491 = vmatprep.subr.mxu0 0.0
        %2492 = vmatpush1.msra.mxu0 0.0
        %2493 = vmatprep.subr.mxu0 0.0
        %2494 = vmatpush1.msra.mxu0 0.0
        %2495 = vmatprep.subr.mxu0 0.0
        %2496 = vmatpush1.msra.mxu0 0.0
        %2497 = vmatprep.subr.mxu0 0.0
        %2498 = vmatpush1.msra.mxu0 0.0
        %2499 = vmatprep.subr.mxu0 0.0
        %2500 = vmatpush1.msra.mxu0 0.0
        %2501 = vmatprep.subr.mxu0 0.0
        %2502 = vmatpush1.msra.mxu0 0.0
        %2503 = vmatprep.subr.mxu0 0.0
        %2504 = vmatpush1.msra.mxu0 0.0
        %2505 = vmatprep.subr.mxu0 0.0
        %2506 = vmatpush1.msra.mxu0 0.0
        %2507 = vmatprep.subr.mxu0 0.0
        %2508 = vmatpush1.msra.mxu0 0.0
        %2509 = vmatprep.subr.mxu0 0.0
        %2510 = vmatpush1.msra.mxu0 0.0
        %2511 = vmatprep.subr.mxu0 0.0
        %2512 = vmatpush1.msra.mxu0 0.0
        %2513 = vmatprep.subr.mxu0 0.0
        %2514 = vmatpush1.msra.mxu0 0.0
        %2515 = vmatprep.subr.mxu0 0.0
        %2516 = vmatpush1.msra.mxu0 0.0
        %2517 = vmatprep.subr.mxu0 0.0
        %2518 = vmatpush1.msra.mxu0 0.0
        %2519 = vmatprep.subr.mxu0 0.0
        %2520 = vmatpush1.msra.mxu0 0.0
        %2521 = vmatprep.subr.mxu0 0.0
        %2522 = vmatpush1.msra.mxu0 0.0
        %2523 = vmatprep.subr.mxu0 0.0
        %2524 = vmatpush1.msra.mxu0 0.0
        %2525 = vmatprep.subr.mxu0 0.0
        %2526 = vmatpush1.msra.mxu0 0.0
        %2527 = vmatprep.subr.mxu0 0.0
        %2528 = vmatpush1.msra.mxu0 0.0
        %2529 = vmatprep.subr.mxu0 0.0
        %2530 = vmatpush1.msra.mxu0 0.0
        %2531 = vmatprep.subr.mxu0 0.0
        %2532 = vmatpush1.msra.mxu0 0.0
        %2533 = vmatprep.subr.mxu0 0.0
        %2534 = vmatpush1.msra.mxu0 0.0
        %2535 = vmatprep.subr.mxu0 0.0
        %2536 = vmatpush1.msra.mxu0 0.0
        %2537 = vmatprep.subr.mxu0 0.0
        %2538 = vmatpush1.msra.mxu0 0.0
        %2539 = vmatprep.subr.mxu0 0.0
        %2540 = vmatpush1.msra.mxu0 0.0
        %2541 = vmatprep.subr.mxu0 0.0
        %2542 = vmatpush1.msra.mxu0 0.0
        %2543 = vmatprep.mubr.f32.mxu0 0.0
        %2544 = vmatmul.mubr.f32.gmra.mrb[0].mxu0 %v2123
        %v2545 = vpop.f32.mrb[0].mxu0
        %v2546 = vadd.f32 0.0, %v2545
        %v2547 = vpop.f32.mrb[0].mxu0
        %2548 = vmatprep.mubr.f32.mxu0 0.0
        %2549 = vmatmul.mubr.f32.gmra.mrb[0].mxu0 %v2126
        %v2550 = vpop.f32.mrb[0].mxu0
        %v2551 = vadd.f32 0.0, %v2550
        %v2552 = vpop.f32.mrb[0].mxu0
        %2553 = vdwg.mxu0
        %2554 = vmatprep.subr.mxu0 0.0
        %2555 = vmatpush1.msra.mxu0 %v2102
        %2556 = vmatprep.subr.mxu0 0.0
        %2557 = vmatpush1.msra.mxu0 %v2103
        %2558 = vmatprep.subr.mxu0 0.0
        %2559 = vmatpush1.msra.mxu0 0.0
        %2560 = vmatprep.subr.mxu0 0.0
        %2561 = vmatpush1.msra.mxu0 0.0
        %2562 = vmatprep.subr.mxu0 0.0
        %2563 = vmatpush1.msra.mxu0 0.0
        %2564 = vmatprep.subr.mxu0 0.0
        %2565 = vmatpush1.msra.mxu0 0.0
        %2566 = vmatprep.subr.mxu0 0.0
        %2567 = vmatpush1.msra.mxu0 0.0
        %2568 = vmatprep.subr.mxu0 0.0
        %2569 = vmatpush1.msra.mxu0 0.0
        %2570 = vmatprep.subr.mxu0 0.0
        %2571 = vmatpush1.msra.mxu0 0.0
        %2572 = vmatprep.subr.mxu0 0.0
        %2573 = vmatpush1.msra.mxu0 0.0
        %2574 = vmatprep.subr.mxu0 0.0
        %2575 = vmatpush1.msra.mxu0 0.0
        %2576 = vmatprep.subr.mxu0 0.0
        %2577 = vmatpush1.msra.mxu0 0.0
        %2578 = vmatprep.subr.mxu0 0.0
        %2579 = vmatpush1.msra.mxu0 0.0
        %2580 = vmatprep.subr.mxu0 0.0
        %2581 = vmatpush1.msra.mxu0 0.0
        %2582 = vmatprep.subr.mxu0 0.0
        %2583 = vmatpush1.msra.mxu0 0.0
        %2584 = vmatprep.subr.mxu0 0.0
        %2585 = vmatpush1.msra.mxu0 0.0
        %2586 = vmatprep.subr.mxu0 0.0
        %2587 = vmatpush1.msra.mxu0 0.0
        %2588 = vmatprep.subr.mxu0 0.0
        %2589 = vmatpush1.msra.mxu0 0.0
        %2590 = vmatprep.subr.mxu0 0.0
        %2591 = vmatpush1.msra.mxu0 0.0
        %2592 = vmatprep.subr.mxu0 0.0
        %2593 = vmatpush1.msra.mxu0 0.0
        %2594 = vmatprep.subr.mxu0 0.0
        %2595 = vmatpush1.msra.mxu0 0.0
        %2596 = vmatprep.subr.mxu0 0.0
        %2597 = vmatpush1.msra.mxu0 0.0
        %2598 = vmatprep.subr.mxu0 0.0
        %2599 = vmatpush1.msra.mxu0 0.0
        %2600 = vmatprep.subr.mxu0 0.0
        %2601 = vmatpush1.msra.mxu0 0.0
        %2602 = vmatprep.subr.mxu0 0.0
        %2603 = vmatpush1.msra.mxu0 0.0
        %2604 = vmatprep.subr.mxu0 0.0
        %2605 = vmatpush1.msra.mxu0 0.0
        %2606 = vmatprep.subr.mxu0 0.0
        %2607 = vmatpush1.msra.mxu0 0.0
        %2608 = vmatprep.subr.mxu0 0.0
        %2609 = vmatpush1.msra.mxu0 0.0
        %2610 = vmatprep.subr.mxu0 0.0
        %2611 = vmatpush1.msra.mxu0 0.0
        %2612 = vmatprep.subr.mxu0 0.0
        %2613 = vmatpush1.msra.mxu0 0.0
        %2614 = vmatprep.subr.mxu0 0.0
        %2615 = vmatpush1.msra.mxu0 0.0
        %2616 = vmatprep.subr.mxu0 0.0
        %2617 = vmatpush1.msra.mxu0 0.0
        %2618 = vmatprep.mubr.f32.mxu0 0.0
        %2619 = vmatmul.mubr.f32.gmra.mrb[0].mxu0 %v2123
        %v2620 = vpop.f32.mrb[0].mxu0
        %v2621 = vadd.f32 0.0, %v2620
        %v2622 = vpop.f32.mrb[0].mxu0
        %2623 = vmatprep.mubr.f32.mxu0 0.0
        %2624 = vmatmul.mubr.f32.gmra.mrb[0].mxu0 %v2126
        %v2625 = vpop.f32.mrb[0].mxu0
        %v2626 = vadd.f32 0.0, %v2625
        %v2627 = vpop.f32.mrb[0].mxu0
        %2628 = vdwg.mxu0
        %v2630 = vsel %vm2288, %v2626, 0
        %2632 = vmatprep.subr.mxu0 0.0
        %2633 = vmatpush1.msra.mxu0 %v2621
        %2634 = vmatprep.subr.mxu0 0.0
        %2635 = vmatpush1.msra.mxu0 %v2630
        %2636 = vmatprep.subr.mxu0 0.0
        %2637 = vmatpush1.msra.mxu0 0.0
        %2638 = vmatprep.subr.mxu0 0.0
        %2639 = vmatpush1.msra.mxu0 0.0
        %2640 = vmatprep.subr.mxu0 0.0
        %2641 = vmatpush1.msra.mxu0 0.0
        %2642 = vmatprep.subr.mxu0 0.0
        %2643 = vmatpush1.msra.mxu0 0.0
        %2644 = vmatprep.subr.mxu0 0.0
        %2645 = vmatpush1.msra.mxu0 0.0
        %2646 = vmatprep.subr.mxu0 0.0
        %2647 = vmatpush1.msra.mxu0 0.0
        %2648 = vmatprep.subr.mxu0 0.0
        %2649 = vmatpush1.msra.mxu0 0.0
        %2650 = vmatprep.subr.mxu0 0.0
        %2651 = vmatpush1.msra.mxu0 0.0
        %2652 = vmatprep.subr.mxu0 0.0
        %2653 = vmatpush1.msra.mxu0 0.0
        %2654 = vmatprep.subr.mxu0 0.0
        %2655 = vmatpush1.msra.mxu0 0.0
        %2656 = vmatprep.subr.mxu0 0.0
        %2657 = vmatpush1.msra.mxu0 0.0
        %2658 = vmatprep.subr.mxu0 0.0
        %2659 = vmatpush1.msra.mxu0 0.0
        %2660 = vmatprep.subr.mxu0 0.0
        %2661 = vmatpush1.msra.mxu0 0.0
        %2662 = vmatprep.subr.mxu0 0.0
        %2663 = vmatpush1.msra.mxu0 0.0
        %2664 = vmatprep.subr.mxu0 0.0
        %2665 = vmatpush1.msra.mxu0 0.0
        %2666 = vmatprep.subr.mxu0 0.0
        %2667 = vmatpush1.msra.mxu0 0.0
        %2668 = vmatprep.subr.mxu0 0.0
        %2669 = vmatpush1.msra.mxu0 0.0
        %2670 = vmatprep.subr.mxu0 0.0
        %2671 = vmatpush1.msra.mxu0 0.0
        %2672 = vmatprep.subr.mxu0 0.0
        %2673 = vmatpush1.msra.mxu0 0.0
        %2674 = vmatprep.subr.mxu0 0.0
        %2675 = vmatpush1.msra.mxu0 0.0
        %2676 = vmatprep.subr.mxu0 0.0
        %2677 = vmatpush1.msra.mxu0 0.0
        %2678 = vmatprep.subr.mxu0 0.0
        %2679 = vmatpush1.msra.mxu0 0.0
        %2680 = vmatprep.subr.mxu0 0.0
        %2681 = vmatpush1.msra.mxu0 0.0
        %2682 = vmatprep.subr.mxu0 0.0
        %2683 = vmatpush1.msra.mxu0 0.0
        %2684 = vmatprep.subr.mxu0 0.0
        %2685 = vmatpush1.msra.mxu0 0.0
        %2686 = vmatprep.subr.mxu0 0.0
        %2687 = vmatpush1.msra.mxu0 0.0
        %2688 = vmatprep.subr.mxu0 0.0
        %2689 = vmatpush1.msra.mxu0 0.0
        %2690 = vmatprep.subr.mxu0 0.0
        %2691 = vmatpush1.msra.mxu0 0.0
        %2692 = vmatprep.subr.mxu0 0.0
        %2693 = vmatpush1.msra.mxu0 0.0
        %2694 = vmatprep.subr.mxu0 0.0
        %2695 = vmatpush1.msra.mxu0 0.0
        %2696 = vmatprep.mubr.f32.mxu0 0.0
        %2697 = vmatmul.mubr.f32.gmra.mrb[0].mxu0 %v2280
        %v2698 = vpop.f32.mrb[0].mxu0
        %v2699 = vadd.f32 0.0, %v2698
        %v2700 = vpop.f32.mrb[0].mxu0
        %2701 = vmatprep.mubr.f32.mxu0 0.0
        %2702 = vmatmul.mubr.f32.gmra.mrb[0].mxu0 %v2283
        %v2703 = vpop.f32.mrb[0].mxu0
        %v2704 = vadd.f32 0.0, %v2703
        %v2705 = vpop.f32.mrb[0].mxu0
        %2706 = vmatprep.mubr.f32.mxu0 0.0
        %2707 = vmatmul.mubr.f32.gmra.mrb[0].mxu0 %v2286
        %v2708 = vpop.f32.mrb[0].mxu0
        %v2709 = vadd.f32 0.0, %v2708
        %v2710 = vpop.f32.mrb[0].mxu0
        %2711 = vdwg.mxu0
        %v2713 = vsel %vm2288, %v2551, 0
        %2715 = vmatprep.subr.mxu0 0.0
        %2716 = vmatpush1.msra.mxu0 %v2546
        %2717 = vmatprep.subr.mxu0 0.0
        %2718 = vmatpush1.msra.mxu0 %v2713
        %2719 = vmatprep.subr.mxu0 0.0
        %2720 = vmatpush1.msra.mxu0 0.0
        %2721 = vmatprep.subr.mxu0 0.0
        %2722 = vmatpush1.msra.mxu0 0.0
        %2723 = vmatprep.subr.mxu0 0.0
        %2724 = vmatpush1.msra.mxu0 0.0
        %2725 = vmatprep.subr.mxu0 0.0
        %2726 = vmatpush1.msra.mxu0 0.0
        %2727 = vmatprep.subr.mxu0 0.0
        %2728 = vmatpush1.msra.mxu0 0.0
        %2729 = vmatprep.subr.mxu0 0.0
        %2730 = vmatpush1.msra.mxu0 0.0
        %2731 = vmatprep.subr.mxu0 0.0
        %2732 = vmatpush1.msra.mxu0 0.0
        %2733 = vmatprep.subr.mxu0 0.0
        %2734 = vmatpush1.msra.mxu0 0.0
        %2735 = vmatprep.subr.mxu0 0.0
        %2736 = vmatpush1.msra.mxu0 0.0
        %2737 = vmatprep.subr.mxu0 0.0
        %2738 = vmatpush1.msra.mxu0 0.0
        %2739 = vmatprep.subr.mxu0 0.0
        %2740 = vmatpush1.msra.mxu0 0.0
        %2741 = vmatprep.subr.mxu0 0.0
        %2742 = vmatpush1.msra.mxu0 0.0
        %2743 = vmatprep.subr.mxu0 0.0
        %2744 = vmatpush1.msra.mxu0 0.0
        %2745 = vmatprep.subr.mxu0 0.0
        %2746 = vmatpush1.msra.mxu0 0.0
        %2747 = vmatprep.subr.mxu0 0.0
        %2748 = vmatpush1.msra.mxu0 0.0
        %2749 = vmatprep.subr.mxu0 0.0
        %2750 = vmatpush1.msra.mxu0 0.0
        %2751 = vmatprep.subr.mxu0 0.0
        %2752 = vmatpush1.msra.mxu0 0.0
        %2753 = vmatprep.subr.mxu0 0.0
        %2754 = vmatpush1.msra.mxu0 0.0
        %2755 = vmatprep.subr.mxu0 0.0
        %2756 = vmatpush1.msra.mxu0 0.0
        %2757 = vmatprep.subr.mxu0 0.0
        %2758 = vmatpush1.msra.mxu0 0.0
        %2759 = vmatprep.subr.mxu0 0.0
        %2760 = vmatpush1.msra.mxu0 0.0
        %2761 = vmatprep.subr.mxu0 0.0
        %2762 = vmatpush1.msra.mxu0 0.0
        %2763 = vmatprep.subr.mxu0 0.0
        %2764 = vmatpush1.msra.mxu0 0.0
        %2765 = vmatprep.subr.mxu0 0.0
        %2766 = vmatpush1.msra.mxu0 0.0
        %2767 = vmatprep.subr.mxu0 0.0
        %2768 = vmatpush1.msra.mxu0 0.0
        %2769 = vmatprep.subr.mxu0 0.0
        %2770 = vmatpush1.msra.mxu0 0.0
        %2771 = vmatprep.subr.mxu0 0.0
        %2772 = vmatpush1.msra.mxu0 0.0
        %2773 = vmatprep.subr.mxu0 0.0
        %2774 = vmatpush1.msra.mxu0 0.0
        %2775 = vmatprep.subr.mxu0 0.0
        %2776 = vmatpush1.msra.mxu0 0.0
        %2777 = vmatprep.subr.mxu0 0.0
        %2778 = vmatpush1.msra.mxu0 0.0
        %2779 = vmatprep.mubr.f32.mxu0 0.0
        %2780 = vmatmul.mubr.f32.gmra.mrb[0].mxu0 %v2373
        %v2781 = vpop.f32.mrb[0].mxu0
        %v2782 = vadd.f32 %v2699, %v2781
        %v2783 = vpop.f32.mrb[0].mxu0
        %2784 = vmatprep.mubr.f32.mxu0 0.0
        %2785 = vmatmul.mubr.f32.gmra.mrb[0].mxu0 %v2376
        %v2786 = vpop.f32.mrb[0].mxu0
        %v2787 = vadd.f32 %v2704, %v2786
        %v2788 = vpop.f32.mrb[0].mxu0
        %2789 = vmatprep.mubr.f32.mxu0 0.0
        %2790 = vmatmul.mubr.f32.gmra.mrb[0].mxu0 %v2379
        %v2791 = vpop.f32.mrb[0].mxu0
        %v2792 = vadd.f32 %v2709, %v2791
        %v2793 = vpop.f32.mrb[0].mxu0
        %2794 = vdwg.mxu0
        %v2795 = vadd.f32 %v2782, %v2468
        %v2796 = vadd.f32 %v2787, %v2468
        %v2797 = vadd.f32 %v2792, %v2468
        %s2798 = sadd.s32 %s2473, 1
        %s2799 = smul.u32 %s2798, 24
        %s2800 = scalar_lea.vmem [#allocation7], %s2799
        %2801 = vst.msk [vmem:[%s2800] sm:$0xff] %vm2121, %v2795
        %2802 = vst.msk [vmem:[%s2800 + $0x8] sm:$0xff] %vm2121, %v2796
        %2803 = vst.msk [vmem:[%s2800 + $0x10] sm:$0xff] %vm2121, %v2797
      $region148: #{unet_model_forward.1} parent=107 // loop_footer
        %s2116 = sadd.s32 1, %s2112
      $region149: #{unet_model_forward.1} parent=107 // loop_footer_branch
        %2111 = sbr.rel target = $region145
      $region150: #{unet_model_forward.1} parent=107 // loop_exit
        _
      %v2804 = vld [vmem:[%s11] sm:$0xff]
      %v2805 = vld [vmem:[%s11 + $0x8] sm:$0xff]
      %v2806 = vld [vmem:[%s11 + $0x10] sm:$0xff]
      %v2807 = vld [vmem:[%s11 + $0x18] sm:$0xff]
      %v2808 = vld [vmem:[%s11 + $0x20] sm:$0xff]
      %v2809 = vld [vmem:[%s11 + $0x28] sm:$0xff]
      %v2810 = vld [vmem:[%s11 + $0x30] sm:$0xff]
      %v2811 = vld [vmem:[%s11 + $0x38] sm:$0xff]
      %v2812 = vld [vmem:[%s11 + $0x40] sm:$0xff]
      %v2813 = vld [vmem:[%s12] sm:$0xff]
      %v2814 = vld [vmem:[%s12 + $0x8] sm:$0xff]
      %v2815 = vld [vmem:[%s12 + $0x10] sm:$0xff]
      %v2816 = vld [vmem:[%s12 + $0x18] sm:$0xff]
      %v2817 = vld [vmem:[%s12 + $0x20] sm:$0xff]
      %v2818 = vld [vmem:[%s12 + $0x28] sm:$0xff]
      %v2819 = vld [vmem:[%s12 + $0x30] sm:$0xff]
      %v2820 = vld [vmem:[%s12 + $0x38] sm:$0xff]
      %v2821 = vld [vmem:[%s12 + $0x40] sm:$0xff]
      %v2822 = vld [vmem:[%s12 + $0x48] sm:$0xff]
      %v2823 = vld [vmem:[%s12 + $0x50] sm:$0xff]
      %v2824 = vld [vmem:[%s12 + $0x58] sm:$0xff]
      %v2825 = vld [vmem:[%s12 + $0x60] sm:$0xff]
      %v2826 = vld [vmem:[%s12 + $0x68] sm:$0xff]
      %v2827 = vld [vmem:[%s12 + $0x70] sm:$0xff]
      %v2828 = vld [vmem:[%s12 + $0x78] sm:$0xff]
      %v2829 = vld [vmem:[%s12 + $0x80] sm:$0xff]
      %v2830 = vld [vmem:[%s12 + $0x88] sm:$0xff]
      %v2831 = vld [vmem:[%s13] sm:$0x1]
      loop: start=0, step=1, limit=22
      $region151: #{unet_model_forward.1} parent=107 // loop_pre_header
        _
      $region152: #{unet_model_forward.1} parent=107 // loop_header
        %s2833 = sphi 0, %s2837
        %p2834 = scmp.ge.s32.totalorder %s2833, 22
      $region153: #{unet_model_forward.1} parent=107 // loop_header_branch
        %2836 = sbr.rel (%p2834) target = $region157
      $region154: #{unet_model_forward.1} parent=107 // loop_body
        %s2838 = sadd.s32 %s2833, 4
        %s2839 = smul.u32 %s2838, 32
        %s2840 = scalar_lea.vmem [#allocation3], %s2839
        %v2841 = vld [vmem:[%s2840] sm:$0xff]
        %v2842 = vld [vmem:[%s2840 + $0x8] sm:$0xff]
        %v2843 = vld [vmem:[%s2840 + $0x10] sm:$0xff]
        %v2844 = vld [vmem:[%s2840 + $0x18] sm:$0xff]
        %s2845 = sadd.s32 %s2833, 5
        %s2846 = smul.u32 %s2845, 32
        %s2847 = scalar_lea.vmem [#allocation3], %s2846
        %v2848 = vld [vmem:[%s2847] sm:$0xff]
        %v2849 = vld [vmem:[%s2847 + $0x8] sm:$0xff]
        %v2850 = vld [vmem:[%s2847 + $0x10] sm:$0xff]
        %v2851 = vld [vmem:[%s2847 + $0x18] sm:$0xff]
        %s2852 = sadd.s32 %s2833, 6
        %s2853 = smul.u32 %s2852, 32
        %s2854 = scalar_lea.vmem [#allocation3], %s2853
        %v2855 = vld [vmem:[%s2854] sm:$0xff]
        %v2856 = vld [vmem:[%s2854 + $0x8] sm:$0xff]
        %v2857 = vld [vmem:[%s2854 + $0x10] sm:$0xff]
        %v2858 = vld [vmem:[%s2854 + $0x18] sm:$0xff]
        %vm2863 = vcmask 1046528
        %v2864 = vrot.slane %v2841, 1
        %v2865 = vrot.slane %v2842, 1
        %v2866 = vsel %vm2863, %v2864, %v2865
        %v2867 = vrot.slane %v2843, 1
        %v2868 = vsel %vm2863, %v2865, %v2867
        %v2869 = vrot.slane %v2844, 1
        %v2870 = vsel %vm2863, %v2867, %v2869
        %2871 = vrot.lane.b32.xlu0 %v2866, 8
        %v2872 = vpop.permute.xlu0 %2871
        %2873 = vrot.lane.b32.xlu0 %v2868, 8
        %v2874 = vpop.permute.xlu0 %2873
        %2875 = vrot.lane.b32.xlu0 %v2870, 8
        %v2876 = vpop.permute.xlu0 %2875
        %2877 = vrot.lane.b32.xlu0 %v2869, 8
        %v2878 = vpop.permute.xlu0 %2877
        %vm2883 = vcmask 1045504
        %v2884 = vrot.slane %v2841, 2
        %v2885 = vrot.slane %v2842, 2
        %v2886 = vsel %vm2883, %v2884, %v2885
        %v2887 = vrot.slane %v2843, 2
        %v2888 = vsel %vm2883, %v2885, %v2887
        %v2889 = vrot.slane %v2844, 2
        %v2890 = vsel %vm2883, %v2887, %v2889
        %2891 = vrot.lane.b32.xlu0 %v2886, 16
        %v2892 = vpop.permute.xlu0 %2891
        %2893 = vrot.lane.b32.xlu0 %v2888, 16
        %v2894 = vpop.permute.xlu0 %2893
        %2895 = vrot.lane.b32.xlu0 %v2890, 16
        %v2896 = vpop.permute.xlu0 %2895
        %2897 = vrot.lane.b32.xlu0 %v2889, 16
        %v2898 = vpop.permute.xlu0 %2897
        %2907 = vrot.lane.b32.xlu0 %v2848, 24
        %v2908 = vpop.permute.xlu0 %2907
        %2909 = vrot.lane.b32.xlu0 %v2849, 24
        %v2910 = vpop.permute.xlu0 %2909
        %2911 = vrot.lane.b32.xlu0 %v2850, 24
        %v2912 = vpop.permute.xlu0 %2911
        %2913 = vrot.lane.b32.xlu0 %v2851, 24
        %v2914 = vpop.permute.xlu0 %2913
        %v2919 = vrot.slane %v2848, 1
        %v2920 = vrot.slane %v2849, 1
        %v2921 = vsel %vm2863, %v2919, %v2920
        %v2922 = vrot.slane %v2850, 1
        %v2923 = vsel %vm2863, %v2920, %v2922
        %v2924 = vrot.slane %v2851, 1
        %v2925 = vsel %vm2863, %v2922, %v2924
        %2926 = vrot.lane.b32.xlu0 %v2921, 32
        %v2927 = vpop.permute.xlu0 %2926
        %2928 = vrot.lane.b32.xlu0 %v2923, 32
        %v2929 = vpop.permute.xlu0 %2928
        %2930 = vrot.lane.b32.xlu0 %v2925, 32
        %v2931 = vpop.permute.xlu0 %2930
        %2932 = vrot.lane.b32.xlu0 %v2924, 32
        %v2933 = vpop.permute.xlu0 %2932
        %v2938 = vrot.slane %v2848, 2
        %v2939 = vrot.slane %v2849, 2
        %v2940 = vsel %vm2883, %v2938, %v2939
        %v2941 = vrot.slane %v2850, 2
        %v2942 = vsel %vm2883, %v2939, %v2941
        %v2943 = vrot.slane %v2851, 2
        %v2944 = vsel %vm2883, %v2941, %v2943
        %2945 = vrot.lane.b32.xlu0 %v2940, 40
        %v2946 = vpop.permute.xlu0 %2945
        %2947 = vrot.lane.b32.xlu0 %v2942, 40
        %v2948 = vpop.permute.xlu0 %2947
        %2949 = vrot.lane.b32.xlu0 %v2944, 40
        %v2950 = vpop.permute.xlu0 %2949
        %2951 = vrot.lane.b32.xlu0 %v2943, 40
        %v2952 = vpop.permute.xlu0 %2951
        %2961 = vrot.lane.b32.xlu0 %v2855, 48
        %v2962 = vpop.permute.xlu0 %2961
        %2963 = vrot.lane.b32.xlu0 %v2856, 48
        %v2964 = vpop.permute.xlu0 %2963
        %2965 = vrot.lane.b32.xlu0 %v2857, 48
        %v2966 = vpop.permute.xlu0 %2965
        %2967 = vrot.lane.b32.xlu0 %v2858, 48
        %v2968 = vpop.permute.xlu0 %2967
        %v2973 = vrot.slane %v2855, 1
        %v2974 = vrot.slane %v2856, 1
        %v2975 = vsel %vm2863, %v2973, %v2974
        %v2976 = vrot.slane %v2857, 1
        %v2977 = vsel %vm2863, %v2974, %v2976
        %v2978 = vrot.slane %v2858, 1
        %v2979 = vsel %vm2863, %v2976, %v2978
        %2980 = vrot.lane.b32.xlu0 %v2975, 56
        %v2981 = vpop.permute.xlu0 %2980
        %2982 = vrot.lane.b32.xlu0 %v2977, 56
        %v2983 = vpop.permute.xlu0 %2982
        %2984 = vrot.lane.b32.xlu0 %v2979, 56
        %v2985 = vpop.permute.xlu0 %2984
        %2986 = vrot.lane.b32.xlu0 %v2978, 56
        %v2987 = vpop.permute.xlu0 %2986
        %v2992 = vrot.slane %v2855, 2
        %v2993 = vrot.slane %v2856, 2
        %v2994 = vsel %vm2883, %v2992, %v2993
        %v2995 = vrot.slane %v2857, 2
        %v2996 = vsel %vm2883, %v2993, %v2995
        %v2997 = vrot.slane %v2858, 2
        %v2998 = vsel %vm2883, %v2995, %v2997
        %2999 = vrot.lane.b32.xlu0 %v2994, 64
        %v3000 = vpop.permute.xlu0 %2999
        %3001 = vrot.lane.b32.xlu0 %v2996, 64
        %v3002 = vpop.permute.xlu0 %3001
        %3003 = vrot.lane.b32.xlu0 %v2998, 64
        %v3004 = vpop.permute.xlu0 %3003
        %3005 = vrot.lane.b32.xlu0 %v2997, 64
        %v3006 = vpop.permute.xlu0 %3005
        %vm3011 = vcmask 64512
        %v3012 = vsel %vm3011, %v2841, %v2872
        %v3013 = vsel %vm3011, %v2842, %v2874
        %v3014 = vsel %vm3011, %v2843, %v2876
        %v3015 = vsel %vm3011, %v2844, %v2878
        %vm3016 = vcmask 130048
        %v3017 = vsel %vm3016, %v3012, %v2892
        %v3018 = vsel %vm3016, %v3013, %v2894
        %v3019 = vsel %vm3016, %v3014, %v2896
        %v3020 = vsel %vm3016, %v3015, %v2898
        %vm3021 = vcmask 195584
        %v3022 = vsel %vm3021, %v3017, %v2908
        %v3023 = vsel %vm3021, %v3018, %v2910
        %v3024 = vsel %vm3021, %v3019, %v2912
        %v3025 = vsel %vm3021, %v3020, %v2914
        %vm3026 = vcmask 261120
        %v3027 = vsel %vm3026, %v3022, %v2927
        %v3028 = vsel %vm3026, %v3023, %v2929
        %v3029 = vsel %vm3026, %v3024, %v2931
        %v3030 = vsel %vm3026, %v3025, %v2933
        %vm3031 = vcmask 326656
        %v3032 = vsel %vm3031, %v3027, %v2946
        %v3033 = vsel %vm3031, %v3028, %v2948
        %v3034 = vsel %vm3031, %v3029, %v2950
        %v3035 = vsel %vm3031, %v3030, %v2952
        %vm3036 = vcmask 392192
        %v3037 = vsel %vm3036, %v3032, %v2962
        %v3038 = vsel %vm3036, %v3033, %v2964
        %v3039 = vsel %vm3036, %v3034, %v2966
        %v3040 = vsel %vm3036, %v3035, %v2968
        %vm3041 = vcmask 457728
        %v3042 = vsel %vm3041, %v3037, %v2981
        %v3043 = vsel %vm3041, %v3038, %v2983
        %v3044 = vsel %vm3041, %v3039, %v2985
        %v3045 = vsel %vm3041, %v3040, %v2987
        %vm3046 = vcmask 523264
        %v3047 = vsel %vm3046, %v3042, %v3000
        %v3048 = vsel %vm3046, %v3043, %v3002
        %v3049 = vsel %vm3046, %v3044, %v3004
        %v3050 = vsel %vm3046, %v3045, %v3006
        %s3051 = smul.u32 %s2833, 24
        %s3052 = scalar_lea.vmem [#allocation7], %s3051
        %v3053 = vld [vmem:[%s3052] sm:$0xff]
        %v3054 = vld [vmem:[%s3052 + $0x8] sm:$0xff]
        %v3055 = vld [vmem:[%s3052 + $0x10] sm:$0xff]
        %s3056 = sadd.s32 %s2833, 1
        %s3057 = smul.u32 %s3056, 24
        %s3058 = scalar_lea.vmem [#allocation7], %s3057
        %v3059 = vld [vmem:[%s3058] sm:$0xff]
        %v3060 = vld [vmem:[%s3058 + $0x8] sm:$0xff]
        %v3061 = vld [vmem:[%s3058 + $0x10] sm:$0xff]
        %s3062 = sadd.s32 %s2833, 2
        %s3063 = smul.u32 %s3062, 24
        %s3064 = scalar_lea.vmem [#allocation7], %s3063
        %v3065 = vld [vmem:[%s3064] sm:$0xff]
        %v3066 = vld [vmem:[%s3064 + $0x8] sm:$0xff]
        %v3067 = vld [vmem:[%s3064 + $0x10] sm:$0xff]
        %v3071 = vrot.slane %v3053, 1
        %v3072 = vrot.slane %v3054, 1
        %v3073 = vsel %vm2863, %v3071, %v3072
        %v3074 = vrot.slane %v3055, 1
        %v3075 = vsel %vm2863, %v3072, %v3074
        %3076 = vrot.lane.b32.xlu0 %v3073, 16
        %v3077 = vpop.permute.xlu0 %3076
        %3078 = vrot.lane.b32.xlu0 %v3075, 16
        %v3079 = vpop.permute.xlu0 %3078
        %3080 = vrot.lane.b32.xlu0 %v3074, 16
        %v3081 = vpop.permute.xlu0 %3080
        %v3085 = vrot.slane %v3053, 2
        %v3086 = vrot.slane %v3054, 2
        %v3087 = vsel %vm2883, %v3085, %v3086
        %v3088 = vrot.slane %v3055, 2
        %v3089 = vsel %vm2883, %v3086, %v3088
        %3090 = vrot.lane.b32.xlu0 %v3087, 32
        %v3091 = vpop.permute.xlu0 %3090
        %3092 = vrot.lane.b32.xlu0 %v3089, 32
        %v3093 = vpop.permute.xlu0 %3092
        %3094 = vrot.lane.b32.xlu0 %v3088, 32
        %v3095 = vpop.permute.xlu0 %3094
        %3102 = vrot.lane.b32.xlu0 %v3059, 48
        %v3103 = vpop.permute.xlu0 %3102
        %3104 = vrot.lane.b32.xlu0 %v3060, 48
        %v3105 = vpop.permute.xlu0 %3104
        %3106 = vrot.lane.b32.xlu0 %v3061, 48
        %v3107 = vpop.permute.xlu0 %3106
        %v3111 = vrot.slane %v3059, 1
        %v3112 = vrot.slane %v3060, 1
        %v3113 = vsel %vm2863, %v3111, %v3112
        %v3114 = vrot.slane %v3061, 1
        %v3115 = vsel %vm2863, %v3112, %v3114
        %3116 = vrot.lane.b32.xlu0 %v3113, 64
        %v3117 = vpop.permute.xlu0 %3116
        %3118 = vrot.lane.b32.xlu0 %v3115, 64
        %v3119 = vpop.permute.xlu0 %3118
        %3120 = vrot.lane.b32.xlu0 %v3114, 64
        %v3121 = vpop.permute.xlu0 %3120
        %v3125 = vrot.slane %v3059, 2
        %v3126 = vrot.slane %v3060, 2
        %v3127 = vsel %vm2883, %v3125, %v3126
        %v3128 = vrot.slane %v3061, 2
        %v3129 = vsel %vm2883, %v3126, %v3128
        %3130 = vrot.lane.b32.xlu0 %v3127, 80
        %v3131 = vpop.permute.xlu0 %3130
        %3132 = vrot.lane.b32.xlu0 %v3129, 80
        %v3133 = vpop.permute.xlu0 %3132
        %3134 = vrot.lane.b32.xlu0 %v3128, 80
        %v3135 = vpop.permute.xlu0 %3134
        %3142 = vrot.lane.b32.xlu0 %v3065, 96
        %v3143 = vpop.permute.xlu0 %3142
        %3144 = vrot.lane.b32.xlu0 %v3066, 96
        %v3145 = vpop.permute.xlu0 %3144
        %3146 = vrot.lane.b32.xlu0 %v3067, 96
        %v3147 = vpop.permute.xlu0 %3146
        %v3151 = vrot.slane %v3065, 1
        %v3152 = vrot.slane %v3066, 1
        %v3153 = vsel %vm2863, %v3151, %v3152
        %v3154 = vrot.slane %v3067, 1
        %v3155 = vsel %vm2863, %v3152, %v3154
        %3156 = vrot.lane.b32.xlu0 %v3153, 112
        %v3157 = vpop.permute.xlu0 %3156
        %3158 = vrot.lane.b32.xlu0 %v3155, 112
        %v3159 = vpop.permute.xlu0 %3158
        %3160 = vrot.lane.b32.xlu0 %v3154, 112
        %v3161 = vpop.permute.xlu0 %3160
        %v3165 = vrot.slane %v3065, 2
        %v3166 = vrot.slane %v3066, 2
        %v3167 = vsel %vm2883, %v3165, %v3166
        %v3168 = vrot.slane %v3067, 2
        %v3169 = vsel %vm2883, %v3166, %v3168
        %v3170 = vsel %vm3016, %v3053, %v3077
        %v3171 = vsel %vm3016, %v3054, %v3079
        %v3172 = vsel %vm3016, %v3055, %v3081
        %v3173 = vsel %vm3026, %v3170, %v3091
        %v3174 = vsel %vm3026, %v3171, %v3093
        %v3175 = vsel %vm3026, %v3172, %v3095
        %v3176 = vsel %vm3036, %v3173, %v3103
        %v3177 = vsel %vm3036, %v3174, %v3105
        %v3178 = vsel %vm3036, %v3175, %v3107
        %v3179 = vsel %vm3046, %v3176, %v3117
        %v3180 = vsel %vm3046, %v3177, %v3119
        %v3181 = vsel %vm3046, %v3178, %v3121
        %vm3182 = vcmask 654336
        %v3183 = vsel %vm3182, %v3179, %v3131
        %v3184 = vsel %vm3182, %v3180, %v3133
        %v3185 = vsel %vm3182, %v3181, %v3135
        %vm3186 = vcmask 785408
        %v3187 = vsel %vm3186, %v3183, %v3143
        %v3188 = vsel %vm3186, %v3184, %v3145
        %v3189 = vsel %vm3186, %v3185, %v3147
        %vm3190 = vcmask 916480
        %v3191 = vsel %vm3190, %v3187, %v3157
        %v3192 = vsel %vm3190, %v3188, %v3159
        %v3193 = vsel %vm3190, %v3189, %v3161
        %v3194 = vsel %vm3016, %v3167, 0
        %v3196 = vsel %vm3016, %v3169, 0
        %v3198 = vsel %vm3016, %v3168, 0
        %3200 = vmatprep.subr.mxu0 0.0
        %3201 = vmatpush1.msra.mxu0 %v2813
        %3202 = vmatprep.subr.mxu0 0.0
        %3203 = vmatpush1.msra.mxu0 %v2814
        %3204 = vmatprep.subr.mxu0 0.0
        %3205 = vmatpush1.msra.mxu0 %v2815
        %3206 = vmatprep.subr.mxu0 0.0
        %3207 = vmatpush1.msra.mxu0 %v2816
        %3208 = vmatprep.subr.mxu0 0.0
        %3209 = vmatpush1.msra.mxu0 %v2817
        %3210 = vmatprep.subr.mxu0 0.0
        %3211 = vmatpush1.msra.mxu0 %v2818
        %3212 = vmatprep.subr.mxu0 0.0
        %3213 = vmatpush1.msra.mxu0 %v2819
        %3214 = vmatprep.subr.mxu0 0.0
        %3215 = vmatpush1.msra.mxu0 %v2820
        %3216 = vmatprep.subr.mxu0 0.0
        %3217 = vmatpush1.msra.mxu0 %v2821
        %3218 = vmatprep.subr.mxu0 0.0
        %3219 = vmatpush1.msra.mxu0 %v2822
        %3220 = vmatprep.subr.mxu0 0.0
        %3221 = vmatpush1.msra.mxu0 %v2823
        %3222 = vmatprep.subr.mxu0 0.0
        %3223 = vmatpush1.msra.mxu0 %v2824
        %3224 = vmatprep.subr.mxu0 0.0
        %3225 = vmatpush1.msra.mxu0 %v2825
        %3226 = vmatprep.subr.mxu0 0.0
        %3227 = vmatpush1.msra.mxu0 %v2826
        %3228 = vmatprep.subr.mxu0 0.0
        %3229 = vmatpush1.msra.mxu0 %v2827
        %3230 = vmatprep.subr.mxu0 0.0
        %3231 = vmatpush1.msra.mxu0 %v2828
        %3232 = vmatprep.subr.mxu0 0.0
        %3233 = vmatpush1.msra.mxu0 %v2829
        %3234 = vmatprep.subr.mxu0 0.0
        %3235 = vmatpush1.msra.mxu0 %v2830
        %3236 = vmatprep.subr.mxu0 0.0
        %3237 = vmatpush1.msra.mxu0 0.0
        %3238 = vmatprep.subr.mxu0 0.0
        %3239 = vmatpush1.msra.mxu0 0.0
        %3240 = vmatprep.subr.mxu0 0.0
        %3241 = vmatpush1.msra.mxu0 0.0
        %3242 = vmatprep.subr.mxu0 0.0
        %3243 = vmatpush1.msra.mxu0 0.0
        %3244 = vmatprep.subr.mxu0 0.0
        %3245 = vmatpush1.msra.mxu0 0.0
        %3246 = vmatprep.subr.mxu0 0.0
        %3247 = vmatpush1.msra.mxu0 0.0
        %3248 = vmatprep.subr.mxu0 0.0
        %3249 = vmatpush1.msra.mxu0 0.0
        %3250 = vmatprep.subr.mxu0 0.0
        %3251 = vmatpush1.msra.mxu0 0.0
        %3252 = vmatprep.subr.mxu0 0.0
        %3253 = vmatpush1.msra.mxu0 0.0
        %3254 = vmatprep.subr.mxu0 0.0
        %3255 = vmatpush1.msra.mxu0 0.0
        %3256 = vmatprep.subr.mxu0 0.0
        %3257 = vmatpush1.msra.mxu0 0.0
        %3258 = vmatprep.subr.mxu0 0.0
        %3259 = vmatpush1.msra.mxu0 0.0
        %3260 = vmatprep.subr.mxu0 0.0
        %3261 = vmatpush1.msra.mxu0 0.0
        %3262 = vmatprep.subr.mxu0 0.0
        %3263 = vmatpush1.msra.mxu0 0.0
        %3264 = vmatprep.mubr.f32.mxu0 %v3194
        %3265 = vmatmul.mubr.f32.gmra.mrb[0].mxu0 %v3191
        %v3266 = vpop.f32.mrb[0].mxu0
        %v3267 = vadd.f32 0.0, %v3266
        %v3268 = vpop.f32.mrb[0].mxu0
        %3269 = vmatprep.mubr.f32.mxu0 %v3196
        %3270 = vmatmul.mubr.f32.gmra.mrb[0].mxu0 %v3192
        %v3271 = vpop.f32.mrb[0].mxu0
        %v3272 = vadd.f32 0.0, %v3271
        %v3273 = vpop.f32.mrb[0].mxu0
        %3274 = vmatprep.mubr.f32.mxu0 %v3198
        %3275 = vmatmul.mubr.f32.gmra.mrb[0].mxu0 %v3193
        %v3276 = vpop.f32.mrb[0].mxu0
        %v3277 = vadd.f32 0.0, %v3276
        %v3278 = vpop.f32.mrb[0].mxu0
        %3279 = vdwg.mxu0
        %vm3284 = vcmask 1043456
        %v3285 = vrot.slane %v3047, 4
        %v3286 = vrot.slane %v3048, 4
        %v3287 = vsel %vm3284, %v3285, %v3286
        %v3288 = vrot.slane %v3049, 4
        %v3289 = vsel %vm3284, %v3286, %v3288
        %v3290 = vrot.slane %v3050, 4
        %v3291 = vsel %vm3284, %v3288, %v3290
        %vm3292 = vcmask 588800
        %v3293 = vsel %vm3292, %v3287, 0
        %v3295 = vsel %vm3292, %v3289, 0
        %v3297 = vsel %vm3292, %v3291, 0
        %3299 = vmatprep.subr.mxu0 0.0
        %3300 = vmatpush1.msra.mxu0 %v2804
        %3301 = vmatprep.subr.mxu0 0.0
        %3302 = vmatpush1.msra.mxu0 %v2805
        %3303 = vmatprep.subr.mxu0 0.0
        %3304 = vmatpush1.msra.mxu0 %v2806
        %3305 = vmatprep.subr.mxu0 0.0
        %3306 = vmatpush1.msra.mxu0 %v2807
        %3307 = vmatprep.subr.mxu0 0.0
        %3308 = vmatpush1.msra.mxu0 %v2808
        %3309 = vmatprep.subr.mxu0 0.0
        %3310 = vmatpush1.msra.mxu0 %v2809
        %3311 = vmatprep.subr.mxu0 0.0
        %3312 = vmatpush1.msra.mxu0 %v2810
        %3313 = vmatprep.subr.mxu0 0.0
        %3314 = vmatpush1.msra.mxu0 %v2811
        %3315 = vmatprep.subr.mxu0 0.0
        %3316 = vmatpush1.msra.mxu0 %v2812
        %3317 = vmatprep.subr.mxu0 0.0
        %3318 = vmatpush1.msra.mxu0 0.0
        %3319 = vmatprep.subr.mxu0 0.0
        %3320 = vmatpush1.msra.mxu0 0.0
        %3321 = vmatprep.subr.mxu0 0.0
        %3322 = vmatpush1.msra.mxu0 0.0
        %3323 = vmatprep.subr.mxu0 0.0
        %3324 = vmatpush1.msra.mxu0 0.0
        %3325 = vmatprep.subr.mxu0 0.0
        %3326 = vmatpush1.msra.mxu0 0.0
        %3327 = vmatprep.subr.mxu0 0.0
        %3328 = vmatpush1.msra.mxu0 0.0
        %3329 = vmatprep.subr.mxu0 0.0
        %3330 = vmatpush1.msra.mxu0 0.0
        %3331 = vmatprep.subr.mxu0 0.0
        %3332 = vmatpush1.msra.mxu0 0.0
        %3333 = vmatprep.subr.mxu0 0.0
        %3334 = vmatpush1.msra.mxu0 0.0
        %3335 = vmatprep.subr.mxu0 0.0
        %3336 = vmatpush1.msra.mxu0 0.0
        %3337 = vmatprep.subr.mxu0 0.0
        %3338 = vmatpush1.msra.mxu0 0.0
        %3339 = vmatprep.subr.mxu0 0.0
        %3340 = vmatpush1.msra.mxu0 0.0
        %3341 = vmatprep.subr.mxu0 0.0
        %3342 = vmatpush1.msra.mxu0 0.0
        %3343 = vmatprep.subr.mxu0 0.0
        %3344 = vmatpush1.msra.mxu0 0.0
        %3345 = vmatprep.subr.mxu0 0.0
        %3346 = vmatpush1.msra.mxu0 0.0
        %3347 = vmatprep.subr.mxu0 0.0
        %3348 = vmatpush1.msra.mxu0 0.0
        %3349 = vmatprep.subr.mxu0 0.0
        %3350 = vmatpush1.msra.mxu0 0.0
        %3351 = vmatprep.subr.mxu0 0.0
        %3352 = vmatpush1.msra.mxu0 0.0
        %3353 = vmatprep.subr.mxu0 0.0
        %3354 = vmatpush1.msra.mxu0 0.0
        %3355 = vmatprep.subr.mxu0 0.0
        %3356 = vmatpush1.msra.mxu0 0.0
        %3357 = vmatprep.subr.mxu0 0.0
        %3358 = vmatpush1.msra.mxu0 0.0
        %3359 = vmatprep.subr.mxu0 0.0
        %3360 = vmatpush1.msra.mxu0 0.0
        %3361 = vmatprep.subr.mxu0 0.0
        %3362 = vmatpush1.msra.mxu0 0.0
        %3363 = vmatprep.mubr.f32.mxu0 0.0
        %3364 = vmatmul.mubr.f32.gmra.mrb[0].mxu0 %v3293
        %v3365 = vpop.f32.mrb[0].mxu0
        %v3366 = vadd.f32 %v3267, %v3365
        %v3367 = vpop.f32.mrb[0].mxu0
        %3368 = vmatprep.mubr.f32.mxu0 0.0
        %3369 = vmatmul.mubr.f32.gmra.mrb[0].mxu0 %v3295
        %v3370 = vpop.f32.mrb[0].mxu0
        %v3371 = vadd.f32 %v3272, %v3370
        %v3372 = vpop.f32.mrb[0].mxu0
        %3373 = vmatprep.mubr.f32.mxu0 0.0
        %3374 = vmatmul.mubr.f32.gmra.mrb[0].mxu0 %v3297
        %v3375 = vpop.f32.mrb[0].mxu0
        %v3376 = vadd.f32 %v3277, %v3375
        %v3377 = vpop.f32.mrb[0].mxu0
        %3378 = vdwg.mxu0
        %v3380 = vlaneseq
        %v3381 = vshrl.u32 %v3380, 7
        %v3382 = vsub.s32 0, %v3381
        %v3383 = vrot.slane %v2831, %v3382
        %v3385 = vadd.f32 %v3366, %v3383
        %v3386 = vadd.f32 %v3371, %v3383
        %v3387 = vadd.f32 %v3376, %v3383
        %v3388 = vmax.f32 %v3385, 0.0
        %v3389 = vmax.f32 %v3386, 0.0
        %v3390 = vmax.f32 %v3387, 0.0
        %s3391 = scalar_lea.vmem [#allocation8], %s3051
        %3392 = vst.msk [vmem:[%s3391] sm:$0xff] %vm3011, %v3388
        %3393 = vst.msk [vmem:[%s3391 + $0x8] sm:$0xff] %vm3011, %v3389
        %vm3394 = vcmask 62464
        %3395 = vst.msk [vmem:[%s3391 + $0x10] sm:$0x3f] %vm3394, %v3390
      $region155: #{unet_model_forward.1} parent=107 // loop_footer
        %s2837 = sadd.s32 1, %s2833
      $region156: #{unet_model_forward.1} parent=107 // loop_footer_branch
        %2832 = sbr.rel target = $region152
      $region157: #{unet_model_forward.1} parent=107 // loop_exit
        _
      %v3396 = vld [vmem:[%s14] sm:$0xff]
      %v3397 = vld [vmem:[%s14 + $0x8] sm:$0xff]
      %v3398 = vld [vmem:[%s14 + $0x10] sm:$0xff]
      %v3399 = vld [vmem:[%s14 + $0x18] sm:$0xff]
      %v3400 = vld [vmem:[%s14 + $0x20] sm:$0xff]
      %v3401 = vld [vmem:[%s14 + $0x28] sm:$0xff]
      %v3402 = vld [vmem:[%s14 + $0x30] sm:$0xff]
      %v3403 = vld [vmem:[%s14 + $0x38] sm:$0xff]
      %v3404 = vld [vmem:[%s14 + $0x40] sm:$0xff]
      %v3405 = vld [vmem:[%s15] sm:$0x1]
      %v3406 = vld [vmem:[%s16] sm:$0xff]
      %v3407 = vld [vmem:[%s17] sm:$0x1]
      loop: start=0, step=1, limit=20
      $region158: #{unet_model_forward.1} parent=107 // loop_pre_header
        _
      $region159: #{unet_model_forward.1} parent=107 // loop_header
        %s3409 = sphi 0, %s3413
        %p3410 = scmp.ge.s32.totalorder %s3409, 20
      $region160: #{unet_model_forward.1} parent=107 // loop_header_branch
        %3412 = sbr.rel (%p3410) target = $region164
      $region161: #{unet_model_forward.1} parent=107 // loop_body
        %s3414 = smul.u32 %s3409, 24
        %s3415 = scalar_lea.vmem [#allocation8], %s3414
        %v3416 = vld [vmem:[%s3415] sm:$0xff]
        %v3417 = vld [vmem:[%s3415 + $0x8] sm:$0xff]
        %v3418 = vld [vmem:[%s3415 + $0x10] sm:$0x3f]
        %s3419 = sadd.s32 %s3409, 1
        %s3420 = smul.u32 %s3419, 24
        %s3421 = scalar_lea.vmem [#allocation8], %s3420
        %v3422 = vld [vmem:[%s3421] sm:$0xff]
        %v3423 = vld [vmem:[%s3421 + $0x8] sm:$0xff]
        %v3424 = vld [vmem:[%s3421 + $0x10] sm:$0x3f]
        %s3425 = sadd.s32 %s3409, 2
        %s3426 = smul.u32 %s3425, 24
        %s3427 = scalar_lea.vmem [#allocation8], %s3426
        %v3428 = vld [vmem:[%s3427] sm:$0xff]
        %v3429 = vld [vmem:[%s3427 + $0x8] sm:$0xff]
        %v3430 = vld [vmem:[%s3427 + $0x10] sm:$0x3f]
        %vm3434 = vcmask 1046528
        %v3435 = vrot.slane %v3416, 1
        %v3436 = vrot.slane %v3417, 1
        %v3437 = vsel %vm3434, %v3435, %v3436
        %v3438 = vrot.slane %v3418, 1
        %v3439 = vsel %vm3434, %v3436, %v3438
        %3440 = vrot.lane.b32.xlu0 %v3437, 8
        %v3441 = vpop.permute.xlu0 %3440
        %3442 = vrot.lane.b32.xlu0 %v3439, 8
        %v3443 = vpop.permute.xlu0 %3442
        %3444 = vrot.lane.b32.xlu0 %v3438, 8
        %v3445 = vpop.permute.xlu0 %3444
        %vm3449 = vcmask 1045504
        %v3450 = vrot.slane %v3416, 2
        %v3451 = vrot.slane %v3417, 2
        %v3452 = vsel %vm3449, %v3450, %v3451
        %v3453 = vrot.slane %v3418, 2
        %v3454 = vsel %vm3449, %v3451, %v3453
        %3455 = vrot.lane.b32.xlu0 %v3452, 16
        %v3456 = vpop.permute.xlu0 %3455
        %3457 = vrot.lane.b32.xlu0 %v3454, 16
        %v3458 = vpop.permute.xlu0 %3457
        %3459 = vrot.lane.b32.xlu0 %v3453, 16
        %v3460 = vpop.permute.xlu0 %3459
        %3467 = vrot.lane.b32.xlu0 %v3422, 24
        %v3468 = vpop.permute.xlu0 %3467
        %3469 = vrot.lane.b32.xlu0 %v3423, 24
        %v3470 = vpop.permute.xlu0 %3469
        %3471 = vrot.lane.b32.xlu0 %v3424, 24
        %v3472 = vpop.permute.xlu0 %3471
        %v3476 = vrot.slane %v3422, 1
        %v3477 = vrot.slane %v3423, 1
        %v3478 = vsel %vm3434, %v3476, %v3477
        %v3479 = vrot.slane %v3424, 1
        %v3480 = vsel %vm3434, %v3477, %v3479
        %3481 = vrot.lane.b32.xlu0 %v3478, 32
        %v3482 = vpop.permute.xlu0 %3481
        %3483 = vrot.lane.b32.xlu0 %v3480, 32
        %v3484 = vpop.permute.xlu0 %3483
        %3485 = vrot.lane.b32.xlu0 %v3479, 32
        %v3486 = vpop.permute.xlu0 %3485
        %v3490 = vrot.slane %v3422, 2
        %v3491 = vrot.slane %v3423, 2
        %v3492 = vsel %vm3449, %v3490, %v3491
        %v3493 = vrot.slane %v3424, 2
        %v3494 = vsel %vm3449, %v3491, %v3493
        %3495 = vrot.lane.b32.xlu0 %v3492, 40
        %v3496 = vpop.permute.xlu0 %3495
        %3497 = vrot.lane.b32.xlu0 %v3494, 40
        %v3498 = vpop.permute.xlu0 %3497
        %3499 = vrot.lane.b32.xlu0 %v3493, 40
        %v3500 = vpop.permute.xlu0 %3499
        %3507 = vrot.lane.b32.xlu0 %v3428, 48
        %v3508 = vpop.permute.xlu0 %3507
        %3509 = vrot.lane.b32.xlu0 %v3429, 48
        %v3510 = vpop.permute.xlu0 %3509
        %3511 = vrot.lane.b32.xlu0 %v3430, 48
        %v3512 = vpop.permute.xlu0 %3511
        %v3516 = vrot.slane %v3428, 1
        %v3517 = vrot.slane %v3429, 1
        %v3518 = vsel %vm3434, %v3516, %v3517
        %v3519 = vrot.slane %v3430, 1
        %v3520 = vsel %vm3434, %v3517, %v3519
        %3521 = vrot.lane.b32.xlu0 %v3518, 56
        %v3522 = vpop.permute.xlu0 %3521
        %3523 = vrot.lane.b32.xlu0 %v3520, 56
        %v3524 = vpop.permute.xlu0 %3523
        %3525 = vrot.lane.b32.xlu0 %v3519, 56
        %v3526 = vpop.permute.xlu0 %3525
        %v3530 = vrot.slane %v3428, 2
        %v3531 = vrot.slane %v3429, 2
        %v3532 = vsel %vm3449, %v3530, %v3531
        %v3533 = vrot.slane %v3430, 2
        %v3534 = vsel %vm3449, %v3531, %v3533
        %3535 = vrot.lane.b32.xlu0 %v3532, 64
        %v3536 = vpop.permute.xlu0 %3535
        %3537 = vrot.lane.b32.xlu0 %v3534, 64
        %v3538 = vpop.permute.xlu0 %3537
        %3539 = vrot.lane.b32.xlu0 %v3533, 64
        %v3540 = vpop.permute.xlu0 %3539
        %vm3544 = vcmask 64512
        %v3545 = vsel %vm3544, %v3416, %v3441
        %v3546 = vsel %vm3544, %v3417, %v3443
        %v3547 = vsel %vm3544, %v3418, %v3445
        %vm3548 = vcmask 130048
        %v3549 = vsel %vm3548, %v3545, %v3456
        %v3550 = vsel %vm3548, %v3546, %v3458
        %v3551 = vsel %vm3548, %v3547, %v3460
        %vm3552 = vcmask 195584
        %v3553 = vsel %vm3552, %v3549, %v3468
        %v3554 = vsel %vm3552, %v3550, %v3470
        %v3555 = vsel %vm3552, %v3551, %v3472
        %vm3556 = vcmask 261120
        %v3557 = vsel %vm3556, %v3553, %v3482
        %v3558 = vsel %vm3556, %v3554, %v3484
        %v3559 = vsel %vm3556, %v3555, %v3486
        %vm3560 = vcmask 326656
        %v3561 = vsel %vm3560, %v3557, %v3496
        %v3562 = vsel %vm3560, %v3558, %v3498
        %v3563 = vsel %vm3560, %v3559, %v3500
        %vm3564 = vcmask 392192
        %v3565 = vsel %vm3564, %v3561, %v3508
        %v3566 = vsel %vm3564, %v3562, %v3510
        %v3567 = vsel %vm3564, %v3563, %v3512
        %vm3568 = vcmask 457728
        %v3569 = vsel %vm3568, %v3565, %v3522
        %v3570 = vsel %vm3568, %v3566, %v3524
        %v3571 = vsel %vm3568, %v3567, %v3526
        %vm3572 = vcmask 523264
        %v3573 = vsel %vm3572, %v3569, %v3536
        %v3574 = vsel %vm3572, %v3570, %v3538
        %v3575 = vsel %vm3572, %v3571, %v3540
        %v3577 = vlaneseq
        %v3578 = vshrl.u32 %v3577, 7
        %v3579 = vsub.s32 0, %v3578
        %v3580 = vrot.slane %v3405, %v3579
        %vm3582 = vcmask 588800
        %v3584 = vsel %vm3582, %v3573, 0
        %v3587 = vsel %vm3582, %v3574, 0
        %v3590 = vsel %vm3582, %v3575, 0
        %3592 = vmatprep.subr.mxu0 0.0
        %3593 = vmatpush1.msra.mxu0 %v3396
        %3594 = vmatprep.subr.mxu0 0.0
        %3595 = vmatpush1.msra.mxu0 %v3397
        %3596 = vmatprep.subr.mxu0 0.0
        %3597 = vmatpush1.msra.mxu0 %v3398
        %3598 = vmatprep.subr.mxu0 0.0
        %3599 = vmatpush1.msra.mxu0 %v3399
        %3600 = vmatprep.subr.mxu0 0.0
        %3601 = vmatpush1.msra.mxu0 %v3400
        %3602 = vmatprep.subr.mxu0 0.0
        %3603 = vmatpush1.msra.mxu0 %v3401
        %3604 = vmatprep.subr.mxu0 0.0
        %3605 = vmatpush1.msra.mxu0 %v3402
        %3606 = vmatprep.subr.mxu0 0.0
        %3607 = vmatpush1.msra.mxu0 %v3403
        %3608 = vmatprep.subr.mxu0 0.0
        %3609 = vmatpush1.msra.mxu0 %v3404
        %3610 = vmatprep.subr.mxu0 0.0
        %3611 = vmatpush1.msra.mxu0 0.0
        %3612 = vmatprep.subr.mxu0 0.0
        %3613 = vmatpush1.msra.mxu0 0.0
        %3614 = vmatprep.subr.mxu0 0.0
        %3615 = vmatpush1.msra.mxu0 0.0
        %3616 = vmatprep.subr.mxu0 0.0
        %3617 = vmatpush1.msra.mxu0 0.0
        %3618 = vmatprep.subr.mxu0 0.0
        %3619 = vmatpush1.msra.mxu0 0.0
        %3620 = vmatprep.subr.mxu0 0.0
        %3621 = vmatpush1.msra.mxu0 0.0
        %3622 = vmatprep.subr.mxu0 0.0
        %3623 = vmatpush1.msra.mxu0 0.0
        %3624 = vmatprep.subr.mxu0 0.0
        %3625 = vmatpush1.msra.mxu0 0.0
        %3626 = vmatprep.subr.mxu0 0.0
        %3627 = vmatpush1.msra.mxu0 0.0
        %3628 = vmatprep.subr.mxu0 0.0
        %3629 = vmatpush1.msra.mxu0 0.0
        %3630 = vmatprep.subr.mxu0 0.0
        %3631 = vmatpush1.msra.mxu0 0.0
        %3632 = vmatprep.subr.mxu0 0.0
        %3633 = vmatpush1.msra.mxu0 0.0
        %3634 = vmatprep.subr.mxu0 0.0
        %3635 = vmatpush1.msra.mxu0 0.0
        %3636 = vmatprep.subr.mxu0 0.0
        %3637 = vmatpush1.msra.mxu0 0.0
        %3638 = vmatprep.subr.mxu0 0.0
        %3639 = vmatpush1.msra.mxu0 0.0
        %3640 = vmatprep.subr.mxu0 0.0
        %3641 = vmatpush1.msra.mxu0 0.0
        %3642 = vmatprep.subr.mxu0 0.0
        %3643 = vmatpush1.msra.mxu0 0.0
        %3644 = vmatprep.subr.mxu0 0.0
        %3645 = vmatpush1.msra.mxu0 0.0
        %3646 = vmatprep.subr.mxu0 0.0
        %3647 = vmatpush1.msra.mxu0 0.0
        %3648 = vmatprep.subr.mxu0 0.0
        %3649 = vmatpush1.msra.mxu0 0.0
        %3650 = vmatprep.subr.mxu0 0.0
        %3651 = vmatpush1.msra.mxu0 0.0
        %3652 = vmatprep.subr.mxu0 0.0
        %3653 = vmatpush1.msra.mxu0 0.0
        %3654 = vmatprep.subr.mxu0 0.0
        %3655 = vmatpush1.msra.mxu0 0.0
        %3656 = vmatprep.mubr.f32.mxu0 0.0
        %3657 = vmatmul.mubr.f32.gmra.mrb[0].mxu0 %v3584
        %v3658 = vpop.f32.mrb[0].mxu0
        %v3659 = vadd.f32 %v3580, %v3658
        %v3660 = vpop.f32.mrb[0].mxu0
        %3661 = vmatprep.mubr.f32.mxu0 0.0
        %3662 = vmatmul.mubr.f32.gmra.mrb[0].mxu0 %v3587
        %v3663 = vpop.f32.mrb[0].mxu0
        %v3664 = vadd.f32 %v3580, %v3663
        %v3665 = vpop.f32.mrb[0].mxu0
        %3666 = vmatprep.mubr.f32.mxu0 0.0
        %3667 = vmatmul.mubr.f32.gmra.mrb[0].mxu0 %v3590
        %v3668 = vpop.f32.mrb[0].mxu0
        %v3669 = vadd.f32 %v3580, %v3668
        %v3670 = vpop.f32.mrb[0].mxu0
        %3671 = vdwg.mxu0
        %v3672 = vmax.f32 %v3659, 0.0
        %v3673 = vmax.f32 %v3664, 0.0
        %v3674 = vmax.f32 %v3669, 0.0
        %v3676 = vlaneseq
        %v3677 = vshrl.u32 %v3676, 7
        %v3678 = vsub.s32 0, %v3677
        %v3679 = vrot.slane %v3407, %v3678
        %v3682 = vsel %vm3544, %v3672, 0
        %v3685 = vsel %vm3544, %v3673, 0
        %v3688 = vsel %vm3544, %v3674, 0
        %3690 = vmatprep.subr.mxu0 0.0
        %3691 = vmatpush1.msra.mxu0 %v3406
        %3692 = vmatprep.subr.mxu0 0.0
        %3693 = vmatpush1.msra.mxu0 0.0
        %3694 = vmatprep.subr.mxu0 0.0
        %3695 = vmatpush1.msra.mxu0 0.0
        %3696 = vmatprep.subr.mxu0 0.0
        %3697 = vmatpush1.msra.mxu0 0.0
        %3698 = vmatprep.subr.mxu0 0.0
        %3699 = vmatpush1.msra.mxu0 0.0
        %3700 = vmatprep.subr.mxu0 0.0
        %3701 = vmatpush1.msra.mxu0 0.0
        %3702 = vmatprep.subr.mxu0 0.0
        %3703 = vmatpush1.msra.mxu0 0.0
        %3704 = vmatprep.subr.mxu0 0.0
        %3705 = vmatpush1.msra.mxu0 0.0
        %3706 = vmatprep.subr.mxu0 0.0
        %3707 = vmatpush1.msra.mxu0 0.0
        %3708 = vmatprep.subr.mxu0 0.0
        %3709 = vmatpush1.msra.mxu0 0.0
        %3710 = vmatprep.subr.mxu0 0.0
        %3711 = vmatpush1.msra.mxu0 0.0
        %3712 = vmatprep.subr.mxu0 0.0
        %3713 = vmatpush1.msra.mxu0 0.0
        %3714 = vmatprep.subr.mxu0 0.0
        %3715 = vmatpush1.msra.mxu0 0.0
        %3716 = vmatprep.subr.mxu0 0.0
        %3717 = vmatpush1.msra.mxu0 0.0
        %3718 = vmatprep.subr.mxu0 0.0
        %3719 = vmatpush1.msra.mxu0 0.0
        %3720 = vmatprep.subr.mxu0 0.0
        %3721 = vmatpush1.msra.mxu0 0.0
        %3722 = vmatprep.subr.mxu0 0.0
        %3723 = vmatpush1.msra.mxu0 0.0
        %3724 = vmatprep.subr.mxu0 0.0
        %3725 = vmatpush1.msra.mxu0 0.0
        %3726 = vmatprep.subr.mxu0 0.0
        %3727 = vmatpush1.msra.mxu0 0.0
        %3728 = vmatprep.subr.mxu0 0.0
        %3729 = vmatpush1.msra.mxu0 0.0
        %3730 = vmatprep.subr.mxu0 0.0
        %3731 = vmatpush1.msra.mxu0 0.0
        %3732 = vmatprep.subr.mxu0 0.0
        %3733 = vmatpush1.msra.mxu0 0.0
        %3734 = vmatprep.subr.mxu0 0.0
        %3735 = vmatpush1.msra.mxu0 0.0
        %3736 = vmatprep.subr.mxu0 0.0
        %3737 = vmatpush1.msra.mxu0 0.0
        %3738 = vmatprep.subr.mxu0 0.0
        %3739 = vmatpush1.msra.mxu0 0.0
        %3740 = vmatprep.subr.mxu0 0.0
        %3741 = vmatpush1.msra.mxu0 0.0
        %3742 = vmatprep.subr.mxu0 0.0
        %3743 = vmatpush1.msra.mxu0 0.0
        %3744 = vmatprep.subr.mxu0 0.0
        %3745 = vmatpush1.msra.mxu0 0.0
        %3746 = vmatprep.subr.mxu0 0.0
        %3747 = vmatpush1.msra.mxu0 0.0
        %3748 = vmatprep.subr.mxu0 0.0
        %3749 = vmatpush1.msra.mxu0 0.0
        %3750 = vmatprep.subr.mxu0 0.0
        %3751 = vmatpush1.msra.mxu0 0.0
        %3752 = vmatprep.subr.mxu0 0.0
        %3753 = vmatpush1.msra.mxu0 0.0
        %3754 = vmatprep.mubr.f32.mxu0 0.0
        %3755 = vmatmul.mubr.f32.gmra.mrb[0].mxu0 %v3682
        %v3756 = vpop.f32.mrb[0].mxu0
        %v3757 = vadd.f32 %v3679, %v3756
        %v3758 = vpop.f32.mrb[0].mxu0
        %3759 = vmatprep.mubr.f32.mxu0 0.0
        %3760 = vmatmul.mubr.f32.gmra.mrb[0].mxu0 %v3685
        %v3761 = vpop.f32.mrb[0].mxu0
        %v3762 = vadd.f32 %v3679, %v3761
        %v3763 = vpop.f32.mrb[0].mxu0
        %3764 = vmatprep.mubr.f32.mxu0 0.0
        %3765 = vmatmul.mubr.f32.gmra.mrb[0].mxu0 %v3688
        %v3766 = vpop.f32.mrb[0].mxu0
        %v3767 = vadd.f32 %v3679, %v3766
        %v3768 = vpop.f32.mrb[0].mxu0
        %3769 = vdwg.mxu0
        %v3770 = vxor.u32 %v3757, 2147483648
        %v3771 = vxor.u32 %v3762, 2147483648
        %v3772 = vxor.u32 %v3767, 2147483648
        %v3773 = vmul.f32 %v3770, 1.442695
        %v3774 = vpow.pop %v3773
        %v3775 = vmul.f32 %v3771, 1.442695
        %v3776 = vpow.pop %v3775
        %v3777 = vmul.f32 %v3772, 1.442695
        %v3778 = vpow.pop %v3777
        %v3779 = vadd.f32 %v3774, 1.0
        %v3780 = vadd.f32 %v3776, 1.0
        %v3781 = vadd.f32 %v3778, 1.0
        %v3782 = vrcp.pop %v3779
        %v3783 = vmul.f32 1.0, %v3782
        %v3784 = vrcp.pop %v3780
        %v3785 = vmul.f32 1.0, %v3784
        %v3786 = vrcp.pop %v3781
        %v3787 = vmul.f32 1.0, %v3786
        %s3788 = scalar_lea.vmem %s718, %s3414
        %vm3789 = vcmask 48128
        %3790 = vst.msk [vmem:[%s3788] sm:$0xff] %vm3789, %v3783
        %3791 = vst.msk [vmem:[%s3788 + $0x8] sm:$0xff] %vm3789, %v3785
        %vm3792 = vcmask 44032
        %3793 = vst.msk [vmem:[%s3788 + $0x10] sm:$0xf] %vm3792, %v3787
        %3797 = vrot.lane.b32.xlu0 %v3783, 122
        %v3798 = vpop.permute.xlu0 %3797
        %3799 = vrot.lane.b32.xlu0 %v3785, 122
        %v3800 = vpop.permute.xlu0 %3799
        %3801 = vrot.lane.b32.xlu0 %v3787, 122
        %v3802 = vpop.permute.xlu0 %3801
        %s3806 = scalar_lea.vmem %s723, %s3414
        %vm3807 = vcmask 7168
        %3808 = vst.msk [vmem:[%s3806] sm:$0xff] %vm3807, %v3798
        %3809 = vst.msk [vmem:[%s3806 + $0x8] sm:$0xff] %vm3807, %v3800
        %vm3810 = vcmask 3072
        %3811 = vst.msk [vmem:[%s3806 + $0x10] sm:$0xf] %vm3810, %v3802
      $region162: #{unet_model_forward.1} parent=107 // loop_footer
        %s3413 = sadd.s32 1, %s3409
      $region163: #{unet_model_forward.1} parent=107 // loop_footer_branch
        %3408 = sbr.rel target = $region159
      $region164: #{unet_model_forward.1} parent=107 // loop_exit
        _
      %p3812 = scmp.lt.s32.totalorder %s35, 1
      %s3813 = scalar_select %p3812, %s35, 1
      %s3814 = smul.addr %s3813, 60
      %s3815 = smul.addr %s3814, 8
      %s3816 = scalar_lea.vmem %s22, %s3815
      %p3817 = scmp.lt.s32.totalorder %s35, 1
      %s3818 = scalar_select %p3817, %s35, 1
      %s3819 = smul.addr %s3818, 60
      %s3820 = smul.addr %s3819, 8
      %s3821 = scalar_lea.vmem %s23, %s3820
      // Predicated region
      $region165: #{unet_model_forward.1} parent=107 // pred_check
        %p3822 = pneg %p520
      $region166: #{unet_model_forward.1} parent=107 // pred_check_branch
        %3824 = sbr.rel (%p3822) target = $region168
      $region167: #{unet_model_forward.1} parent=107 // pred_region
        _
      $region168: #{unet_model_forward.1} parent=107 // pred_fallthru
        _
      // Predicated region
      $region169: #{unet_model_forward.1} parent=107 // pred_check
        %p3825 = pneg %p546
      $region170: #{unet_model_forward.1} parent=107 // pred_check_branch
        %3827 = sbr.rel (%p3825) target = $region172
      $region171: #{unet_model_forward.1} parent=107 // pred_region
        _
      $region172: #{unet_model_forward.1} parent=107 // pred_fallthru
        _
    $region108: #{unet_model_forward.1} parent=5 // pred_fallthru
      _
    %p3828 = scmp.le.s32.totalorder 2, %s30
    // Predicated region
    $region173: #{unet_model_forward.1} parent=5 // pred_check
      %p3829 = pneg %p3828
    $region174: #{unet_model_forward.1} parent=5 // pred_check_branch
      %3831 = sbr.rel (%p3829) target = $region176
    $region175: #{unet_model_forward.1} parent=5 // pred_region
      %s3832 = ssub.s32 %s30, 2
      // Predicated region
      $region177: #{unet_model_forward.1} parent=175 // pred_check
        %p3833 = pneg %p526
      $region178: #{unet_model_forward.1} parent=175 // pred_check_branch
        %3835 = sbr.rel (%p3833) target = $region180
      $region179: #{unet_model_forward.1} parent=175 // pred_region
        %p3836 = scmp.lt.s32.totalorder %s36, 1
        %s3837 = scalar_select %p3836, %s36, 1
        %s3838 = smul.addr %s3837, 60
        %s3839 = smul.addr %s3838, 8
        %s3840 = scalar_lea.vmem %s22, %s3839
      $region180: #{unet_model_forward.1} parent=175 // pred_fallthru
        _
      // Predicated region
      $region181: #{unet_model_forward.1} parent=175 // pred_check
        %p3841 = pneg %p552
      $region182: #{unet_model_forward.1} parent=175 // pred_check_branch
        %3843 = sbr.rel (%p3841) target = $region184
      $region183: #{unet_model_forward.1} parent=175 // pred_region
        %p3844 = scmp.lt.s32.totalorder %s36, 1
        %s3845 = scalar_select %p3844, %s36, 1
        %s3846 = smul.addr %s3845, 60
        %s3847 = smul.addr %s3846, 8
        %s3848 = scalar_lea.vmem %s23, %s3847
      $region184: #{unet_model_forward.1} parent=175 // pred_fallthru
        _
    $region176: #{unet_model_forward.1} parent=5 // pred_fallthru
      _
  $region6: #{unet_model_forward.1} parent=0 // loop_footer
    %s34 = sadd.s32 1, %s30
  $region7: #{unet_model_forward.1} parent=0 // loop_footer_branch
    %29 = sbr.rel target = $region3
  $region8: #{unet_model_forward.1} parent=0 // loop_exit
    _

</llo_original>
